<compile_context>
chip_gen: v7x
topology: tpu7x:2x2x1
jax: 0.10.0
libtpu: 0.0.40
codegen_flags: <defaults>
</compile_context>

<pallas_src>
import functools
import math

import jax
import jax.numpy as jnp
from jax import lax
from jax.experimental import pallas as pl
from jax.experimental.pallas import tpu as pltpu


# ----------------------------------------------------------------------------- kernel
def _gate_kernel(xp_ref, w1_ref, b1_ref, w2_ref, b2_ref, o_ref, *, H, W):
    """Fused conv3x3(pad=1) + LeakyReLU(0.2) + conv1x1 for one NHWC image.

    xp_ref : (H+2, W+2, Cin)  bf16   zero-padded input image (VMEM tile)
    w1_ref : (9, Cin, C1)     bf16   conv1 weights, tap-major (t = 3*dh + dw)
    b1_ref : (1, C1)          f32
    w2_ref : (C1, C2)         bf16   conv2 (1x1) weights
    b2_ref : (1, C2)          f32
    o_ref  : (H*W, C2)        f32    flattened output tile
    """
    cin = xp_ref.shape[-1]
    c1 = w1_ref.shape[-1]

    # conv1 via in-VMEM im2col: nine shifted taps of the single padded tile,
    # each a (H*W, Cin) x (Cin, C1) MXU matmul accumulated in fp32.
    acc = jnp.zeros((H * W, c1), jnp.float32)
    for t in range(9):                                   # statically unrolled
        dh, dw = divmod(t, 3)
        tap = xp_ref[dh:dh + H, dw:dw + W, :].reshape(H * W, cin)
        acc = acc + jnp.dot(tap, w1_ref[t], preferred_element_type=jnp.float32)

    # bias + LeakyReLU(0.2), kept in fp32.
    y1 = acc + b1_ref[...]
    y1 = jnp.where(y1 >= 0.0, y1, 0.2 * y1)

    # conv2 (1x1) == channel matmul, fused in the same kernel (no HBM trip).
    y2 = jnp.dot(y1.astype(jnp.bfloat16), w2_ref[...],
                 preferred_element_type=jnp.float32)
    o_ref[...] = (y2 + b2_ref[...]).astype(o_ref.dtype)


# ----------------------------------------------------------------------------- wrapper
def gate_forward(params, x):
    """x: (N, H, W, 131) NHWC -> scoremap (N, H, W, 64)."""
    n, h, w, cin = x.shape
    w1 = params["w1"]                                    # (9, Cin, 64) bf16
    w2 = params["w2"]                                    # (64, 64)     bf16
    b1 = params["b1"].reshape(1, -1).astype(jnp.float32)
    b2 = params["b2"].reshape(1, -1).astype(jnp.float32)
    c1 = w1.shape[-1]
    c2 = w2.shape[-1]

    # Spatial zero-pad (pad=1) once in HBM; the kernel does the 9-tap im2col
    # from this single tile in VMEM.
    xp = jnp.pad(x.astype(jnp.bfloat16), ((0, 0), (1, 1), (1, 1), (0, 0)))
    hp, wp = h + 2, w + 2

    out = pl.pallas_call(
        functools.partial(_gate_kernel, H=h, W=w),
        out_shape=jax.ShapeDtypeStruct((n, h * w, c2), jnp.float32),
        grid=(n,),
        in_specs=[
            pl.BlockSpec((None, hp, wp, cin), lambda i: (i, 0, 0, 0)),  # image
            pl.BlockSpec((9, cin, c1), lambda i: (0, 0, 0)),            # conv1 w
            pl.BlockSpec((1, c1), lambda i: (0, 0)),                    # conv1 b
            pl.BlockSpec((c1, c2), lambda i: (0, 0)),                   # conv2 w
            pl.BlockSpec((1, c2), lambda i: (0, 0)),                    # conv2 b
        ],
        out_specs=pl.BlockSpec((None, h * w, c2), lambda i: (i, 0, 0)),
        compiler_params=pltpu.CompilerParams(
            dimension_semantics=("parallel",)),
    )(xp, w1, b1, w2, b2)
    return out.reshape(n, h, w, c2)                      # free contiguous reshape


# ----------------------------------------------------------------------------- params
def init_params(key):
    """Replicates the PyTorch init: weight ~ N(0, sqrt(2/(k*k*out_ch))), bias = 0."""
    cin, c1, c2 = 131, 64, 64
    k1, k2 = jax.random.split(key)
    std1 = math.sqrt(2.0 / (3 * 3 * c1))
    std2 = math.sqrt(2.0 / (1 * 1 * c2))
    w1 = std1 * jax.random.normal(k1, (3, 3, cin, c1), jnp.float32)   # HWIO
    w2 = std2 * jax.random.normal(k2, (c1, c2), jnp.float32)
    return {
        # weights cast to bf16 once here (not per call); biases kept fp32.
        "w1": w1.reshape(9, cin, c1).astype(jnp.bfloat16),
        "b1": jnp.zeros((c1,), jnp.float32),
        "w2": w2.astype(jnp.bfloat16),
        "b2": jnp.zeros((c2,), jnp.float32),
    }


# ----------------------------------------------------------------------------- reference
def gate_reference(params, x):
    """Pure-XLA reference mirroring the kernel's bf16-in / fp32-accumulate math."""
    cin = params["w1"].shape[1]
    c1 = params["w1"].shape[2]
    w1 = params["w1"].astype(jnp.float32).reshape(3, 3, cin, c1)
    w2 = params["w2"].astype(jnp.float32)
    b1, b2 = params["b1"], params["b2"]

    xb = x.astype(jnp.bfloat16).astype(jnp.float32)
    y1 = lax.conv_general_dilated(
        xb, w1, window_strides=(1, 1), padding="SAME",
        dimension_numbers=("NHWC", "HWIO", "NHWC"),
        precision=lax.Precision.HIGHEST) + b1
    y1 = jnp.where(y1 >= 0.0, y1, 0.2 * y1)
    y1 = y1.astype(jnp.bfloat16).astype(jnp.float32)
    y2 = jnp.einsum("nhwc,cd->nhwd", y1, w2,
                    precision=lax.Precision.HIGHEST) + b2
    return y2


# ----------------------------------------------------------------------------- main
if __name__ == "__main__":
    key = jax.random.PRNGKey(0)
    pkey, xkey = jax.random.split(key)
    params = init_params(pkey)

    # _GateMoudle's input has 131 channels (fixed by conv1); small spatial test.
    # NHWC here corresponds to the PyTorch NCHW input (2, 131, 16, 16).
    x = jax.random.normal(xkey, (2, 16, 16, 131), jnp.float32)

    fwd = jax.jit(gate_forward)
    scoremap = fwd(params, x)
    jax.block_until_ready(scoremap)

    assert scoremap.shape == (2, 16, 16, 64), scoremap.shape
    assert bool(jnp.all(jnp.isfinite(scoremap)))

    ref = gate_reference(params, x)
    max_err = float(jnp.max(jnp.abs(scoremap - ref)))
    assert max_err < 1e-2, f"max abs err {max_err}"

    print("KERNEL_OK")
</pallas_src>

<mosaic_0001>
module attributes {stable_mosaic.version = 11 : i64} {
  func.func @_gate_kernel(%arg0: i32, %arg1: memref<1x18x18x131xbf16, #tpu.memory_space<vmem>>, %arg2: memref<9x131x64xbf16, #tpu.memory_space<vmem>>, %arg3: memref<1x64xf32, #tpu.memory_space<vmem>>, %arg4: memref<64x64xbf16, #tpu.memory_space<vmem>>, %arg5: memref<1x64xf32, #tpu.memory_space<vmem>>, %arg6: memref<1x256x64xf32, #tpu.memory_space<vmem>>) attributes {dimension_semantics = [#tpu.dimension_semantics<parallel>], iteration_bounds = array<i64: 2>, scalar_prefetch = 0 : i64, scratch_operands = 0 : i64, tpu.core_type = #tpu.core_type<tc>, window_params = [{transform_indices = @transform_0, window_bounds = array<i64: 1, 18, 18, 131>}, {pipeline_mode = #tpu.pipeline_mode<synchronous>, transform_indices = @transform_1, window_bounds = array<i64: 9, 131, 64>}, {pipeline_mode = #tpu.pipeline_mode<synchronous>, transform_indices = @transform_2, window_bounds = array<i64: 1, 64>}, {pipeline_mode = #tpu.pipeline_mode<synchronous>, transform_indices = @transform_3, window_bounds = array<i64: 64, 64>}, {pipeline_mode = #tpu.pipeline_mode<synchronous>, transform_indices = @transform_4, window_bounds = array<i64: 1, 64>}, {transform_indices = @transform_5, window_bounds = array<i64: 1, 256, 64>}]} {
    %cst = arith.constant 0.000000e+00 : f32
    %0 = vector.broadcast %cst : f32 to vector<256x64xf32>
    %c0 = arith.constant 0 : index
    %c0_0 = arith.constant 0 : index
    %c0_1 = arith.constant 0 : index
    %c0_2 = arith.constant 0 : index
    %1 = vector.load %arg1[%c0, %c0_0, %c0_1, %c0_2] : memref<1x18x18x131xbf16, #tpu.memory_space<vmem>>, vector<1x16x16x131xbf16>
    %2 = vector.shape_cast %1 : vector<1x16x16x131xbf16> to vector<16x16x131xbf16>
    %3 = vector.shape_cast %2 : vector<16x16x131xbf16> to vector<256x131xbf16>
    %c0_3 = arith.constant 0 : index
    %c0_4 = arith.constant 0 : index
    %c0_5 = arith.constant 0 : index
    %4 = vector.load %arg2[%c0_3, %c0_4, %c0_5] : memref<9x131x64xbf16, #tpu.memory_space<vmem>>, vector<1x131x64xbf16>
    %5 = vector.shape_cast %4 : vector<1x131x64xbf16> to vector<131x64xbf16>
    %cst_6 = arith.constant dense<0.000000e+00> : vector<256x64xf32>
    %6 = tpu.matmul %3, %5, %cst_6 {dimension_numbers = #tpu.dot_dimension_numbers<[1], [0], [0], [1], [0, 0, 1, 1], [], []>} : vector<256x131xbf16>, vector<131x64xbf16>, vector<256x64xf32> -> vector<256x64xf32>
    %7 = arith.addf %0, %6 : vector<256x64xf32>
    %c0_7 = arith.constant 0 : index
    %c0_8 = arith.constant 0 : index
    %c1 = arith.constant 1 : index
    %c0_9 = arith.constant 0 : index
    %8 = vector.load %arg1[%c0_7, %c0_8, %c1, %c0_9] : memref<1x18x18x131xbf16, #tpu.memory_space<vmem>>, vector<1x16x16x131xbf16>
    %9 = vector.shape_cast %8 : vector<1x16x16x131xbf16> to vector<16x16x131xbf16>
    %10 = vector.shape_cast %9 : vector<16x16x131xbf16> to vector<256x131xbf16>
    %c1_10 = arith.constant 1 : index
    %c0_11 = arith.constant 0 : index
    %c0_12 = arith.constant 0 : index
    %11 = vector.load %arg2[%c1_10, %c0_11, %c0_12] : memref<9x131x64xbf16, #tpu.memory_space<vmem>>, vector<1x131x64xbf16>
    %12 = vector.shape_cast %11 : vector<1x131x64xbf16> to vector<131x64xbf16>
    %cst_13 = arith.constant dense<0.000000e+00> : vector<256x64xf32>
    %13 = tpu.matmul %10, %12, %cst_13 {dimension_numbers = #tpu.dot_dimension_numbers<[1], [0], [0], [1], [0, 0, 1, 1], [], []>} : vector<256x131xbf16>, vector<131x64xbf16>, vector<256x64xf32> -> vector<256x64xf32>
    %14 = arith.addf %7, %13 : vector<256x64xf32>
    %c0_14 = arith.constant 0 : index
    %c0_15 = arith.constant 0 : index
    %c2 = arith.constant 2 : index
    %c0_16 = arith.constant 0 : index
    %15 = vector.load %arg1[%c0_14, %c0_15, %c2, %c0_16] : memref<1x18x18x131xbf16, #tpu.memory_space<vmem>>, vector<1x16x16x131xbf16>
    %16 = vector.shape_cast %15 : vector<1x16x16x131xbf16> to vector<16x16x131xbf16>
    %17 = vector.shape_cast %16 : vector<16x16x131xbf16> to vector<256x131xbf16>
    %c2_17 = arith.constant 2 : index
    %c0_18 = arith.constant 0 : index
    %c0_19 = arith.constant 0 : index
    %18 = vector.load %arg2[%c2_17, %c0_18, %c0_19] : memref<9x131x64xbf16, #tpu.memory_space<vmem>>, vector<1x131x64xbf16>
    %19 = vector.shape_cast %18 : vector<1x131x64xbf16> to vector<131x64xbf16>
    %cst_20 = arith.constant dense<0.000000e+00> : vector<256x64xf32>
    %20 = tpu.matmul %17, %19, %cst_20 {dimension_numbers = #tpu.dot_dimension_numbers<[1], [0], [0], [1], [0, 0, 1, 1], [], []>} : vector<256x131xbf16>, vector<131x64xbf16>, vector<256x64xf32> -> vector<256x64xf32>
    %21 = arith.addf %14, %20 : vector<256x64xf32>
    %c0_21 = arith.constant 0 : index
    %c1_22 = arith.constant 1 : index
    %c0_23 = arith.constant 0 : index
    %c0_24 = arith.constant 0 : index
    %22 = vector.load %arg1[%c0_21, %c1_22, %c0_23, %c0_24] : memref<1x18x18x131xbf16, #tpu.memory_space<vmem>>, vector<1x16x16x131xbf16>
    %23 = vector.shape_cast %22 : vector<1x16x16x131xbf16> to vector<16x16x131xbf16>
    %24 = vector.shape_cast %23 : vector<16x16x131xbf16> to vector<256x131xbf16>
    %c3 = arith.constant 3 : index
    %c0_25 = arith.constant 0 : index
    %c0_26 = arith.constant 0 : index
    %25 = vector.load %arg2[%c3, %c0_25, %c0_26] : memref<9x131x64xbf16, #tpu.memory_space<vmem>>, vector<1x131x64xbf16>
    %26 = vector.shape_cast %25 : vector<1x131x64xbf16> to vector<131x64xbf16>
    %cst_27 = arith.constant dense<0.000000e+00> : vector<256x64xf32>
    %27 = tpu.matmul %24, %26, %cst_27 {dimension_numbers = #tpu.dot_dimension_numbers<[1], [0], [0], [1], [0, 0, 1, 1], [], []>} : vector<256x131xbf16>, vector<131x64xbf16>, vector<256x64xf32> -> vector<256x64xf32>
    %28 = arith.addf %21, %27 : vector<256x64xf32>
    %c0_28 = arith.constant 0 : index
    %c1_29 = arith.constant 1 : index
    %c1_30 = arith.constant 1 : index
    %c0_31 = arith.constant 0 : index
    %29 = vector.load %arg1[%c0_28, %c1_29, %c1_30, %c0_31] : memref<1x18x18x131xbf16, #tpu.memory_space<vmem>>, vector<1x16x16x131xbf16>
    %30 = vector.shape_cast %29 : vector<1x16x16x131xbf16> to vector<16x16x131xbf16>
    %31 = vector.shape_cast %30 : vector<16x16x131xbf16> to vector<256x131xbf16>
    %c4 = arith.constant 4 : index
    %c0_32 = arith.constant 0 : index
    %c0_33 = arith.constant 0 : index
    %32 = vector.load %arg2[%c4, %c0_32, %c0_33] : memref<9x131x64xbf16, #tpu.memory_space<vmem>>, vector<1x131x64xbf16>
    %33 = vector.shape_cast %32 : vector<1x131x64xbf16> to vector<131x64xbf16>
    %cst_34 = arith.constant dense<0.000000e+00> : vector<256x64xf32>
    %34 = tpu.matmul %31, %33, %cst_34 {dimension_numbers = #tpu.dot_dimension_numbers<[1], [0], [0], [1], [0, 0, 1, 1], [], []>} : vector<256x131xbf16>, vector<131x64xbf16>, vector<256x64xf32> -> vector<256x64xf32>
    %35 = arith.addf %28, %34 : vector<256x64xf32>
    %c0_35 = arith.constant 0 : index
    %c1_36 = arith.constant 1 : index
    %c2_37 = arith.constant 2 : index
    %c0_38 = arith.constant 0 : index
    %36 = vector.load %arg1[%c0_35, %c1_36, %c2_37, %c0_38] : memref<1x18x18x131xbf16, #tpu.memory_space<vmem>>, vector<1x16x16x131xbf16>
    %37 = vector.shape_cast %36 : vector<1x16x16x131xbf16> to vector<16x16x131xbf16>
    %38 = vector.shape_cast %37 : vector<16x16x131xbf16> to vector<256x131xbf16>
    %c5 = arith.constant 5 : index
    %c0_39 = arith.constant 0 : index
    %c0_40 = arith.constant 0 : index
    %39 = vector.load %arg2[%c5, %c0_39, %c0_40] : memref<9x131x64xbf16, #tpu.memory_space<vmem>>, vector<1x131x64xbf16>
    %40 = vector.shape_cast %39 : vector<1x131x64xbf16> to vector<131x64xbf16>
    %cst_41 = arith.constant dense<0.000000e+00> : vector<256x64xf32>
    %41 = tpu.matmul %38, %40, %cst_41 {dimension_numbers = #tpu.dot_dimension_numbers<[1], [0], [0], [1], [0, 0, 1, 1], [], []>} : vector<256x131xbf16>, vector<131x64xbf16>, vector<256x64xf32> -> vector<256x64xf32>
    %42 = arith.addf %35, %41 : vector<256x64xf32>
    %c0_42 = arith.constant 0 : index
    %c2_43 = arith.constant 2 : index
    %c0_44 = arith.constant 0 : index
    %c0_45 = arith.constant 0 : index
    %43 = vector.load %arg1[%c0_42, %c2_43, %c0_44, %c0_45] : memref<1x18x18x131xbf16, #tpu.memory_space<vmem>>, vector<1x16x16x131xbf16>
    %44 = vector.shape_cast %43 : vector<1x16x16x131xbf16> to vector<16x16x131xbf16>
    %45 = vector.shape_cast %44 : vector<16x16x131xbf16> to vector<256x131xbf16>
    %c6 = arith.constant 6 : index
    %c0_46 = arith.constant 0 : index
    %c0_47 = arith.constant 0 : index
    %46 = vector.load %arg2[%c6, %c0_46, %c0_47] : memref<9x131x64xbf16, #tpu.memory_space<vmem>>, vector<1x131x64xbf16>
    %47 = vector.shape_cast %46 : vector<1x131x64xbf16> to vector<131x64xbf16>
    %cst_48 = arith.constant dense<0.000000e+00> : vector<256x64xf32>
    %48 = tpu.matmul %45, %47, %cst_48 {dimension_numbers = #tpu.dot_dimension_numbers<[1], [0], [0], [1], [0, 0, 1, 1], [], []>} : vector<256x131xbf16>, vector<131x64xbf16>, vector<256x64xf32> -> vector<256x64xf32>
    %49 = arith.addf %42, %48 : vector<256x64xf32>
    %c0_49 = arith.constant 0 : index
    %c2_50 = arith.constant 2 : index
    %c1_51 = arith.constant 1 : index
    %c0_52 = arith.constant 0 : index
    %50 = vector.load %arg1[%c0_49, %c2_50, %c1_51, %c0_52] : memref<1x18x18x131xbf16, #tpu.memory_space<vmem>>, vector<1x16x16x131xbf16>
    %51 = vector.shape_cast %50 : vector<1x16x16x131xbf16> to vector<16x16x131xbf16>
    %52 = vector.shape_cast %51 : vector<16x16x131xbf16> to vector<256x131xbf16>
    %c7 = arith.constant 7 : index
    %c0_53 = arith.constant 0 : index
    %c0_54 = arith.constant 0 : index
    %53 = vector.load %arg2[%c7, %c0_53, %c0_54] : memref<9x131x64xbf16, #tpu.memory_space<vmem>>, vector<1x131x64xbf16>
    %54 = vector.shape_cast %53 : vector<1x131x64xbf16> to vector<131x64xbf16>
    %cst_55 = arith.constant dense<0.000000e+00> : vector<256x64xf32>
    %55 = tpu.matmul %52, %54, %cst_55 {dimension_numbers = #tpu.dot_dimension_numbers<[1], [0], [0], [1], [0, 0, 1, 1], [], []>} : vector<256x131xbf16>, vector<131x64xbf16>, vector<256x64xf32> -> vector<256x64xf32>
    %56 = arith.addf %49, %55 : vector<256x64xf32>
    %c0_56 = arith.constant 0 : index
    %c2_57 = arith.constant 2 : index
    %c2_58 = arith.constant 2 : index
    %c0_59 = arith.constant 0 : index
    %57 = vector.load %arg1[%c0_56, %c2_57, %c2_58, %c0_59] : memref<1x18x18x131xbf16, #tpu.memory_space<vmem>>, vector<1x16x16x131xbf16>
    %58 = vector.shape_cast %57 : vector<1x16x16x131xbf16> to vector<16x16x131xbf16>
    %59 = vector.shape_cast %58 : vector<16x16x131xbf16> to vector<256x131xbf16>
    %c8 = arith.constant 8 : index
    %c0_60 = arith.constant 0 : index
    %c0_61 = arith.constant 0 : index
    %60 = vector.load %arg2[%c8, %c0_60, %c0_61] : memref<9x131x64xbf16, #tpu.memory_space<vmem>>, vector<1x131x64xbf16>
    %61 = vector.shape_cast %60 : vector<1x131x64xbf16> to vector<131x64xbf16>
    %cst_62 = arith.constant dense<0.000000e+00> : vector<256x64xf32>
    %62 = tpu.matmul %59, %61, %cst_62 {dimension_numbers = #tpu.dot_dimension_numbers<[1], [0], [0], [1], [0, 0, 1, 1], [], []>} : vector<256x131xbf16>, vector<131x64xbf16>, vector<256x64xf32> -> vector<256x64xf32>
    %63 = arith.addf %56, %62 : vector<256x64xf32>
    %c0_63 = arith.constant 0 : index
    %c0_64 = arith.constant 0 : index
    %64 = vector.load %arg3[%c0_63, %c0_64] : memref<1x64xf32, #tpu.memory_space<vmem>>, vector<1x64xf32>
    %65 = vector.broadcast %64 : vector<1x64xf32> to vector<256x64xf32>
    %66 = arith.addf %63, %65 : vector<256x64xf32>
    %cst_65 = arith.constant 0.000000e+00 : f32
    %67 = vector.broadcast %cst_65 : f32 to vector<256x64xf32>
    %68 = arith.cmpf oge, %66, %67 : vector<256x64xf32>
    %cst_66 = arith.constant 2.000000e-01 : f32
    %69 = vector.broadcast %cst_66 : f32 to vector<256x64xf32>
    %70 = arith.mulf %69, %66 : vector<256x64xf32>
    %71 = arith.select %68, %66, %70 : vector<256x64xi1>, vector<256x64xf32>
    %72 = arith.truncf %71 : vector<256x64xf32> to vector<256x64xbf16>
    %c0_67 = arith.constant 0 : index
    %c0_68 = arith.constant 0 : index
    %73 = vector.load %arg4[%c0_67, %c0_68] : memref<64x64xbf16, #tpu.memory_space<vmem>>, vector<64x64xbf16>
    %cst_69 = arith.constant dense<0.000000e+00> : vector<256x64xf32>
    %74 = tpu.matmul %72, %73, %cst_69 {dimension_numbers = #tpu.dot_dimension_numbers<[1], [0], [0], [1], [0, 0, 1, 1], [], []>} : vector<256x64xbf16>, vector<64x64xbf16>, vector<256x64xf32> -> vector<256x64xf32>
    %c0_70 = arith.constant 0 : index
    %c0_71 = arith.constant 0 : index
    %75 = vector.load %arg5[%c0_70, %c0_71] : memref<1x64xf32, #tpu.memory_space<vmem>>, vector<1x64xf32>
    %76 = vector.broadcast %75 : vector<1x64xf32> to vector<256x64xf32>
    %77 = arith.addf %74, %76 : vector<256x64xf32>
    %c0_72 = arith.constant 0 : index
    %c0_73 = arith.constant 0 : index
    %c0_74 = arith.constant 0 : index
    %78 = vector.load %arg6[%c0_72, %c0_73, %c0_74] : memref<1x256x64xf32, #tpu.memory_space<vmem>>, vector<1x256x64xf32>
    %79 = vector.shape_cast %78 : vector<1x256x64xf32> to vector<256x64xf32>
    %80 = vector.shape_cast %77 : vector<256x64xf32> to vector<1x256x64xf32>
    tpu.vector_store %arg6[%c0_72, %c0_73, %c0_74], %80 {strides = array<i32>} : memref<1x256x64xf32, #tpu.memory_space<vmem>>, vector<1x256x64xf32>,
    return
  }
  func.func @transform_0(%arg0: i32) -> (i32, i32, i32, i32) {
    %c0_i32 = arith.constant 0 : i32
    %c0_i32_0 = arith.constant 0 : i32
    %c0_i32_1 = arith.constant 0 : i32
    %c0_i32_2 = arith.constant 0 : i32
    return %arg0, %c0_i32, %c0_i32_0, %c0_i32_1 : i32, i32, i32, i32
  }
  func.func @transform_1(%arg0: i32) -> (i32, i32, i32) {
    %c0_i32 = arith.constant 0 : i32
    %c0_i32_0 = arith.constant 0 : i32
    %c0_i32_1 = arith.constant 0 : i32
    %c0_i32_2 = arith.constant 0 : i32
    return %c0_i32, %c0_i32_0, %c0_i32_1 : i32, i32, i32
  }
  func.func @transform_2(%arg0: i32) -> (i32, i32) {
    %c0_i32 = arith.constant 0 : i32
    %c0_i32_0 = arith.constant 0 : i32
    %c0_i32_1 = arith.constant 0 : i32
    return %c0_i32, %c0_i32_0 : i32, i32
  }
  func.func @transform_3(%arg0: i32) -> (i32, i32) {
    %c0_i32 = arith.constant 0 : i32
    %c0_i32_0 = arith.constant 0 : i32
    %c0_i32_1 = arith.constant 0 : i32
    return %c0_i32, %c0_i32_0 : i32, i32
  }
  func.func @transform_4(%arg0: i32) -> (i32, i32) {
    %c0_i32 = arith.constant 0 : i32
    %c0_i32_0 = arith.constant 0 : i32
    %c0_i32_1 = arith.constant 0 : i32
    return %c0_i32, %c0_i32_0 : i32, i32
  }
  func.func @transform_5(%arg0: i32) -> (i32, i32, i32) {
    %c0_i32 = arith.constant 0 : i32
    %c0_i32_0 = arith.constant 0 : i32
    %c0_i32_1 = arith.constant 0 : i32
    return %arg0, %c0_i32, %c0_i32_0 : i32, i32, i32
  }
}

</mosaic_0001>

<llo_original>
// kernel: gate_forward.1
$region0: #{gate_forward.1}
  #allocation0 [shape = 'u32[]', space=smem, size = 0x4, offset = 0x4, fixed_abs, tag = 'smem constant byte address 0x4 - core index']
  #allocation1 [shape = 'u32[144,128]{1,0:T(1,128)}', space=vmem, size = 0x12000, scoped, tag = 'internal scratch']
  %s0 = inlined_call_operand.vmem [shape: bf16[2,18,18,131], index: 0, kind: input, shape index: {}]
  %s1 = inlined_call_operand.vmem [shape: bf16[9,131,64], index: 1, kind: input, shape index: {}]
  %s2 = inlined_call_operand.vmem [shape: f32[1,64], index: 2, kind: input, shape index: {}]
  %s3 = inlined_call_operand.vmem [shape: bf16[64,64], index: 3, kind: input, shape index: {}]
  %s4 = inlined_call_operand.vmem [shape: f32[1,64], index: 4, kind: input, shape index: {}]
  %s5 = inlined_call_operand.hbm [shape: f32[2,256,64], index: 5, kind: output, shape index: {}]
  %s6 = sld [smem:[#allocation0]]
  $region53: #{gate_forward.1} parent=0
    _
  %s8 = ssub.s32 1, %s6
  %s9 = scalar_select 0, %s8, %s6
  $region1: #{gate_forward.1} parent=0
    #allocation2 [shape = 'u8[262144]{0}', space=vmem, size = 0x40000, scoped, tag = 'output window, operand 0']
    #allocation3 [shape = 's32[2]{0}', space=sflag, size = 0x8, scoped, tag = 'scoped memory for gate_forward.1']
    %10 = vsyncpa [#allocation3], 0
    %s11 = scalar_lea.sflag [#allocation3], 1
    %12 = vsyncpa %s11, 0
    loop: start=0, step=1, limit=4
    $region2: #{gate_forward.1} parent=1 // loop_pre_header
      _
    $region3: #{gate_forward.1} parent=1 // loop_header
      %s14 = sphi 0, %s18
      %p15 = scmp.ge.s32.totalorder %s14, 4
      %s24 = sphi 0, %s26
      %s27 = sphi 0, %s24
      %s28 = sphi 0, %s27
      %s44 = sphi 0, %s28
      %s48 = sphi 0, %s48
      %s50 = sphi 0, %s48
      %s51 = sphi 0, %s50
      %s65 = sphi 0, %s51
      %s69 = sphi 0, %s69
      %s71 = sphi 0, %s69
      %s72 = sphi 0, %s71
      %s86 = sphi 0, %s72
      %s90 = sphi 0, %s90
      %s92 = sphi 0, %s90
      %s93 = sphi 0, %s92
      %s107 = sphi 0, %s93
      %s111 = sphi 0, %s111
      %s113 = sphi 0, %s111
      %s114 = sphi 0, %s113
      %s128 = sphi 0, %s114
      %s134 = sphi 0, %s136
      %s137 = sphi 0, %s134
      %s138 = sphi 0, %s137
      %s154 = sphi 0, %s138
    $region4: #{gate_forward.1} parent=1 // loop_header_branch
      %17 = sbr.rel (%p15) target = $region8
    $region5: #{gate_forward.1} parent=1 // loop_body
      %s19 = ssub.s32 %s14, 1
      %s20 = ssub.s32 %s14, 2
      %s21 = sadd.s32 %s14, 1
      %s22 = ssub.s32 %s14, %s21
      %p23 = scmp.eq.s32.totalorder %s22, 0
      %s25 = sadd.s32 %s24, 1
      %s26 = scalar_select %p23, %s24, %s25
      %p29 = pneg %p23
      %p30 = scmp.eq.s32.totalorder %s14, 1
      %p31 = por %p29, %p30
      %p32 = scmp.ne.s32.totalorder %s24, %s27
      %p33 = scmp.eq.s32.totalorder %s14, 0
      %p34 = por %p32, %p33
      %p35 = scmp.ne.s32.totalorder %s24, %s27
      %p36 = scmp.eq.s32.totalorder %s19, 1
      %p37 = por %p35, %p36
      %p38 = scmp.ne.s32.totalorder %s27, %s28
      %p39 = scmp.eq.s32.totalorder %s19, 0
      %p40 = por %p38, %p39
      %p41 = scmp.ne.s32.totalorder %s27, %s28
      %p42 = scmp.eq.s32.totalorder %s20, 1
      %p43 = por %p41, %p42
      %p45 = scmp.ne.s32.totalorder %s28, %s44
      %p46 = scmp.eq.s32.totalorder %s20, 0
      %p47 = por %p45, %p46
      %s49 = sadd.s32 %s48, 1
      %p52 = scmp.eq.s32.totalorder %s14, 1
      %p53 = scmp.ne.s32.totalorder %s48, %s50
      %p54 = scmp.eq.s32.totalorder %s14, 0
      %p55 = por %p53, %p54
      %p56 = scmp.ne.s32.totalorder %s48, %s50
      %p57 = scmp.eq.s32.totalorder %s19, 1
      %p58 = por %p56, %p57
      %p59 = scmp.ne.s32.totalorder %s50, %s51
      %p60 = scmp.eq.s32.totalorder %s19, 0
      %p61 = por %p59, %p60
      %p62 = scmp.ne.s32.totalorder %s50, %s51
      %p63 = scmp.eq.s32.totalorder %s20, 1
      %p64 = por %p62, %p63
      %p66 = scmp.ne.s32.totalorder %s51, %s65
      %p67 = scmp.eq.s32.totalorder %s20, 0
      %p68 = por %p66, %p67
      %s70 = sadd.s32 %s69, 1
      %p73 = scmp.eq.s32.totalorder %s14, 1
      %p74 = scmp.ne.s32.totalorder %s69, %s71
      %p75 = scmp.eq.s32.totalorder %s14, 0
      %p76 = por %p74, %p75
      %p77 = scmp.ne.s32.totalorder %s69, %s71
      %p78 = scmp.eq.s32.totalorder %s19, 1
      %p79 = por %p77, %p78
      %p80 = scmp.ne.s32.totalorder %s71, %s72
      %p81 = scmp.eq.s32.totalorder %s19, 0
      %p82 = por %p80, %p81
      %p83 = scmp.ne.s32.totalorder %s71, %s72
      %p84 = scmp.eq.s32.totalorder %s20, 1
      %p85 = por %p83, %p84
      %p87 = scmp.ne.s32.totalorder %s72, %s86
      %p88 = scmp.eq.s32.totalorder %s20, 0
      %p89 = por %p87, %p88
      %s91 = sadd.s32 %s90, 1
      %p94 = scmp.eq.s32.totalorder %s14, 1
      %p95 = scmp.ne.s32.totalorder %s90, %s92
      %p96 = scmp.eq.s32.totalorder %s14, 0
      %p97 = por %p95, %p96
      %p98 = scmp.ne.s32.totalorder %s90, %s92
      %p99 = scmp.eq.s32.totalorder %s19, 1
      %p100 = por %p98, %p99
      %p101 = scmp.ne.s32.totalorder %s92, %s93
      %p102 = scmp.eq.s32.totalorder %s19, 0
      %p103 = por %p101, %p102
      %p104 = scmp.ne.s32.totalorder %s92, %s93
      %p105 = scmp.eq.s32.totalorder %s20, 1
      %p106 = por %p104, %p105
      %p108 = scmp.ne.s32.totalorder %s93, %s107
      %p109 = scmp.eq.s32.totalorder %s20, 0
      %p110 = por %p108, %p109
      %s112 = sadd.s32 %s111, 1
      %p115 = scmp.eq.s32.totalorder %s14, 1
      %p116 = scmp.ne.s32.totalorder %s111, %s113
      %p117 = scmp.eq.s32.totalorder %s14, 0
      %p118 = por %p116, %p117
      %p119 = scmp.ne.s32.totalorder %s111, %s113
      %p120 = scmp.eq.s32.totalorder %s19, 1
      %p121 = por %p119, %p120
      %p122 = scmp.ne.s32.totalorder %s113, %s114
      %p123 = scmp.eq.s32.totalorder %s19, 0
      %p124 = por %p122, %p123
      %p125 = scmp.ne.s32.totalorder %s113, %s114
      %p126 = scmp.eq.s32.totalorder %s20, 1
      %p127 = por %p125, %p126
      %p129 = scmp.ne.s32.totalorder %s114, %s128
      %p130 = scmp.eq.s32.totalorder %s20, 0
      %p131 = por %p129, %p130
      %s132 = ssub.s32 %s14, %s21
      %p133 = scmp.eq.s32.totalorder %s132, 0
      %s135 = sadd.s32 %s134, 1
      %s136 = scalar_select %p133, %s134, %s135
      %p139 = pneg %p133
      %p140 = scmp.eq.s32.totalorder %s14, 1
      %p141 = por %p139, %p140
      %p142 = scmp.ne.s32.totalorder %s134, %s137
      %p143 = scmp.eq.s32.totalorder %s14, 0
      %p144 = por %p142, %p143
      %p145 = scmp.ne.s32.totalorder %s134, %s137
      %p146 = scmp.eq.s32.totalorder %s19, 1
      %p147 = por %p145, %p146
      %p148 = scmp.ne.s32.totalorder %s137, %s138
      %p149 = scmp.eq.s32.totalorder %s19, 0
      %p150 = por %p148, %p149
      %p151 = scmp.ne.s32.totalorder %s137, %s138
      %p152 = scmp.eq.s32.totalorder %s20, 1
      %p153 = por %p151, %p152
      %p155 = scmp.ne.s32.totalorder %s138, %s154
      %p156 = scmp.eq.s32.totalorder %s20, 0
      %p157 = por %p155, %p156
      %p158 = scmp.le.s32.totalorder 1, %s14
      %p159 = scmp.lt.s32.totalorder %s14, 3
      %p160 = pnand %p158, %p159
      %p161 = pneg %p160
      // Predicated region
      $region9: #{gate_forward.1} parent=5 // pred_check
        _
      $region10: #{gate_forward.1} parent=5 // pred_check_branch
        %163 = sbr.rel (%p160) target = $region12
      $region11: #{gate_forward.1} parent=5 // pred_region
        %s164 = ssub.s32 %s14, 1
        // Predicated region
        $region13: #{gate_forward.1} parent=11 // pred_check
          %p165 = pneg %p61
        $region14: #{gate_forward.1} parent=11 // pred_check_branch
          %167 = sbr.rel (%p165) target = $region16
        $region15: #{gate_forward.1} parent=11 // pred_region
          _
        $region16: #{gate_forward.1} parent=11 // pred_fallthru
          _
        // Predicated region
        $region17: #{gate_forward.1} parent=11 // pred_check
          %p168 = pneg %p82
        $region18: #{gate_forward.1} parent=11 // pred_check_branch
          %170 = sbr.rel (%p168) target = $region20
        $region19: #{gate_forward.1} parent=11 // pred_region
          _
        $region20: #{gate_forward.1} parent=11 // pred_fallthru
          _
        // Predicated region
        $region21: #{gate_forward.1} parent=11 // pred_check
          %p171 = pneg %p103
        $region22: #{gate_forward.1} parent=11 // pred_check_branch
          %173 = sbr.rel (%p171) target = $region24
        $region23: #{gate_forward.1} parent=11 // pred_region
          _
        $region24: #{gate_forward.1} parent=11 // pred_fallthru
          _
        // Predicated region
        $region25: #{gate_forward.1} parent=11 // pred_check
          %p174 = pneg %p124
        $region26: #{gate_forward.1} parent=11 // pred_check_branch
          %176 = sbr.rel (%p174) target = $region28
        $region27: #{gate_forward.1} parent=11 // pred_region
          _
        $region28: #{gate_forward.1} parent=11 // pred_fallthru
          _
      $region12: #{gate_forward.1} parent=5 // pred_fallthru
        _
      %p177 = scmp.lt.s32.totalorder %s14, 2
      // Predicated region
      $region29: #{gate_forward.1} parent=5 // pred_check
        %p178 = pneg %p177
      $region30: #{gate_forward.1} parent=5 // pred_check_branch
        %180 = sbr.rel (%p178) target = $region32
      $region31: #{gate_forward.1} parent=5 // pred_region
        // Predicated region
        $region33: #{gate_forward.1} parent=31 // pred_check
          %p181 = pneg %p34
        $region34: #{gate_forward.1} parent=31 // pred_check_branch
          %183 = sbr.rel (%p181) target = $region36
        $region35: #{gate_forward.1} parent=31 // pred_region
          %p184 = scmp.lt.s32.totalorder %s14, 1
          %s185 = scalar_select %p184, %s14, 1
          %s186 = smul.addr %s185, 108
          %s187 = smul.addr %s186, 4
          %s188 = scalar_lea.vmem %s0, %s187
        $region36: #{gate_forward.1} parent=31 // pred_fallthru
          _
      $region32: #{gate_forward.1} parent=5 // pred_fallthru
        _
      %p189 = scmp.le.s32.totalorder 1, %s14
      %p190 = scmp.lt.s32.totalorder %s14, 3
      %p191 = pnand %p189, %p190
      %p192 = pneg %p191
      // Predicated region
      $region37: #{gate_forward.1} parent=5 // pred_check
        _
      $region38: #{gate_forward.1} parent=5 // pred_check_branch
        %194 = sbr.rel (%p191) target = $region40
      $region39: #{gate_forward.1} parent=5 // pred_region
        %s195 = ssub.s32 %s14, 1
        %p196 = scmp.lt.s32.totalorder %s19, 1
        %s197 = scalar_select %p196, %s19, 1
        %s198 = smul.addr %s197, 108
        %s199 = smul.addr %s198, 4
        %s200 = scalar_lea.vmem %s0, %s199
        %p201 = pneg %p40
        %p202 = pneg %p37
        %p203 = pneg %p61
        %p204 = pneg %p58
        %p205 = pneg %p82
        %p206 = pneg %p79
        %p207 = pneg %p103
        %p208 = pneg %p100
        %p209 = pneg %p124
        %p210 = pneg %p121
        %p211 = pneg %p150
        %p212 = pneg %p147
        %s213 = sand.u32 %s137, 1
        %s214 = scalar_lea.sflag [#allocation3], %s213
        %s215 = sand.u32 %s137, 1
        %s216 = smul.addr %s215, 256
        %s217 = scalar_lea.vmem [#allocation2], %s216
        %p218 = scmp.lt.s32.totalorder %s19, 1
        %s219 = scalar_select %p218, %s19, 1
        %s220 = smul.addr %s219, 108
        %s221 = smul.addr %s220, 4
        %s222 = scalar_lea.vmem %s0, %s221
        %v224 = vld [vmem:[%s222] sm:$0xff]
        %v225 = vld [vmem:[%s222 + $0x8] sm:$0xff]
        %v226 = vld [vmem:[%s222 + $0x18] sm:$0xff]
        %v227 = vld [vmem:[%s222 + $0x20] sm:$0xff]
        %v228 = vld [vmem:[%s222 + $0x30] sm:$0xff]
        %v229 = vld [vmem:[%s222 + $0x38] sm:$0xff]
        %v230 = vld [vmem:[%s222 + $0x48] sm:$0xff]
        %v231 = vld [vmem:[%s222 + $0x50] sm:$0xff]
        %v232 = vld [vmem:[%s222 + $0x60] sm:$0xff]
        %v233 = vld [vmem:[%s222 + $0x68] sm:$0xff]
        %v234 = vld [vmem:[%s222 + $0x78] sm:$0xff]
        %v235 = vld [vmem:[%s222 + $0x80] sm:$0xff]
        %v236 = vld [vmem:[%s222 + $0x90] sm:$0xff]
        %v237 = vld [vmem:[%s222 + $0x98] sm:$0xff]
        %v238 = vld [vmem:[%s222 + $0xa8] sm:$0xff]
        %v239 = vld [vmem:[%s222 + $0xb0] sm:$0xff]
        %v240 = vld [vmem:[%s222 + $0xc0] sm:$0xff]
        %v241 = vld [vmem:[%s222 + $0xc8] sm:$0xff]
        %v242 = vld [vmem:[%s222 + $0xd8] sm:$0xff]
        %v243 = vld [vmem:[%s222 + $0xe0] sm:$0xff]
        %v244 = vld [vmem:[%s222 + $0xf0] sm:$0xff]
        %v245 = vld [vmem:[%s222 + $0xf8] sm:$0xff]
        %v246 = vld [vmem:[%s222 + $0x108] sm:$0xff]
        %v247 = vld [vmem:[%s222 + $0x110] sm:$0xff]
        %v248 = vld [vmem:[%s222 + $0x120] sm:$0xff]
        %v249 = vld [vmem:[%s222 + $0x128] sm:$0xff]
        %v250 = vld [vmem:[%s222 + $0x138] sm:$0xff]
        %v251 = vld [vmem:[%s222 + $0x140] sm:$0xff]
        %v252 = vld [vmem:[%s222 + $0x150] sm:$0xff]
        %v253 = vld [vmem:[%s222 + $0x158] sm:$0xff]
        %v254 = vld [vmem:[%s222 + $0x168] sm:$0xff]
        %v255 = vld [vmem:[%s222 + $0x170] sm:$0xff]
        %v256 = vld [vmem:[%s1] sm:$0xf]
        %v257 = vld [vmem:[%s1 + $0x4] sm:$0xf]
        %v258 = vld [vmem:[%s1 + $0x8] sm:$0xf]
        %v259 = vld [vmem:[%s1 + $0xc] sm:$0xf]
        %v260 = vld [vmem:[%s1 + $0x10] sm:$0xf]
        %v261 = vld [vmem:[%s1 + $0x14] sm:$0xf]
        %v262 = vld [vmem:[%s1 + $0x18] sm:$0xf]
        %v263 = vld [vmem:[%s1 + $0x1c] sm:$0xf]
        %v264 = vld [vmem:[%s1 + $0x20] sm:$0xf]
        %v265 = vld [vmem:[%s1 + $0x24] sm:$0xf]
        %v266 = vld [vmem:[%s1 + $0x28] sm:$0xf]
        %v267 = vld [vmem:[%s1 + $0x2c] sm:$0xf]
        %v268 = vld [vmem:[%s1 + $0x30] sm:$0xf]
        %v269 = vld [vmem:[%s1 + $0x34] sm:$0xf]
        %v270 = vld [vmem:[%s1 + $0x38] sm:$0xf]
        %v271 = vld [vmem:[%s1 + $0x3c] sm:$0xf]
        %v272 = vld [vmem:[%s1 + $0x40] sm:$0x3]
        %v273 = vld [vmem:[%s222 + $0x10] sm:$0x11]
        %v274 = vld [vmem:[%s222 + $0x28] sm:$0x11]
        %v275 = vld [vmem:[%s222 + $0x40] sm:$0x11]
        %v276 = vld [vmem:[%s222 + $0x58] sm:$0x11]
        %v277 = vld [vmem:[%s222 + $0x70] sm:$0x11]
        %v278 = vld [vmem:[%s222 + $0x88] sm:$0x11]
        %v279 = vld [vmem:[%s222 + $0xa0] sm:$0x11]
        %v280 = vld [vmem:[%s222 + $0xb8] sm:$0x11]
        %v281 = vld [vmem:[%s222 + $0xd0] sm:$0x11]
        %v282 = vld [vmem:[%s222 + $0xe8] sm:$0x11]
        %v283 = vld [vmem:[%s222 + $0x100] sm:$0x11]
        %v284 = vld [vmem:[%s222 + $0x118] sm:$0x11]
        %v285 = vld [vmem:[%s222 + $0x130] sm:$0x11]
        %v286 = vld [vmem:[%s222 + $0x148] sm:$0x11]
        %v287 = vld [vmem:[%s222 + $0x160] sm:$0x11]
        %v288 = vld [vmem:[%s222 + $0x178] sm:$0x11]
        %vm289 = vsmask.f32 3328
        %vm290 = vsmask.f32 7440
        %vm291 = vmor %vm289, %vm290
        %v293 = vshrl.u32 %v224, 16
        %v295 = vrot.slane %v293, 4
        %v296 = vshll.u32 %v224, 16
        %v298 = vrot.slane %v296, 5
        %v299 = vor.u32 %v295, %v298
        %v300 = vrot.slane %v299, 4
        %v302 = vshll.u32 %v225, 16
        %v304 = vrot.slane %v302, 5
        %v305 = vsel %vm291, %v300, %v304
        %v306 = vshrl.u32 %v225, 16
        %v308 = vrot.slane %v306, 4
        %v309 = vor.u32 %v308, %v304
        %v310 = vrot.slane %v309, 4
        %v312 = vshll.u32 %v273, 16
        %v314 = vrot.slane %v312, 5
        %v315 = vsel %vm291, %v310, %v314
        %v317 = vshrl.u32 %v226, 16
        %v319 = vrot.slane %v317, 4
        %v320 = vshll.u32 %v226, 16
        %v322 = vrot.slane %v320, 5
        %v323 = vor.u32 %v319, %v322
        %v324 = vrot.slane %v323, 4
        %v326 = vshll.u32 %v227, 16
        %v328 = vrot.slane %v326, 5
        %v329 = vsel %vm291, %v324, %v328
        %v330 = vshrl.u32 %v227, 16
        %v332 = vrot.slane %v330, 4
        %v333 = vor.u32 %v332, %v328
        %v334 = vrot.slane %v333, 4
        %v336 = vshll.u32 %v274, 16
        %v338 = vrot.slane %v336, 5
        %v339 = vsel %vm291, %v334, %v338
        %v341 = vshrl.u32 %v228, 16
        %v343 = vrot.slane %v341, 4
        %v344 = vshll.u32 %v228, 16
        %v346 = vrot.slane %v344, 5
        %v347 = vor.u32 %v343, %v346
        %v348 = vrot.slane %v347, 4
        %v350 = vshll.u32 %v229, 16
        %v352 = vrot.slane %v350, 5
        %v353 = vsel %vm291, %v348, %v352
        %v354 = vshrl.u32 %v229, 16
        %v356 = vrot.slane %v354, 4
        %v357 = vor.u32 %v356, %v352
        %v358 = vrot.slane %v357, 4
        %v360 = vshll.u32 %v275, 16
        %v362 = vrot.slane %v360, 5
        %v363 = vsel %vm291, %v358, %v362
        %v365 = vshrl.u32 %v230, 16
        %v367 = vrot.slane %v365, 4
        %v368 = vshll.u32 %v230, 16
        %v370 = vrot.slane %v368, 5
        %v371 = vor.u32 %v367, %v370
        %v372 = vrot.slane %v371, 4
        %v374 = vshll.u32 %v231, 16
        %v376 = vrot.slane %v374, 5
        %v377 = vsel %vm291, %v372, %v376
        %v378 = vshrl.u32 %v231, 16
        %v380 = vrot.slane %v378, 4
        %v381 = vor.u32 %v380, %v376
        %v382 = vrot.slane %v381, 4
        %v384 = vshll.u32 %v276, 16
        %v386 = vrot.slane %v384, 5
        %v387 = vsel %vm291, %v382, %v386
        %v389 = vshrl.u32 %v232, 16
        %v391 = vrot.slane %v389, 4
        %v392 = vshll.u32 %v232, 16
        %v394 = vrot.slane %v392, 5
        %v395 = vor.u32 %v391, %v394
        %v396 = vrot.slane %v395, 4
        %v398 = vshll.u32 %v233, 16
        %v400 = vrot.slane %v398, 5
        %v401 = vsel %vm291, %v396, %v400
        %v402 = vshrl.u32 %v233, 16
        %v404 = vrot.slane %v402, 4
        %v405 = vor.u32 %v404, %v400
        %v406 = vrot.slane %v405, 4
        %v408 = vshll.u32 %v277, 16
        %v410 = vrot.slane %v408, 5
        %v411 = vsel %vm291, %v406, %v410
        %v413 = vshrl.u32 %v234, 16
        %v415 = vrot.slane %v413, 4
        %v416 = vshll.u32 %v234, 16
        %v418 = vrot.slane %v416, 5
        %v419 = vor.u32 %v415, %v418
        %v420 = vrot.slane %v419, 4
        %v422 = vshll.u32 %v235, 16
        %v424 = vrot.slane %v422, 5
        %v425 = vsel %vm291, %v420, %v424
        %v426 = vshrl.u32 %v235, 16
        %v428 = vrot.slane %v426, 4
        %v429 = vor.u32 %v428, %v424
        %v430 = vrot.slane %v429, 4
        %v432 = vshll.u32 %v278, 16
        %v434 = vrot.slane %v432, 5
        %v435 = vsel %vm291, %v430, %v434
        %v437 = vshrl.u32 %v236, 16
        %v439 = vrot.slane %v437, 4
        %v440 = vshll.u32 %v236, 16
        %v442 = vrot.slane %v440, 5
        %v443 = vor.u32 %v439, %v442
        %v444 = vrot.slane %v443, 4
        %v446 = vshll.u32 %v237, 16
        %v448 = vrot.slane %v446, 5
        %v449 = vsel %vm291, %v444, %v448
        %v450 = vshrl.u32 %v237, 16
        %v452 = vrot.slane %v450, 4
        %v453 = vor.u32 %v452, %v448
        %v454 = vrot.slane %v453, 4
        %v456 = vshll.u32 %v279, 16
        %v458 = vrot.slane %v456, 5
        %v459 = vsel %vm291, %v454, %v458
        %v461 = vshrl.u32 %v238, 16
        %v463 = vrot.slane %v461, 4
        %v464 = vshll.u32 %v238, 16
        %v466 = vrot.slane %v464, 5
        %v467 = vor.u32 %v463, %v466
        %v468 = vrot.slane %v467, 4
        %v470 = vshll.u32 %v239, 16
        %v472 = vrot.slane %v470, 5
        %v473 = vsel %vm291, %v468, %v472
        %v474 = vshrl.u32 %v239, 16
        %v476 = vrot.slane %v474, 4
        %v477 = vor.u32 %v476, %v472
        %v478 = vrot.slane %v477, 4
        %v480 = vshll.u32 %v280, 16
        %v482 = vrot.slane %v480, 5
        %v483 = vsel %vm291, %v478, %v482
        %v485 = vshrl.u32 %v240, 16
        %v487 = vrot.slane %v485, 4
        %v488 = vshll.u32 %v240, 16
        %v490 = vrot.slane %v488, 5
        %v491 = vor.u32 %v487, %v490
        %v492 = vrot.slane %v491, 4
        %v494 = vshll.u32 %v241, 16
        %v496 = vrot.slane %v494, 5
        %v497 = vsel %vm291, %v492, %v496
        %v498 = vshrl.u32 %v241, 16
        %v500 = vrot.slane %v498, 4
        %v501 = vor.u32 %v500, %v496
        %v502 = vrot.slane %v501, 4
        %v504 = vshll.u32 %v281, 16
        %v506 = vrot.slane %v504, 5
        %v507 = vsel %vm291, %v502, %v506
        %v509 = vshrl.u32 %v242, 16
        %v511 = vrot.slane %v509, 4
        %v512 = vshll.u32 %v242, 16
        %v514 = vrot.slane %v512, 5
        %v515 = vor.u32 %v511, %v514
        %v516 = vrot.slane %v515, 4
        %v518 = vshll.u32 %v243, 16
        %v520 = vrot.slane %v518, 5
        %v521 = vsel %vm291, %v516, %v520
        %v522 = vshrl.u32 %v243, 16
        %v524 = vrot.slane %v522, 4
        %v525 = vor.u32 %v524, %v520
        %v526 = vrot.slane %v525, 4
        %v528 = vshll.u32 %v282, 16
        %v530 = vrot.slane %v528, 5
        %v531 = vsel %vm291, %v526, %v530
        %v533 = vshrl.u32 %v244, 16
        %v535 = vrot.slane %v533, 4
        %v536 = vshll.u32 %v244, 16
        %v538 = vrot.slane %v536, 5
        %v539 = vor.u32 %v535, %v538
        %v540 = vrot.slane %v539, 4
        %v542 = vshll.u32 %v245, 16
        %v544 = vrot.slane %v542, 5
        %v545 = vsel %vm291, %v540, %v544
        %v546 = vshrl.u32 %v245, 16
        %v548 = vrot.slane %v546, 4
        %v549 = vor.u32 %v548, %v544
        %v550 = vrot.slane %v549, 4
        %v552 = vshll.u32 %v283, 16
        %v554 = vrot.slane %v552, 5
        %v555 = vsel %vm291, %v550, %v554
        %v557 = vshrl.u32 %v246, 16
        %v559 = vrot.slane %v557, 4
        %v560 = vshll.u32 %v246, 16
        %v562 = vrot.slane %v560, 5
        %v563 = vor.u32 %v559, %v562
        %v564 = vrot.slane %v563, 4
        %v566 = vshll.u32 %v247, 16
        %v568 = vrot.slane %v566, 5
        %v569 = vsel %vm291, %v564, %v568
        %v570 = vshrl.u32 %v247, 16
        %v572 = vrot.slane %v570, 4
        %v573 = vor.u32 %v572, %v568
        %v574 = vrot.slane %v573, 4
        %v576 = vshll.u32 %v284, 16
        %v578 = vrot.slane %v576, 5
        %v579 = vsel %vm291, %v574, %v578
        %v581 = vshrl.u32 %v248, 16
        %v583 = vrot.slane %v581, 4
        %v584 = vshll.u32 %v248, 16
        %v586 = vrot.slane %v584, 5
        %v587 = vor.u32 %v583, %v586
        %v588 = vrot.slane %v587, 4
        %v590 = vshll.u32 %v249, 16
        %v592 = vrot.slane %v590, 5
        %v593 = vsel %vm291, %v588, %v592
        %v594 = vshrl.u32 %v249, 16
        %v596 = vrot.slane %v594, 4
        %v597 = vor.u32 %v596, %v592
        %v598 = vrot.slane %v597, 4
        %v600 = vshll.u32 %v285, 16
        %v602 = vrot.slane %v600, 5
        %v603 = vsel %vm291, %v598, %v602
        %v605 = vshrl.u32 %v250, 16
        %v607 = vrot.slane %v605, 4
        %v608 = vshll.u32 %v250, 16
        %v610 = vrot.slane %v608, 5
        %v611 = vor.u32 %v607, %v610
        %v612 = vrot.slane %v611, 4
        %v614 = vshll.u32 %v251, 16
        %v616 = vrot.slane %v614, 5
        %v617 = vsel %vm291, %v612, %v616
        %v618 = vshrl.u32 %v251, 16
        %v620 = vrot.slane %v618, 4
        %v621 = vor.u32 %v620, %v616
        %v622 = vrot.slane %v621, 4
        %v624 = vshll.u32 %v286, 16
        %v626 = vrot.slane %v624, 5
        %v627 = vsel %vm291, %v622, %v626
        %v629 = vshrl.u32 %v252, 16
        %v631 = vrot.slane %v629, 4
        %v632 = vshll.u32 %v252, 16
        %v634 = vrot.slane %v632, 5
        %v635 = vor.u32 %v631, %v634
        %v636 = vrot.slane %v635, 4
        %v638 = vshll.u32 %v253, 16
        %v640 = vrot.slane %v638, 5
        %v641 = vsel %vm291, %v636, %v640
        %v642 = vshrl.u32 %v253, 16
        %v644 = vrot.slane %v642, 4
        %v645 = vor.u32 %v644, %v640
        %v646 = vrot.slane %v645, 4
        %v648 = vshll.u32 %v287, 16
        %v650 = vrot.slane %v648, 5
        %v651 = vsel %vm291, %v646, %v650
        %v653 = vshrl.u32 %v254, 16
        %v655 = vrot.slane %v653, 4
        %v656 = vshll.u32 %v254, 16
        %v658 = vrot.slane %v656, 5
        %v659 = vor.u32 %v655, %v658
        %v660 = vrot.slane %v659, 4
        %v662 = vshll.u32 %v255, 16
        %v664 = vrot.slane %v662, 5
        %v665 = vsel %vm291, %v660, %v664
        %v666 = vshrl.u32 %v255, 16
        %v668 = vrot.slane %v666, 4
        %v669 = vor.u32 %v668, %v664
        %v670 = vrot.slane %v669, 4
        %v672 = vshll.u32 %v288, 16
        %v674 = vrot.slane %v672, 5
        %v675 = vsel %vm291, %v670, %v674
        %s676 = scalar_lea.vmem %s1, 68
        %v677 = vld [vmem:[%s676] sm:$0xf]
        %v678 = vld [vmem:[%s676 + $0x4] sm:$0xf]
        %v679 = vld [vmem:[%s676 + $0x8] sm:$0xf]
        %v680 = vld [vmem:[%s676 + $0xc] sm:$0xf]
        %v681 = vld [vmem:[%s676 + $0x10] sm:$0xf]
        %v682 = vld [vmem:[%s676 + $0x14] sm:$0xf]
        %v683 = vld [vmem:[%s676 + $0x18] sm:$0xf]
        %v684 = vld [vmem:[%s676 + $0x1c] sm:$0xf]
        %v685 = vld [vmem:[%s676 + $0x20] sm:$0xf]
        %v686 = vld [vmem:[%s676 + $0x24] sm:$0xf]
        %v687 = vld [vmem:[%s676 + $0x28] sm:$0xf]
        %v688 = vld [vmem:[%s676 + $0x2c] sm:$0xf]
        %v689 = vld [vmem:[%s676 + $0x30] sm:$0xf]
        %v690 = vld [vmem:[%s676 + $0x34] sm:$0xf]
        %v691 = vld [vmem:[%s676 + $0x38] sm:$0xf]
        %v692 = vld [vmem:[%s676 + $0x3c] sm:$0xf]
        %v693 = vld [vmem:[%s676 + $0x40] sm:$0x3]
        %v694 = vunpack.c.l.b16 %v305
        %v695 = vunpack.c.h.b16 %v305
        %v696 = vunpack.c.l.b16 %v315
        %v697 = vunpack.c.h.b16 %v315
        %v698 = vunpack.c.l.b16 %v329
        %v699 = vunpack.c.h.b16 %v329
        %v700 = vunpack.c.l.b16 %v339
        %v701 = vunpack.c.h.b16 %v339
        %v702 = vunpack.c.l.b16 %v353
        %v703 = vunpack.c.h.b16 %v353
        %v704 = vunpack.c.l.b16 %v363
        %v705 = vunpack.c.h.b16 %v363
        %v706 = vunpack.c.l.b16 %v377
        %v707 = vunpack.c.h.b16 %v377
        %v708 = vunpack.c.l.b16 %v387
        %v709 = vunpack.c.h.b16 %v387
        %v710 = vunpack.c.l.b16 %v401
        %v711 = vunpack.c.h.b16 %v401
        %v712 = vunpack.c.l.b16 %v411
        %v713 = vunpack.c.h.b16 %v411
        %v714 = vunpack.c.l.b16 %v425
        %v715 = vunpack.c.h.b16 %v425
        %v716 = vunpack.c.l.b16 %v435
        %v717 = vunpack.c.h.b16 %v435
        %v718 = vunpack.c.l.b16 %v449
        %v719 = vunpack.c.h.b16 %v449
        %v720 = vunpack.c.l.b16 %v459
        %v721 = vunpack.c.h.b16 %v459
        %v722 = vunpack.c.l.b16 %v473
        %v723 = vunpack.c.h.b16 %v473
        %v724 = vunpack.c.l.b16 %v483
        %v725 = vunpack.c.h.b16 %v483
        %v726 = vunpack.c.l.b16 %v497
        %v727 = vunpack.c.h.b16 %v497
        %v728 = vunpack.c.l.b16 %v507
        %v729 = vunpack.c.h.b16 %v507
        %v730 = vunpack.c.l.b16 %v521
        %v731 = vunpack.c.h.b16 %v521
        %v732 = vunpack.c.l.b16 %v531
        %v733 = vunpack.c.h.b16 %v531
        %v734 = vunpack.c.l.b16 %v545
        %v735 = vunpack.c.h.b16 %v545
        %v736 = vunpack.c.l.b16 %v555
        %v737 = vunpack.c.h.b16 %v555
        %v738 = vunpack.c.l.b16 %v569
        %v739 = vunpack.c.h.b16 %v569
        %v740 = vunpack.c.l.b16 %v579
        %v741 = vunpack.c.h.b16 %v579
        %v742 = vunpack.c.l.b16 %v593
        %v743 = vunpack.c.h.b16 %v593
        %v744 = vunpack.c.l.b16 %v603
        %v745 = vunpack.c.h.b16 %v603
        %v746 = vunpack.c.l.b16 %v617
        %v747 = vunpack.c.h.b16 %v617
        %v748 = vunpack.c.l.b16 %v627
        %v749 = vunpack.c.h.b16 %v627
        %v750 = vunpack.c.l.b16 %v641
        %v751 = vunpack.c.h.b16 %v641
        %v752 = vunpack.c.l.b16 %v651
        %v753 = vunpack.c.h.b16 %v651
        %v754 = vunpack.c.l.b16 %v665
        %v755 = vunpack.c.h.b16 %v665
        %v756 = vunpack.c.l.b16 %v675
        %v757 = vunpack.c.h.b16 %v675
        %v758 = vpack.c.b16 %v696, %v694
        %v759 = vpack.c.b16 %v697, %v695
        %v760 = vpack.c.b16 %v700, %v698
        %v761 = vpack.c.b16 %v701, %v699
        %v762 = vpack.c.b16 %v704, %v702
        %v763 = vpack.c.b16 %v705, %v703
        %v764 = vpack.c.b16 %v708, %v706
        %v765 = vpack.c.b16 %v709, %v707
        %v766 = vpack.c.b16 %v712, %v710
        %v767 = vpack.c.b16 %v713, %v711
        %v768 = vpack.c.b16 %v716, %v714
        %v769 = vpack.c.b16 %v717, %v715
        %v770 = vpack.c.b16 %v720, %v718
        %v771 = vpack.c.b16 %v721, %v719
        %v772 = vpack.c.b16 %v724, %v722
        %v773 = vpack.c.b16 %v725, %v723
        %v774 = vpack.c.b16 %v728, %v726
        %v775 = vpack.c.b16 %v729, %v727
        %v776 = vpack.c.b16 %v732, %v730
        %v777 = vpack.c.b16 %v733, %v731
        %v778 = vpack.c.b16 %v736, %v734
        %v779 = vpack.c.b16 %v737, %v735
        %v780 = vpack.c.b16 %v740, %v738
        %v781 = vpack.c.b16 %v741, %v739
        %v782 = vpack.c.b16 %v744, %v742
        %v783 = vpack.c.b16 %v745, %v743
        %v784 = vpack.c.b16 %v748, %v746
        %v785 = vpack.c.b16 %v749, %v747
        %v786 = vpack.c.b16 %v752, %v750
        %v787 = vpack.c.b16 %v753, %v751
        %v788 = vpack.c.b16 %v756, %v754
        %v789 = vpack.c.b16 %v757, %v755
        %v823 = vunpack.c.l.b16 %v677
        %v824 = vunpack.c.l.b16 %v678
        %v825 = vunpack.c.l.b16 %v679
        %v826 = vunpack.c.l.b16 %v680
        %v827 = vunpack.c.l.b16 %v681
        %v828 = vunpack.c.l.b16 %v682
        %v829 = vunpack.c.l.b16 %v683
        %v830 = vunpack.c.l.b16 %v684
        %v831 = vunpack.c.l.b16 %v685
        %v832 = vunpack.c.l.b16 %v686
        %v833 = vunpack.c.l.b16 %v687
        %v834 = vunpack.c.l.b16 %v688
        %v835 = vunpack.c.l.b16 %v689
        %v836 = vunpack.c.l.b16 %v690
        %v837 = vunpack.c.l.b16 %v691
        %v838 = vunpack.c.l.b16 %v692
        %v839 = vunpack.c.l.b16 %v693
        %v840 = vpack.c.b16 %v824, %v823
        %v841 = vpack.c.b16 %v826, %v825
        %v842 = vpack.c.b16 %v828, %v827
        %v843 = vpack.c.b16 %v830, %v829
        %v844 = vpack.c.b16 %v832, %v831
        %v845 = vpack.c.b16 %v834, %v833
        %v846 = vpack.c.b16 %v836, %v835
        %v847 = vpack.c.b16 %v838, %v837
        %v848 = vpack.c.b16 %v839, %v839
        %vm857 = vcmask 23552
        %v859 = vsel %vm857, %v759, 0
        %v862 = vsel %vm857, %v761, 0
        %v865 = vsel %vm857, %v763, 0
        %v868 = vsel %vm857, %v765, 0
        %v871 = vsel %vm857, %v767, 0
        %v874 = vsel %vm857, %v769, 0
        %v877 = vsel %vm857, %v771, 0
        %v880 = vsel %vm857, %v773, 0
        %v883 = vsel %vm857, %v775, 0
        %v886 = vsel %vm857, %v777, 0
        %v889 = vsel %vm857, %v779, 0
        %v892 = vsel %vm857, %v781, 0
        %v895 = vsel %vm857, %v783, 0
        %v898 = vsel %vm857, %v785, 0
        %v901 = vsel %vm857, %v787, 0
        %v904 = vsel %vm857, %v789, 0
        %vm906 = vcmask 1040384
        %vm907 = vcmask 1041408
        %v908 = vsel %vm906, 4294967295, 65535
        %v909 = vsel %vm907, %v908, 0
        %v911 = vand.u32 %v848, %v909
        %913 = vmatprep.subr.bf16.mxu0 0
        %914 = vmatpush1.bf16.msra.mxu0 %v840
        %915 = vmatprep.subr.bf16.mxu0 0
        %916 = vmatpush1.bf16.msra.mxu0 %v841
        %917 = vmatprep.subr.bf16.mxu0 0
        %918 = vmatpush1.bf16.msra.mxu0 %v842
        %919 = vmatprep.subr.bf16.mxu0 0
        %920 = vmatpush1.bf16.msra.mxu0 %v843
        %921 = vmatprep.subr.bf16.mxu0 0
        %922 = vmatpush1.bf16.msra.mxu0 %v844
        %923 = vmatprep.subr.bf16.mxu0 0
        %924 = vmatpush1.bf16.msra.mxu0 %v845
        %925 = vmatprep.subr.bf16.mxu0 0
        %926 = vmatpush1.bf16.msra.mxu0 %v846
        %927 = vmatprep.subr.bf16.mxu0 0
        %928 = vmatpush1.bf16.msra.mxu0 %v847
        %929 = vmatprep.subr.bf16.mxu0 0
        %930 = vmatpush1.bf16.msra.mxu0 %v911
        %931 = vmatprep.subr.bf16.mxu0 0
        %932 = vmatpush1.bf16.msra.mxu0 0
        %933 = vmatprep.subr.bf16.mxu0 0
        %934 = vmatpush1.bf16.msra.mxu0 0
        %935 = vmatprep.subr.bf16.mxu0 0
        %936 = vmatpush1.bf16.msra.mxu0 0
        %937 = vmatprep.subr.bf16.mxu0 0
        %938 = vmatpush1.bf16.msra.mxu0 0
        %939 = vmatprep.subr.bf16.mxu0 0
        %940 = vmatpush1.bf16.msra.mxu0 0
        %941 = vmatprep.subr.bf16.mxu0 0
        %942 = vmatpush1.bf16.msra.mxu0 0
        %943 = vmatprep.subr.bf16.mxu0 0
        %944 = vmatpush1.bf16.msra.mxu0 0
        %945 = vmatprep.mubr.bf16.mxu0 %v859
        %946 = vmatmul.mubr.bf16.gmra.mrb[0].mxu0 %v758
        %v947 = vpop.f32.mrb[0].mxu0
        %v948 = vadd.f32 0.0, %v947
        %v949 = vpop.f32.mrb[0].mxu0
        %v950 = vpop.f32.mrb[0].mxu0
        %v951 = vadd.f32 0.0, %v950
        %v952 = vpop.f32.mrb[0].mxu0
        %953 = vmatprep.mubr.bf16.mxu0 %v862
        %954 = vmatmul.mubr.bf16.gmra.mrb[0].mxu0 %v760
        %v955 = vpop.f32.mrb[0].mxu0
        %v956 = vadd.f32 0.0, %v955
        %v957 = vpop.f32.mrb[0].mxu0
        %v958 = vpop.f32.mrb[0].mxu0
        %v959 = vadd.f32 0.0, %v958
        %v960 = vpop.f32.mrb[0].mxu0
        %961 = vmatprep.mubr.bf16.mxu0 %v865
        %962 = vmatmul.mubr.bf16.gmra.mrb[0].mxu0 %v762
        %v963 = vpop.f32.mrb[0].mxu0
        %v964 = vadd.f32 0.0, %v963
        %v965 = vpop.f32.mrb[0].mxu0
        %v966 = vpop.f32.mrb[0].mxu0
        %v967 = vadd.f32 0.0, %v966
        %v968 = vpop.f32.mrb[0].mxu0
        %969 = vmatprep.mubr.bf16.mxu0 %v868
        %970 = vmatmul.mubr.bf16.gmra.mrb[0].mxu0 %v764
        %v971 = vpop.f32.mrb[0].mxu0
        %v972 = vadd.f32 0.0, %v971
        %v973 = vpop.f32.mrb[0].mxu0
        %v974 = vpop.f32.mrb[0].mxu0
        %v975 = vadd.f32 0.0, %v974
        %v976 = vpop.f32.mrb[0].mxu0
        %977 = vmatprep.mubr.bf16.mxu0 %v871
        %978 = vmatmul.mubr.bf16.gmra.mrb[0].mxu0 %v766
        %v979 = vpop.f32.mrb[0].mxu0
        %v980 = vadd.f32 0.0, %v979
        %v981 = vpop.f32.mrb[0].mxu0
        %v982 = vpop.f32.mrb[0].mxu0
        %v983 = vadd.f32 0.0, %v982
        %v984 = vpop.f32.mrb[0].mxu0
        %985 = vmatprep.mubr.bf16.mxu0 %v874
        %986 = vmatmul.mubr.bf16.gmra.mrb[0].mxu0 %v768
        %v987 = vpop.f32.mrb[0].mxu0
        %v988 = vadd.f32 0.0, %v987
        %v989 = vpop.f32.mrb[0].mxu0
        %v990 = vpop.f32.mrb[0].mxu0
        %v991 = vadd.f32 0.0, %v990
        %v992 = vpop.f32.mrb[0].mxu0
        %993 = vmatprep.mubr.bf16.mxu0 %v877
        %994 = vmatmul.mubr.bf16.gmra.mrb[0].mxu0 %v770
        %v995 = vpop.f32.mrb[0].mxu0
        %v996 = vadd.f32 0.0, %v995
        %v997 = vpop.f32.mrb[0].mxu0
        %v998 = vpop.f32.mrb[0].mxu0
        %v999 = vadd.f32 0.0, %v998
        %v1000 = vpop.f32.mrb[0].mxu0
        %1001 = vmatprep.mubr.bf16.mxu0 %v880
        %1002 = vmatmul.mubr.bf16.gmra.mrb[0].mxu0 %v772
        %v1003 = vpop.f32.mrb[0].mxu0
        %v1004 = vadd.f32 0.0, %v1003
        %v1005 = vpop.f32.mrb[0].mxu0
        %v1006 = vpop.f32.mrb[0].mxu0
        %v1007 = vadd.f32 0.0, %v1006
        %v1008 = vpop.f32.mrb[0].mxu0
        %1009 = vmatprep.mubr.bf16.mxu0 %v883
        %1010 = vmatmul.mubr.bf16.gmra.mrb[0].mxu0 %v774
        %v1011 = vpop.f32.mrb[0].mxu0
        %v1012 = vadd.f32 0.0, %v1011
        %v1013 = vpop.f32.mrb[0].mxu0
        %v1014 = vpop.f32.mrb[0].mxu0
        %v1015 = vadd.f32 0.0, %v1014
        %v1016 = vpop.f32.mrb[0].mxu0
        %1017 = vmatprep.mubr.bf16.mxu0 %v886
        %1018 = vmatmul.mubr.bf16.gmra.mrb[0].mxu0 %v776
        %v1019 = vpop.f32.mrb[0].mxu0
        %v1020 = vadd.f32 0.0, %v1019
        %v1021 = vpop.f32.mrb[0].mxu0
        %v1022 = vpop.f32.mrb[0].mxu0
        %v1023 = vadd.f32 0.0, %v1022
        %v1024 = vpop.f32.mrb[0].mxu0
        %1025 = vmatprep.mubr.bf16.mxu0 %v889
        %1026 = vmatmul.mubr.bf16.gmra.mrb[0].mxu0 %v778
        %v1027 = vpop.f32.mrb[0].mxu0
        %v1028 = vadd.f32 0.0, %v1027
        %v1029 = vpop.f32.mrb[0].mxu0
        %v1030 = vpop.f32.mrb[0].mxu0
        %v1031 = vadd.f32 0.0, %v1030
        %v1032 = vpop.f32.mrb[0].mxu0
        %1033 = vmatprep.mubr.bf16.mxu0 %v892
        %1034 = vmatmul.mubr.bf16.gmra.mrb[0].mxu0 %v780
        %v1035 = vpop.f32.mrb[0].mxu0
        %v1036 = vadd.f32 0.0, %v1035
        %v1037 = vpop.f32.mrb[0].mxu0
        %v1038 = vpop.f32.mrb[0].mxu0
        %v1039 = vadd.f32 0.0, %v1038
        %v1040 = vpop.f32.mrb[0].mxu0
        %1041 = vmatprep.mubr.bf16.mxu0 %v895
        %1042 = vmatmul.mubr.bf16.gmra.mrb[0].mxu0 %v782
        %v1043 = vpop.f32.mrb[0].mxu0
        %v1044 = vadd.f32 0.0, %v1043
        %v1045 = vpop.f32.mrb[0].mxu0
        %v1046 = vpop.f32.mrb[0].mxu0
        %v1047 = vadd.f32 0.0, %v1046
        %v1048 = vpop.f32.mrb[0].mxu0
        %1049 = vmatprep.mubr.bf16.mxu0 %v898
        %1050 = vmatmul.mubr.bf16.gmra.mrb[0].mxu0 %v784
        %v1051 = vpop.f32.mrb[0].mxu0
        %v1052 = vadd.f32 0.0, %v1051
        %v1053 = vpop.f32.mrb[0].mxu0
        %v1054 = vpop.f32.mrb[0].mxu0
        %v1055 = vadd.f32 0.0, %v1054
        %v1056 = vpop.f32.mrb[0].mxu0
        %1057 = vmatprep.mubr.bf16.mxu0 %v901
        %1058 = vmatmul.mubr.bf16.gmra.mrb[0].mxu0 %v786
        %v1059 = vpop.f32.mrb[0].mxu0
        %v1060 = vadd.f32 0.0, %v1059
        %v1061 = vpop.f32.mrb[0].mxu0
        %v1062 = vpop.f32.mrb[0].mxu0
        %v1063 = vadd.f32 0.0, %v1062
        %v1064 = vpop.f32.mrb[0].mxu0
        %1065 = vmatprep.mubr.bf16.mxu0 %v904
        %1066 = vmatmul.mubr.bf16.gmra.mrb[0].mxu0 %v788
        %v1067 = vpop.f32.mrb[0].mxu0
        %v1068 = vadd.f32 0.0, %v1067
        %v1069 = vpop.f32.mrb[0].mxu0
        %v1070 = vpop.f32.mrb[0].mxu0
        %v1071 = vadd.f32 0.0, %v1070
        %v1072 = vpop.f32.mrb[0].mxu0
        %1073 = vdwg.mxu0
        %v1106 = vunpack.c.l.b16 %v224
        %v1107 = vunpack.c.h.b16 %v224
        %v1108 = vunpack.c.l.b16 %v225
        %v1109 = vunpack.c.h.b16 %v225
        %v1110 = vunpack.c.l.b16 %v226
        %v1111 = vunpack.c.h.b16 %v226
        %v1112 = vunpack.c.l.b16 %v227
        %v1113 = vunpack.c.h.b16 %v227
        %v1114 = vunpack.c.l.b16 %v228
        %v1115 = vunpack.c.h.b16 %v228
        %v1116 = vunpack.c.l.b16 %v229
        %v1117 = vunpack.c.h.b16 %v229
        %v1118 = vunpack.c.l.b16 %v230
        %v1119 = vunpack.c.h.b16 %v230
        %v1120 = vunpack.c.l.b16 %v231
        %v1121 = vunpack.c.h.b16 %v231
        %v1122 = vunpack.c.l.b16 %v232
        %v1123 = vunpack.c.h.b16 %v232
        %v1124 = vunpack.c.l.b16 %v233
        %v1125 = vunpack.c.h.b16 %v233
        %v1126 = vunpack.c.l.b16 %v234
        %v1127 = vunpack.c.h.b16 %v234
        %v1128 = vunpack.c.l.b16 %v235
        %v1129 = vunpack.c.h.b16 %v235
        %v1130 = vunpack.c.l.b16 %v236
        %v1131 = vunpack.c.h.b16 %v236
        %v1132 = vunpack.c.l.b16 %v237
        %v1133 = vunpack.c.h.b16 %v237
        %v1134 = vunpack.c.l.b16 %v238
        %v1135 = vunpack.c.h.b16 %v238
        %v1136 = vunpack.c.l.b16 %v239
        %v1137 = vunpack.c.h.b16 %v239
        %v1138 = vunpack.c.l.b16 %v240
        %v1139 = vunpack.c.h.b16 %v240
        %v1140 = vunpack.c.l.b16 %v241
        %v1141 = vunpack.c.h.b16 %v241
        %v1142 = vunpack.c.l.b16 %v242
        %v1143 = vunpack.c.h.b16 %v242
        %v1144 = vunpack.c.l.b16 %v243
        %v1145 = vunpack.c.h.b16 %v243
        %v1146 = vunpack.c.l.b16 %v244
        %v1147 = vunpack.c.h.b16 %v244
        %v1148 = vunpack.c.l.b16 %v245
        %v1149 = vunpack.c.h.b16 %v245
        %v1150 = vunpack.c.l.b16 %v246
        %v1151 = vunpack.c.h.b16 %v246
        %v1152 = vunpack.c.l.b16 %v247
        %v1153 = vunpack.c.h.b16 %v247
        %v1154 = vunpack.c.l.b16 %v248
        %v1155 = vunpack.c.h.b16 %v248
        %v1156 = vunpack.c.l.b16 %v249
        %v1157 = vunpack.c.h.b16 %v249
        %v1158 = vunpack.c.l.b16 %v250
        %v1159 = vunpack.c.h.b16 %v250
        %v1160 = vunpack.c.l.b16 %v251
        %v1161 = vunpack.c.h.b16 %v251
        %v1162 = vunpack.c.l.b16 %v252
        %v1163 = vunpack.c.h.b16 %v252
        %v1164 = vunpack.c.l.b16 %v253
        %v1165 = vunpack.c.h.b16 %v253
        %v1166 = vunpack.c.l.b16 %v254
        %v1167 = vunpack.c.h.b16 %v254
        %v1168 = vunpack.c.l.b16 %v255
        %v1169 = vunpack.c.h.b16 %v255
        %v1170 = vpack.c.b16 %v1108, %v1106
        %v1171 = vpack.c.b16 %v1109, %v1107
        %v1172 = vpack.c.b16 %v1112, %v1110
        %v1173 = vpack.c.b16 %v1113, %v1111
        %v1174 = vpack.c.b16 %v1116, %v1114
        %v1175 = vpack.c.b16 %v1117, %v1115
        %v1176 = vpack.c.b16 %v1120, %v1118
        %v1177 = vpack.c.b16 %v1121, %v1119
        %v1178 = vpack.c.b16 %v1124, %v1122
        %v1179 = vpack.c.b16 %v1125, %v1123
        %v1180 = vpack.c.b16 %v1128, %v1126
        %v1181 = vpack.c.b16 %v1129, %v1127
        %v1182 = vpack.c.b16 %v1132, %v1130
        %v1183 = vpack.c.b16 %v1133, %v1131
        %v1184 = vpack.c.b16 %v1136, %v1134
        %v1185 = vpack.c.b16 %v1137, %v1135
        %v1186 = vpack.c.b16 %v1140, %v1138
        %v1187 = vpack.c.b16 %v1141, %v1139
        %v1188 = vpack.c.b16 %v1144, %v1142
        %v1189 = vpack.c.b16 %v1145, %v1143
        %v1190 = vpack.c.b16 %v1148, %v1146
        %v1191 = vpack.c.b16 %v1149, %v1147
        %v1192 = vpack.c.b16 %v1152, %v1150
        %v1193 = vpack.c.b16 %v1153, %v1151
        %v1194 = vpack.c.b16 %v1156, %v1154
        %v1195 = vpack.c.b16 %v1157, %v1155
        %v1196 = vpack.c.b16 %v1160, %v1158
        %v1197 = vpack.c.b16 %v1161, %v1159
        %v1198 = vpack.c.b16 %v1164, %v1162
        %v1199 = vpack.c.b16 %v1165, %v1163
        %v1200 = vpack.c.b16 %v1168, %v1166
        %v1201 = vpack.c.b16 %v1169, %v1167
        %v1235 = vunpack.c.l.b16 %v256
        %v1236 = vunpack.c.l.b16 %v257
        %v1237 = vunpack.c.l.b16 %v258
        %v1238 = vunpack.c.l.b16 %v259
        %v1239 = vunpack.c.l.b16 %v260
        %v1240 = vunpack.c.l.b16 %v261
        %v1241 = vunpack.c.l.b16 %v262
        %v1242 = vunpack.c.l.b16 %v263
        %v1243 = vunpack.c.l.b16 %v264
        %v1244 = vunpack.c.l.b16 %v265
        %v1245 = vunpack.c.l.b16 %v266
        %v1246 = vunpack.c.l.b16 %v267
        %v1247 = vunpack.c.l.b16 %v268
        %v1248 = vunpack.c.l.b16 %v269
        %v1249 = vunpack.c.l.b16 %v270
        %v1250 = vunpack.c.l.b16 %v271
        %v1251 = vunpack.c.l.b16 %v272
        %v1252 = vpack.c.b16 %v1236, %v1235
        %v1253 = vpack.c.b16 %v1238, %v1237
        %v1254 = vpack.c.b16 %v1240, %v1239
        %v1255 = vpack.c.b16 %v1242, %v1241
        %v1256 = vpack.c.b16 %v1244, %v1243
        %v1257 = vpack.c.b16 %v1246, %v1245
        %v1258 = vpack.c.b16 %v1248, %v1247
        %v1259 = vpack.c.b16 %v1250, %v1249
        %v1260 = vpack.c.b16 %v1251, %v1251
        %v1270 = vsel %vm857, %v1171, 0
        %v1273 = vsel %vm857, %v1173, 0
        %v1276 = vsel %vm857, %v1175, 0
        %v1279 = vsel %vm857, %v1177, 0
        %v1282 = vsel %vm857, %v1179, 0
        %v1285 = vsel %vm857, %v1181, 0
        %v1288 = vsel %vm857, %v1183, 0
        %v1291 = vsel %vm857, %v1185, 0
        %v1294 = vsel %vm857, %v1187, 0
        %v1297 = vsel %vm857, %v1189, 0
        %v1300 = vsel %vm857, %v1191, 0
        %v1303 = vsel %vm857, %v1193, 0
        %v1306 = vsel %vm857, %v1195, 0
        %v1309 = vsel %vm857, %v1197, 0
        %v1312 = vsel %vm857, %v1199, 0
        %v1315 = vsel %vm857, %v1201, 0
        %v1318 = vand.u32 %v1260, %v909
        %1320 = vmatprep.subr.bf16.mxu0 0
        %1321 = vmatpush1.bf16.msra.mxu0 %v1252
        %1322 = vmatprep.subr.bf16.mxu0 0
        %1323 = vmatpush1.bf16.msra.mxu0 %v1253
        %1324 = vmatprep.subr.bf16.mxu0 0
        %1325 = vmatpush1.bf16.msra.mxu0 %v1254
        %1326 = vmatprep.subr.bf16.mxu0 0
        %1327 = vmatpush1.bf16.msra.mxu0 %v1255
        %1328 = vmatprep.subr.bf16.mxu0 0
        %1329 = vmatpush1.bf16.msra.mxu0 %v1256
        %1330 = vmatprep.subr.bf16.mxu0 0
        %1331 = vmatpush1.bf16.msra.mxu0 %v1257
        %1332 = vmatprep.subr.bf16.mxu0 0
        %1333 = vmatpush1.bf16.msra.mxu0 %v1258
        %1334 = vmatprep.subr.bf16.mxu0 0
        %1335 = vmatpush1.bf16.msra.mxu0 %v1259
        %1336 = vmatprep.subr.bf16.mxu0 0
        %1337 = vmatpush1.bf16.msra.mxu0 %v1318
        %1338 = vmatprep.subr.bf16.mxu0 0
        %1339 = vmatpush1.bf16.msra.mxu0 0
        %1340 = vmatprep.subr.bf16.mxu0 0
        %1341 = vmatpush1.bf16.msra.mxu0 0
        %1342 = vmatprep.subr.bf16.mxu0 0
        %1343 = vmatpush1.bf16.msra.mxu0 0
        %1344 = vmatprep.subr.bf16.mxu0 0
        %1345 = vmatpush1.bf16.msra.mxu0 0
        %1346 = vmatprep.subr.bf16.mxu0 0
        %1347 = vmatpush1.bf16.msra.mxu0 0
        %1348 = vmatprep.subr.bf16.mxu0 0
        %1349 = vmatpush1.bf16.msra.mxu0 0
        %1350 = vmatprep.subr.bf16.mxu0 0
        %1351 = vmatpush1.bf16.msra.mxu0 0
        %1352 = vmatprep.mubr.bf16.mxu0 %v1270
        %1353 = vmatmul.mubr.bf16.gmra.mrb[0].mxu0 %v1170
        %v1354 = vpop.f32.mrb[0].mxu0
        %v1355 = vadd.f32 %v948, %v1354
        %v1356 = vpop.f32.mrb[0].mxu0
        %v1357 = vpop.f32.mrb[0].mxu0
        %v1358 = vadd.f32 %v951, %v1357
        %v1359 = vpop.f32.mrb[0].mxu0
        %1360 = vmatprep.mubr.bf16.mxu0 %v1273
        %1361 = vmatmul.mubr.bf16.gmra.mrb[0].mxu0 %v1172
        %v1362 = vpop.f32.mrb[0].mxu0
        %v1363 = vadd.f32 %v956, %v1362
        %v1364 = vpop.f32.mrb[0].mxu0
        %v1365 = vpop.f32.mrb[0].mxu0
        %v1366 = vadd.f32 %v959, %v1365
        %v1367 = vpop.f32.mrb[0].mxu0
        %1368 = vmatprep.mubr.bf16.mxu0 %v1276
        %1369 = vmatmul.mubr.bf16.gmra.mrb[0].mxu0 %v1174
        %v1370 = vpop.f32.mrb[0].mxu0
        %v1371 = vadd.f32 %v964, %v1370
        %v1372 = vpop.f32.mrb[0].mxu0
        %v1373 = vpop.f32.mrb[0].mxu0
        %v1374 = vadd.f32 %v967, %v1373
        %v1375 = vpop.f32.mrb[0].mxu0
        %1376 = vmatprep.mubr.bf16.mxu0 %v1279
        %1377 = vmatmul.mubr.bf16.gmra.mrb[0].mxu0 %v1176
        %v1378 = vpop.f32.mrb[0].mxu0
        %v1379 = vadd.f32 %v972, %v1378
        %v1380 = vpop.f32.mrb[0].mxu0
        %v1381 = vpop.f32.mrb[0].mxu0
        %v1382 = vadd.f32 %v975, %v1381
        %v1383 = vpop.f32.mrb[0].mxu0
        %1384 = vmatprep.mubr.bf16.mxu0 %v1282
        %1385 = vmatmul.mubr.bf16.gmra.mrb[0].mxu0 %v1178
        %v1386 = vpop.f32.mrb[0].mxu0
        %v1387 = vadd.f32 %v980, %v1386
        %v1388 = vpop.f32.mrb[0].mxu0
        %v1389 = vpop.f32.mrb[0].mxu0
        %v1390 = vadd.f32 %v983, %v1389
        %v1391 = vpop.f32.mrb[0].mxu0
        %1392 = vmatprep.mubr.bf16.mxu0 %v1285
        %1393 = vmatmul.mubr.bf16.gmra.mrb[0].mxu0 %v1180
        %v1394 = vpop.f32.mrb[0].mxu0
        %v1395 = vadd.f32 %v988, %v1394
        %v1396 = vpop.f32.mrb[0].mxu0
        %v1397 = vpop.f32.mrb[0].mxu0
        %v1398 = vadd.f32 %v991, %v1397
        %v1399 = vpop.f32.mrb[0].mxu0
        %1400 = vmatprep.mubr.bf16.mxu0 %v1288
        %1401 = vmatmul.mubr.bf16.gmra.mrb[0].mxu0 %v1182
        %v1402 = vpop.f32.mrb[0].mxu0
        %v1403 = vadd.f32 %v996, %v1402
        %v1404 = vpop.f32.mrb[0].mxu0
        %v1405 = vpop.f32.mrb[0].mxu0
        %v1406 = vadd.f32 %v999, %v1405
        %v1407 = vpop.f32.mrb[0].mxu0
        %1408 = vmatprep.mubr.bf16.mxu0 %v1291
        %1409 = vmatmul.mubr.bf16.gmra.mrb[0].mxu0 %v1184
        %v1410 = vpop.f32.mrb[0].mxu0
        %v1411 = vadd.f32 %v1004, %v1410
        %v1412 = vpop.f32.mrb[0].mxu0
        %v1413 = vpop.f32.mrb[0].mxu0
        %v1414 = vadd.f32 %v1007, %v1413
        %v1415 = vpop.f32.mrb[0].mxu0
        %1416 = vmatprep.mubr.bf16.mxu0 %v1294
        %1417 = vmatmul.mubr.bf16.gmra.mrb[0].mxu0 %v1186
        %v1418 = vpop.f32.mrb[0].mxu0
        %v1419 = vadd.f32 %v1012, %v1418
        %v1420 = vpop.f32.mrb[0].mxu0
        %v1421 = vpop.f32.mrb[0].mxu0
        %v1422 = vadd.f32 %v1015, %v1421
        %v1423 = vpop.f32.mrb[0].mxu0
        %1424 = vmatprep.mubr.bf16.mxu0 %v1297
        %1425 = vmatmul.mubr.bf16.gmra.mrb[0].mxu0 %v1188
        %v1426 = vpop.f32.mrb[0].mxu0
        %v1427 = vadd.f32 %v1020, %v1426
        %v1428 = vpop.f32.mrb[0].mxu0
        %v1429 = vpop.f32.mrb[0].mxu0
        %v1430 = vadd.f32 %v1023, %v1429
        %v1431 = vpop.f32.mrb[0].mxu0
        %1432 = vmatprep.mubr.bf16.mxu0 %v1300
        %1433 = vmatmul.mubr.bf16.gmra.mrb[0].mxu0 %v1190
        %v1434 = vpop.f32.mrb[0].mxu0
        %v1435 = vadd.f32 %v1028, %v1434
        %v1436 = vpop.f32.mrb[0].mxu0
        %v1437 = vpop.f32.mrb[0].mxu0
        %v1438 = vadd.f32 %v1031, %v1437
        %v1439 = vpop.f32.mrb[0].mxu0
        %1440 = vmatprep.mubr.bf16.mxu0 %v1303
        %1441 = vmatmul.mubr.bf16.gmra.mrb[0].mxu0 %v1192
        %v1442 = vpop.f32.mrb[0].mxu0
        %v1443 = vadd.f32 %v1036, %v1442
        %v1444 = vpop.f32.mrb[0].mxu0
        %v1445 = vpop.f32.mrb[0].mxu0
        %v1446 = vadd.f32 %v1039, %v1445
        %v1447 = vpop.f32.mrb[0].mxu0
        %1448 = vmatprep.mubr.bf16.mxu0 %v1306
        %1449 = vmatmul.mubr.bf16.gmra.mrb[0].mxu0 %v1194
        %v1450 = vpop.f32.mrb[0].mxu0
        %v1451 = vadd.f32 %v1044, %v1450
        %v1452 = vpop.f32.mrb[0].mxu0
        %v1453 = vpop.f32.mrb[0].mxu0
        %v1454 = vadd.f32 %v1047, %v1453
        %v1455 = vpop.f32.mrb[0].mxu0
        %1456 = vmatprep.mubr.bf16.mxu0 %v1309
        %1457 = vmatmul.mubr.bf16.gmra.mrb[0].mxu0 %v1196
        %v1458 = vpop.f32.mrb[0].mxu0
        %v1459 = vadd.f32 %v1052, %v1458
        %v1460 = vpop.f32.mrb[0].mxu0
        %v1461 = vpop.f32.mrb[0].mxu0
        %v1462 = vadd.f32 %v1055, %v1461
        %v1463 = vpop.f32.mrb[0].mxu0
        %1464 = vmatprep.mubr.bf16.mxu0 %v1312
        %1465 = vmatmul.mubr.bf16.gmra.mrb[0].mxu0 %v1198
        %v1466 = vpop.f32.mrb[0].mxu0
        %v1467 = vadd.f32 %v1060, %v1466
        %v1468 = vpop.f32.mrb[0].mxu0
        %v1469 = vpop.f32.mrb[0].mxu0
        %v1470 = vadd.f32 %v1063, %v1469
        %v1471 = vpop.f32.mrb[0].mxu0
        %1472 = vmatprep.mubr.bf16.mxu0 %v1315
        %1473 = vmatmul.mubr.bf16.gmra.mrb[0].mxu0 %v1200
        %v1474 = vpop.f32.mrb[0].mxu0
        %v1475 = vadd.f32 %v1068, %v1474
        %v1476 = vpop.f32.mrb[0].mxu0
        %v1477 = vpop.f32.mrb[0].mxu0
        %v1478 = vadd.f32 %v1071, %v1477
        %v1479 = vpop.f32.mrb[0].mxu0
        %1480 = vdwg.mxu0
        %v1481 = vld [vmem:[%s222] sm:$0xee]
        %v1482 = vld [vmem:[%s222 + $0x18] sm:$0xee]
        %v1483 = vld [vmem:[%s222 + $0x30] sm:$0xee]
        %v1484 = vld [vmem:[%s222 + $0x48] sm:$0xee]
        %v1485 = vld [vmem:[%s222 + $0x60] sm:$0xee]
        %v1486 = vld [vmem:[%s222 + $0x78] sm:$0xee]
        %v1487 = vld [vmem:[%s222 + $0x90] sm:$0xee]
        %v1488 = vld [vmem:[%s222 + $0xa8] sm:$0xee]
        %v1489 = vld [vmem:[%s222 + $0xc0] sm:$0xee]
        %v1490 = vld [vmem:[%s222 + $0xd8] sm:$0xee]
        %v1491 = vld [vmem:[%s222 + $0xf0] sm:$0xee]
        %v1492 = vld [vmem:[%s222 + $0x108] sm:$0xee]
        %v1493 = vld [vmem:[%s222 + $0x120] sm:$0xee]
        %v1494 = vld [vmem:[%s222 + $0x138] sm:$0xee]
        %v1495 = vld [vmem:[%s222 + $0x150] sm:$0xee]
        %v1496 = vld [vmem:[%s222 + $0x168] sm:$0xee]
        %vm1529 = vcmask 1042432
        %vm1530 = vcmask 1046532
        %vm1531 = vmor %vm1529, %vm1530
        %v1532 = vrot.slane %v1481, 5
        %v1533 = vrot.slane %v1532, 4
        %v1534 = vrot.slane %v225, 5
        %v1535 = vsel %vm1531, %v1533, %v1534
        %v1536 = vrot.slane %v1534, 4
        %v1537 = vrot.slane %v273, 5
        %v1538 = vsel %vm1531, %v1536, %v1537
        %v1539 = vrot.slane %v1482, 5
        %v1540 = vrot.slane %v1539, 4
        %v1541 = vrot.slane %v227, 5
        %v1542 = vsel %vm1531, %v1540, %v1541
        %v1543 = vrot.slane %v1541, 4
        %v1544 = vrot.slane %v274, 5
        %v1545 = vsel %vm1531, %v1543, %v1544
        %v1546 = vrot.slane %v1483, 5
        %v1547 = vrot.slane %v1546, 4
        %v1548 = vrot.slane %v229, 5
        %v1549 = vsel %vm1531, %v1547, %v1548
        %v1550 = vrot.slane %v1548, 4
        %v1551 = vrot.slane %v275, 5
        %v1552 = vsel %vm1531, %v1550, %v1551
        %v1553 = vrot.slane %v1484, 5
        %v1554 = vrot.slane %v1553, 4
        %v1555 = vrot.slane %v231, 5
        %v1556 = vsel %vm1531, %v1554, %v1555
        %v1557 = vrot.slane %v1555, 4
        %v1558 = vrot.slane %v276, 5
        %v1559 = vsel %vm1531, %v1557, %v1558
        %v1560 = vrot.slane %v1485, 5
        %v1561 = vrot.slane %v1560, 4
        %v1562 = vrot.slane %v233, 5
        %v1563 = vsel %vm1531, %v1561, %v1562
        %v1564 = vrot.slane %v1562, 4
        %v1565 = vrot.slane %v277, 5
        %v1566 = vsel %vm1531, %v1564, %v1565
        %v1567 = vrot.slane %v1486, 5
        %v1568 = vrot.slane %v1567, 4
        %v1569 = vrot.slane %v235, 5
        %v1570 = vsel %vm1531, %v1568, %v1569
        %v1571 = vrot.slane %v1569, 4
        %v1572 = vrot.slane %v278, 5
        %v1573 = vsel %vm1531, %v1571, %v1572
        %v1574 = vrot.slane %v1487, 5
        %v1575 = vrot.slane %v1574, 4
        %v1576 = vrot.slane %v237, 5
        %v1577 = vsel %vm1531, %v1575, %v1576
        %v1578 = vrot.slane %v1576, 4
        %v1579 = vrot.slane %v279, 5
        %v1580 = vsel %vm1531, %v1578, %v1579
        %v1581 = vrot.slane %v1488, 5
        %v1582 = vrot.slane %v1581, 4
        %v1583 = vrot.slane %v239, 5
        %v1584 = vsel %vm1531, %v1582, %v1583
        %v1585 = vrot.slane %v1583, 4
        %v1586 = vrot.slane %v280, 5
        %v1587 = vsel %vm1531, %v1585, %v1586
        %v1588 = vrot.slane %v1489, 5
        %v1589 = vrot.slane %v1588, 4
        %v1590 = vrot.slane %v241, 5
        %v1591 = vsel %vm1531, %v1589, %v1590
        %v1592 = vrot.slane %v1590, 4
        %v1593 = vrot.slane %v281, 5
        %v1594 = vsel %vm1531, %v1592, %v1593
        %v1595 = vrot.slane %v1490, 5
        %v1596 = vrot.slane %v1595, 4
        %v1597 = vrot.slane %v243, 5
        %v1598 = vsel %vm1531, %v1596, %v1597
        %v1599 = vrot.slane %v1597, 4
        %v1600 = vrot.slane %v282, 5
        %v1601 = vsel %vm1531, %v1599, %v1600
        %v1602 = vrot.slane %v1491, 5
        %v1603 = vrot.slane %v1602, 4
        %v1604 = vrot.slane %v245, 5
        %v1605 = vsel %vm1531, %v1603, %v1604
        %v1606 = vrot.slane %v1604, 4
        %v1607 = vrot.slane %v283, 5
        %v1608 = vsel %vm1531, %v1606, %v1607
        %v1609 = vrot.slane %v1492, 5
        %v1610 = vrot.slane %v1609, 4
        %v1611 = vrot.slane %v247, 5
        %v1612 = vsel %vm1531, %v1610, %v1611
        %v1613 = vrot.slane %v1611, 4
        %v1614 = vrot.slane %v284, 5
        %v1615 = vsel %vm1531, %v1613, %v1614
        %v1616 = vrot.slane %v1493, 5
        %v1617 = vrot.slane %v1616, 4
        %v1618 = vrot.slane %v249, 5
        %v1619 = vsel %vm1531, %v1617, %v1618
        %v1620 = vrot.slane %v1618, 4
        %v1621 = vrot.slane %v285, 5
        %v1622 = vsel %vm1531, %v1620, %v1621
        %v1623 = vrot.slane %v1494, 5
        %v1624 = vrot.slane %v1623, 4
        %v1625 = vrot.slane %v251, 5
        %v1626 = vsel %vm1531, %v1624, %v1625
        %v1627 = vrot.slane %v1625, 4
        %v1628 = vrot.slane %v286, 5
        %v1629 = vsel %vm1531, %v1627, %v1628
        %v1630 = vrot.slane %v1495, 5
        %v1631 = vrot.slane %v1630, 4
        %v1632 = vrot.slane %v253, 5
        %v1633 = vsel %vm1531, %v1631, %v1632
        %v1634 = vrot.slane %v1632, 4
        %v1635 = vrot.slane %v287, 5
        %v1636 = vsel %vm1531, %v1634, %v1635
        %v1637 = vrot.slane %v1496, 5
        %v1638 = vrot.slane %v1637, 4
        %v1639 = vrot.slane %v255, 5
        %v1640 = vsel %vm1531, %v1638, %v1639
        %v1641 = vrot.slane %v1639, 4
        %v1642 = vrot.slane %v288, 5
        %v1643 = vsel %vm1531, %v1641, %v1642
        %s1644 = scalar_lea.vmem %s1, 136
        %v1645 = vld [vmem:[%s1644] sm:$0xf]
        %v1646 = vld [vmem:[%s1644 + $0x4] sm:$0xf]
        %v1647 = vld [vmem:[%s1644 + $0x8] sm:$0xf]
        %v1648 = vld [vmem:[%s1644 + $0xc] sm:$0xf]
        %v1649 = vld [vmem:[%s1644 + $0x10] sm:$0xf]
        %v1650 = vld [vmem:[%s1644 + $0x14] sm:$0xf]
        %v1651 = vld [vmem:[%s1644 + $0x18] sm:$0xf]
        %v1652 = vld [vmem:[%s1644 + $0x1c] sm:$0xf]
        %v1653 = vld [vmem:[%s1644 + $0x20] sm:$0xf]
        %v1654 = vld [vmem:[%s1644 + $0x24] sm:$0xf]
        %v1655 = vld [vmem:[%s1644 + $0x28] sm:$0xf]
        %v1656 = vld [vmem:[%s1644 + $0x2c] sm:$0xf]
        %v1657 = vld [vmem:[%s1644 + $0x30] sm:$0xf]
        %v1658 = vld [vmem:[%s1644 + $0x34] sm:$0xf]
        %v1659 = vld [vmem:[%s1644 + $0x38] sm:$0xf]
        %v1660 = vld [vmem:[%s1644 + $0x3c] sm:$0xf]
        %v1661 = vld [vmem:[%s1644 + $0x40] sm:$0x3]
        %v1662 = vunpack.c.l.b16 %v1535
        %v1663 = vunpack.c.h.b16 %v1535
        %v1664 = vunpack.c.l.b16 %v1538
        %v1665 = vunpack.c.h.b16 %v1538
        %v1666 = vunpack.c.l.b16 %v1542
        %v1667 = vunpack.c.h.b16 %v1542
        %v1668 = vunpack.c.l.b16 %v1545
        %v1669 = vunpack.c.h.b16 %v1545
        %v1670 = vunpack.c.l.b16 %v1549
        %v1671 = vunpack.c.h.b16 %v1549
        %v1672 = vunpack.c.l.b16 %v1552
        %v1673 = vunpack.c.h.b16 %v1552
        %v1674 = vunpack.c.l.b16 %v1556
        %v1675 = vunpack.c.h.b16 %v1556
        %v1676 = vunpack.c.l.b16 %v1559
        %v1677 = vunpack.c.h.b16 %v1559
        %v1678 = vunpack.c.l.b16 %v1563
        %v1679 = vunpack.c.h.b16 %v1563
        %v1680 = vunpack.c.l.b16 %v1566
        %v1681 = vunpack.c.h.b16 %v1566
        %v1682 = vunpack.c.l.b16 %v1570
        %v1683 = vunpack.c.h.b16 %v1570
        %v1684 = vunpack.c.l.b16 %v1573
        %v1685 = vunpack.c.h.b16 %v1573
        %v1686 = vunpack.c.l.b16 %v1577
        %v1687 = vunpack.c.h.b16 %v1577
        %v1688 = vunpack.c.l.b16 %v1580
        %v1689 = vunpack.c.h.b16 %v1580
        %v1690 = vunpack.c.l.b16 %v1584
        %v1691 = vunpack.c.h.b16 %v1584
        %v1692 = vunpack.c.l.b16 %v1587
        %v1693 = vunpack.c.h.b16 %v1587
        %v1694 = vunpack.c.l.b16 %v1591
        %v1695 = vunpack.c.h.b16 %v1591
        %v1696 = vunpack.c.l.b16 %v1594
        %v1697 = vunpack.c.h.b16 %v1594
        %v1698 = vunpack.c.l.b16 %v1598
        %v1699 = vunpack.c.h.b16 %v1598
        %v1700 = vunpack.c.l.b16 %v1601
        %v1701 = vunpack.c.h.b16 %v1601
        %v1702 = vunpack.c.l.b16 %v1605
        %v1703 = vunpack.c.h.b16 %v1605
        %v1704 = vunpack.c.l.b16 %v1608
        %v1705 = vunpack.c.h.b16 %v1608
        %v1706 = vunpack.c.l.b16 %v1612
        %v1707 = vunpack.c.h.b16 %v1612
        %v1708 = vunpack.c.l.b16 %v1615
        %v1709 = vunpack.c.h.b16 %v1615
        %v1710 = vunpack.c.l.b16 %v1619
        %v1711 = vunpack.c.h.b16 %v1619
        %v1712 = vunpack.c.l.b16 %v1622
        %v1713 = vunpack.c.h.b16 %v1622
        %v1714 = vunpack.c.l.b16 %v1626
        %v1715 = vunpack.c.h.b16 %v1626
        %v1716 = vunpack.c.l.b16 %v1629
        %v1717 = vunpack.c.h.b16 %v1629
        %v1718 = vunpack.c.l.b16 %v1633
        %v1719 = vunpack.c.h.b16 %v1633
        %v1720 = vunpack.c.l.b16 %v1636
        %v1721 = vunpack.c.h.b16 %v1636
        %v1722 = vunpack.c.l.b16 %v1640
        %v1723 = vunpack.c.h.b16 %v1640
        %v1724 = vunpack.c.l.b16 %v1643
        %v1725 = vunpack.c.h.b16 %v1643
        %v1726 = vpack.c.b16 %v1664, %v1662
        %v1727 = vpack.c.b16 %v1665, %v1663
        %v1728 = vpack.c.b16 %v1668, %v1666
        %v1729 = vpack.c.b16 %v1669, %v1667
        %v1730 = vpack.c.b16 %v1672, %v1670
        %v1731 = vpack.c.b16 %v1673, %v1671
        %v1732 = vpack.c.b16 %v1676, %v1674
        %v1733 = vpack.c.b16 %v1677, %v1675
        %v1734 = vpack.c.b16 %v1680, %v1678
        %v1735 = vpack.c.b16 %v1681, %v1679
        %v1736 = vpack.c.b16 %v1684, %v1682
        %v1737 = vpack.c.b16 %v1685, %v1683
        %v1738 = vpack.c.b16 %v1688, %v1686
        %v1739 = vpack.c.b16 %v1689, %v1687
        %v1740 = vpack.c.b16 %v1692, %v1690
        %v1741 = vpack.c.b16 %v1693, %v1691
        %v1742 = vpack.c.b16 %v1696, %v1694
        %v1743 = vpack.c.b16 %v1697, %v1695
        %v1744 = vpack.c.b16 %v1700, %v1698
        %v1745 = vpack.c.b16 %v1701, %v1699
        %v1746 = vpack.c.b16 %v1704, %v1702
        %v1747 = vpack.c.b16 %v1705, %v1703
        %v1748 = vpack.c.b16 %v1708, %v1706
        %v1749 = vpack.c.b16 %v1709, %v1707
        %v1750 = vpack.c.b16 %v1712, %v1710
        %v1751 = vpack.c.b16 %v1713, %v1711
        %v1752 = vpack.c.b16 %v1716, %v1714
        %v1753 = vpack.c.b16 %v1717, %v1715
        %v1754 = vpack.c.b16 %v1720, %v1718
        %v1755 = vpack.c.b16 %v1721, %v1719
        %v1756 = vpack.c.b16 %v1724, %v1722
        %v1757 = vpack.c.b16 %v1725, %v1723
        %v1791 = vunpack.c.l.b16 %v1645
        %v1792 = vunpack.c.l.b16 %v1646
        %v1793 = vunpack.c.l.b16 %v1647
        %v1794 = vunpack.c.l.b16 %v1648
        %v1795 = vunpack.c.l.b16 %v1649
        %v1796 = vunpack.c.l.b16 %v1650
        %v1797 = vunpack.c.l.b16 %v1651
        %v1798 = vunpack.c.l.b16 %v1652
        %v1799 = vunpack.c.l.b16 %v1653
        %v1800 = vunpack.c.l.b16 %v1654
        %v1801 = vunpack.c.l.b16 %v1655
        %v1802 = vunpack.c.l.b16 %v1656
        %v1803 = vunpack.c.l.b16 %v1657
        %v1804 = vunpack.c.l.b16 %v1658
        %v1805 = vunpack.c.l.b16 %v1659
        %v1806 = vunpack.c.l.b16 %v1660
        %v1807 = vunpack.c.l.b16 %v1661
        %v1808 = vpack.c.b16 %v1792, %v1791
        %v1809 = vpack.c.b16 %v1794, %v1793
        %v1810 = vpack.c.b16 %v1796, %v1795
        %v1811 = vpack.c.b16 %v1798, %v1797
        %v1812 = vpack.c.b16 %v1800, %v1799
        %v1813 = vpack.c.b16 %v1802, %v1801
        %v1814 = vpack.c.b16 %v1804, %v1803
        %v1815 = vpack.c.b16 %v1806, %v1805
        %v1816 = vpack.c.b16 %v1807, %v1807
        %v1826 = vsel %vm857, %v1727, 0
        %v1829 = vsel %vm857, %v1729, 0
        %v1832 = vsel %vm857, %v1731, 0
        %v1835 = vsel %vm857, %v1733, 0
        %v1838 = vsel %vm857, %v1735, 0
        %v1841 = vsel %vm857, %v1737, 0
        %v1844 = vsel %vm857, %v1739, 0
        %v1847 = vsel %vm857, %v1741, 0
        %v1850 = vsel %vm857, %v1743, 0
        %v1853 = vsel %vm857, %v1745, 0
        %v1856 = vsel %vm857, %v1747, 0
        %v1859 = vsel %vm857, %v1749, 0
        %v1862 = vsel %vm857, %v1751, 0
        %v1865 = vsel %vm857, %v1753, 0
        %v1868 = vsel %vm857, %v1755, 0
        %v1871 = vsel %vm857, %v1757, 0
        %v1874 = vand.u32 %v1816, %v909
        %1876 = vmatprep.subr.bf16.mxu0 0
        %1877 = vmatpush1.bf16.msra.mxu0 %v1808
        %1878 = vmatprep.subr.bf16.mxu0 0
        %1879 = vmatpush1.bf16.msra.mxu0 %v1809
        %1880 = vmatprep.subr.bf16.mxu0 0
        %1881 = vmatpush1.bf16.msra.mxu0 %v1810
        %1882 = vmatprep.subr.bf16.mxu0 0
        %1883 = vmatpush1.bf16.msra.mxu0 %v1811
        %1884 = vmatprep.subr.bf16.mxu0 0
        %1885 = vmatpush1.bf16.msra.mxu0 %v1812
        %1886 = vmatprep.subr.bf16.mxu0 0
        %1887 = vmatpush1.bf16.msra.mxu0 %v1813
        %1888 = vmatprep.subr.bf16.mxu0 0
        %1889 = vmatpush1.bf16.msra.mxu0 %v1814
        %1890 = vmatprep.subr.bf16.mxu0 0
        %1891 = vmatpush1.bf16.msra.mxu0 %v1815
        %1892 = vmatprep.subr.bf16.mxu0 0
        %1893 = vmatpush1.bf16.msra.mxu0 %v1874
        %1894 = vmatprep.subr.bf16.mxu0 0
        %1895 = vmatpush1.bf16.msra.mxu0 0
        %1896 = vmatprep.subr.bf16.mxu0 0
        %1897 = vmatpush1.bf16.msra.mxu0 0
        %1898 = vmatprep.subr.bf16.mxu0 0
        %1899 = vmatpush1.bf16.msra.mxu0 0
        %1900 = vmatprep.subr.bf16.mxu0 0
        %1901 = vmatpush1.bf16.msra.mxu0 0
        %1902 = vmatprep.subr.bf16.mxu0 0
        %1903 = vmatpush1.bf16.msra.mxu0 0
        %1904 = vmatprep.subr.bf16.mxu0 0
        %1905 = vmatpush1.bf16.msra.mxu0 0
        %1906 = vmatprep.subr.bf16.mxu0 0
        %1907 = vmatpush1.bf16.msra.mxu0 0
        %1908 = vmatprep.mubr.bf16.mxu0 %v1826
        %1909 = vmatmul.mubr.bf16.gmra.mrb[0].mxu0 %v1726
        %v1910 = vpop.f32.mrb[0].mxu0
        %v1911 = vadd.f32 0.0, %v1910
        %v1912 = vpop.f32.mrb[0].mxu0
        %v1913 = vpop.f32.mrb[0].mxu0
        %v1914 = vadd.f32 0.0, %v1913
        %v1915 = vpop.f32.mrb[0].mxu0
        %1916 = vmatprep.mubr.bf16.mxu0 %v1829
        %1917 = vmatmul.mubr.bf16.gmra.mrb[0].mxu0 %v1728
        %v1918 = vpop.f32.mrb[0].mxu0
        %v1919 = vadd.f32 0.0, %v1918
        %v1920 = vpop.f32.mrb[0].mxu0
        %v1921 = vpop.f32.mrb[0].mxu0
        %v1922 = vadd.f32 0.0, %v1921
        %v1923 = vpop.f32.mrb[0].mxu0
        %1924 = vmatprep.mubr.bf16.mxu0 %v1832
        %1925 = vmatmul.mubr.bf16.gmra.mrb[0].mxu0 %v1730
        %v1926 = vpop.f32.mrb[0].mxu0
        %v1927 = vadd.f32 0.0, %v1926
        %v1928 = vpop.f32.mrb[0].mxu0
        %v1929 = vpop.f32.mrb[0].mxu0
        %v1930 = vadd.f32 0.0, %v1929
        %v1931 = vpop.f32.mrb[0].mxu0
        %1932 = vmatprep.mubr.bf16.mxu0 %v1835
        %1933 = vmatmul.mubr.bf16.gmra.mrb[0].mxu0 %v1732
        %v1934 = vpop.f32.mrb[0].mxu0
        %v1935 = vadd.f32 0.0, %v1934
        %v1936 = vpop.f32.mrb[0].mxu0
        %v1937 = vpop.f32.mrb[0].mxu0
        %v1938 = vadd.f32 0.0, %v1937
        %v1939 = vpop.f32.mrb[0].mxu0
        %1940 = vmatprep.mubr.bf16.mxu0 %v1838
        %1941 = vmatmul.mubr.bf16.gmra.mrb[0].mxu0 %v1734
        %v1942 = vpop.f32.mrb[0].mxu0
        %v1943 = vadd.f32 0.0, %v1942
        %v1944 = vpop.f32.mrb[0].mxu0
        %v1945 = vpop.f32.mrb[0].mxu0
        %v1946 = vadd.f32 0.0, %v1945
        %v1947 = vpop.f32.mrb[0].mxu0
        %1948 = vmatprep.mubr.bf16.mxu0 %v1841
        %1949 = vmatmul.mubr.bf16.gmra.mrb[0].mxu0 %v1736
        %v1950 = vpop.f32.mrb[0].mxu0
        %v1951 = vadd.f32 0.0, %v1950
        %v1952 = vpop.f32.mrb[0].mxu0
        %v1953 = vpop.f32.mrb[0].mxu0
        %v1954 = vadd.f32 0.0, %v1953
        %v1955 = vpop.f32.mrb[0].mxu0
        %1956 = vmatprep.mubr.bf16.mxu0 %v1844
        %1957 = vmatmul.mubr.bf16.gmra.mrb[0].mxu0 %v1738
        %v1958 = vpop.f32.mrb[0].mxu0
        %v1959 = vadd.f32 0.0, %v1958
        %v1960 = vpop.f32.mrb[0].mxu0
        %v1961 = vpop.f32.mrb[0].mxu0
        %v1962 = vadd.f32 0.0, %v1961
        %v1963 = vpop.f32.mrb[0].mxu0
        %1964 = vmatprep.mubr.bf16.mxu0 %v1847
        %1965 = vmatmul.mubr.bf16.gmra.mrb[0].mxu0 %v1740
        %v1966 = vpop.f32.mrb[0].mxu0
        %v1967 = vadd.f32 0.0, %v1966
        %v1968 = vpop.f32.mrb[0].mxu0
        %v1969 = vpop.f32.mrb[0].mxu0
        %v1970 = vadd.f32 0.0, %v1969
        %v1971 = vpop.f32.mrb[0].mxu0
        %1972 = vmatprep.mubr.bf16.mxu0 %v1850
        %1973 = vmatmul.mubr.bf16.gmra.mrb[0].mxu0 %v1742
        %v1974 = vpop.f32.mrb[0].mxu0
        %v1975 = vadd.f32 0.0, %v1974
        %v1976 = vpop.f32.mrb[0].mxu0
        %v1977 = vpop.f32.mrb[0].mxu0
        %v1978 = vadd.f32 0.0, %v1977
        %v1979 = vpop.f32.mrb[0].mxu0
        %1980 = vmatprep.mubr.bf16.mxu0 %v1853
        %1981 = vmatmul.mubr.bf16.gmra.mrb[0].mxu0 %v1744
        %v1982 = vpop.f32.mrb[0].mxu0
        %v1983 = vadd.f32 0.0, %v1982
        %v1984 = vpop.f32.mrb[0].mxu0
        %v1985 = vpop.f32.mrb[0].mxu0
        %v1986 = vadd.f32 0.0, %v1985
        %v1987 = vpop.f32.mrb[0].mxu0
        %1988 = vmatprep.mubr.bf16.mxu0 %v1856
        %1989 = vmatmul.mubr.bf16.gmra.mrb[0].mxu0 %v1746
        %v1990 = vpop.f32.mrb[0].mxu0
        %v1991 = vadd.f32 0.0, %v1990
        %v1992 = vpop.f32.mrb[0].mxu0
        %v1993 = vpop.f32.mrb[0].mxu0
        %v1994 = vadd.f32 0.0, %v1993
        %v1995 = vpop.f32.mrb[0].mxu0
        %1996 = vmatprep.mubr.bf16.mxu0 %v1859
        %1997 = vmatmul.mubr.bf16.gmra.mrb[0].mxu0 %v1748
        %v1998 = vpop.f32.mrb[0].mxu0
        %v1999 = vadd.f32 0.0, %v1998
        %v2000 = vpop.f32.mrb[0].mxu0
        %v2001 = vpop.f32.mrb[0].mxu0
        %v2002 = vadd.f32 0.0, %v2001
        %v2003 = vpop.f32.mrb[0].mxu0
        %2004 = vmatprep.mubr.bf16.mxu0 %v1862
        %2005 = vmatmul.mubr.bf16.gmra.mrb[0].mxu0 %v1750
        %v2006 = vpop.f32.mrb[0].mxu0
        %v2007 = vadd.f32 0.0, %v2006
        %v2008 = vpop.f32.mrb[0].mxu0
        %v2009 = vpop.f32.mrb[0].mxu0
        %v2010 = vadd.f32 0.0, %v2009
        %v2011 = vpop.f32.mrb[0].mxu0
        %2012 = vmatprep.mubr.bf16.mxu0 %v1865
        %2013 = vmatmul.mubr.bf16.gmra.mrb[0].mxu0 %v1752
        %v2014 = vpop.f32.mrb[0].mxu0
        %v2015 = vadd.f32 0.0, %v2014
        %v2016 = vpop.f32.mrb[0].mxu0
        %v2017 = vpop.f32.mrb[0].mxu0
        %v2018 = vadd.f32 0.0, %v2017
        %v2019 = vpop.f32.mrb[0].mxu0
        %2020 = vmatprep.mubr.bf16.mxu0 %v1868
        %2021 = vmatmul.mubr.bf16.gmra.mrb[0].mxu0 %v1754
        %v2022 = vpop.f32.mrb[0].mxu0
        %v2023 = vadd.f32 0.0, %v2022
        %v2024 = vpop.f32.mrb[0].mxu0
        %v2025 = vpop.f32.mrb[0].mxu0
        %v2026 = vadd.f32 0.0, %v2025
        %v2027 = vpop.f32.mrb[0].mxu0
        %2028 = vmatprep.mubr.bf16.mxu0 %v1871
        %2029 = vmatmul.mubr.bf16.gmra.mrb[0].mxu0 %v1756
        %v2030 = vpop.f32.mrb[0].mxu0
        %v2031 = vadd.f32 0.0, %v2030
        %v2032 = vpop.f32.mrb[0].mxu0
        %v2033 = vpop.f32.mrb[0].mxu0
        %v2034 = vadd.f32 0.0, %v2033
        %v2035 = vpop.f32.mrb[0].mxu0
        %2036 = vdwg.mxu0
        %v2037 = vadd.f32 %v1355, %v1911
        %v2038 = vadd.f32 %v1358, %v1914
        %v2039 = vadd.f32 %v1363, %v1919
        %v2040 = vadd.f32 %v1366, %v1922
        %v2041 = vadd.f32 %v1371, %v1927
        %v2042 = vadd.f32 %v1374, %v1930
        %v2043 = vadd.f32 %v1379, %v1935
        %v2044 = vadd.f32 %v1382, %v1938
        %v2045 = vadd.f32 %v1387, %v1943
        %v2046 = vadd.f32 %v1390, %v1946
        %v2047 = vadd.f32 %v1395, %v1951
        %v2048 = vadd.f32 %v1398, %v1954
        %v2049 = vadd.f32 %v1403, %v1959
        %v2050 = vadd.f32 %v1406, %v1962
        %v2051 = vadd.f32 %v1411, %v1967
        %v2052 = vadd.f32 %v1414, %v1970
        %v2053 = vadd.f32 %v1419, %v1975
        %v2054 = vadd.f32 %v1422, %v1978
        %v2055 = vadd.f32 %v1427, %v1983
        %v2056 = vadd.f32 %v1430, %v1986
        %v2057 = vadd.f32 %v1435, %v1991
        %v2058 = vadd.f32 %v1438, %v1994
        %v2059 = vadd.f32 %v1443, %v1999
        %v2060 = vadd.f32 %v1446, %v2002
        %v2061 = vadd.f32 %v1451, %v2007
        %v2062 = vadd.f32 %v1454, %v2010
        %v2063 = vadd.f32 %v1459, %v2015
        %v2064 = vadd.f32 %v1462, %v2018
        %v2065 = vadd.f32 %v1467, %v2023
        %v2066 = vadd.f32 %v1470, %v2026
        %v2067 = vadd.f32 %v1475, %v2031
        %v2068 = vadd.f32 %v1478, %v2034
        %s2069 = scalar_lea.vmem %s222, 24
        %v2070 = vld [vmem:[%s2069] sm:$0xff]
        %v2071 = vld [vmem:[%s2069 + $0x8] sm:$0xff]
        %v2072 = vld [vmem:[%s2069 + $0x18] sm:$0xff]
        %v2073 = vld [vmem:[%s2069 + $0x20] sm:$0xff]
        %v2074 = vld [vmem:[%s2069 + $0x30] sm:$0xff]
        %v2075 = vld [vmem:[%s2069 + $0x38] sm:$0xff]
        %v2076 = vld [vmem:[%s2069 + $0x48] sm:$0xff]
        %v2077 = vld [vmem:[%s2069 + $0x50] sm:$0xff]
        %v2078 = vld [vmem:[%s2069 + $0x60] sm:$0xff]
        %v2079 = vld [vmem:[%s2069 + $0x68] sm:$0xff]
        %v2080 = vld [vmem:[%s2069 + $0x78] sm:$0xff]
        %v2081 = vld [vmem:[%s2069 + $0x80] sm:$0xff]
        %v2082 = vld [vmem:[%s2069 + $0x90] sm:$0xff]
        %v2083 = vld [vmem:[%s2069 + $0x98] sm:$0xff]
        %v2084 = vld [vmem:[%s2069 + $0xa8] sm:$0xff]
        %v2085 = vld [vmem:[%s2069 + $0xb0] sm:$0xff]
        %v2086 = vld [vmem:[%s2069 + $0xc0] sm:$0xff]
        %v2087 = vld [vmem:[%s2069 + $0xc8] sm:$0xff]
        %v2088 = vld [vmem:[%s2069 + $0xd8] sm:$0xff]
        %v2089 = vld [vmem:[%s2069 + $0xe0] sm:$0xff]
        %v2090 = vld [vmem:[%s2069 + $0xf0] sm:$0xff]
        %v2091 = vld [vmem:[%s2069 + $0xf8] sm:$0xff]
        %v2092 = vld [vmem:[%s2069 + $0x108] sm:$0xff]
        %v2093 = vld [vmem:[%s2069 + $0x110] sm:$0xff]
        %v2094 = vld [vmem:[%s2069 + $0x120] sm:$0xff]
        %v2095 = vld [vmem:[%s2069 + $0x128] sm:$0xff]
        %v2096 = vld [vmem:[%s2069 + $0x138] sm:$0xff]
        %v2097 = vld [vmem:[%s2069 + $0x140] sm:$0xff]
        %v2098 = vld [vmem:[%s2069 + $0x150] sm:$0xff]
        %v2099 = vld [vmem:[%s2069 + $0x158] sm:$0xff]
        %v2100 = vld [vmem:[%s2069 + $0x168] sm:$0xff]
        %v2101 = vld [vmem:[%s2069 + $0x170] sm:$0xff]
        %s2102 = scalar_lea.vmem %s1, 204
        %v2103 = vld [vmem:[%s2102] sm:$0xf]
        %v2104 = vld [vmem:[%s2102 + $0x4] sm:$0xf]
        %v2105 = vld [vmem:[%s2102 + $0x8] sm:$0xf]
        %v2106 = vld [vmem:[%s2102 + $0xc] sm:$0xf]
        %v2107 = vld [vmem:[%s2102 + $0x10] sm:$0xf]
        %v2108 = vld [vmem:[%s2102 + $0x14] sm:$0xf]
        %v2109 = vld [vmem:[%s2102 + $0x18] sm:$0xf]
        %v2110 = vld [vmem:[%s2102 + $0x1c] sm:$0xf]
        %v2111 = vld [vmem:[%s2102 + $0x20] sm:$0xf]
        %v2112 = vld [vmem:[%s2102 + $0x24] sm:$0xf]
        %v2113 = vld [vmem:[%s2102 + $0x28] sm:$0xf]
        %v2114 = vld [vmem:[%s2102 + $0x2c] sm:$0xf]
        %v2115 = vld [vmem:[%s2102 + $0x30] sm:$0xf]
        %v2116 = vld [vmem:[%s2102 + $0x34] sm:$0xf]
        %v2117 = vld [vmem:[%s2102 + $0x38] sm:$0xf]
        %v2118 = vld [vmem:[%s2102 + $0x3c] sm:$0xf]
        %v2119 = vld [vmem:[%s2102 + $0x40] sm:$0x3]
        %v2152 = vunpack.c.l.b16 %v2070
        %v2153 = vunpack.c.h.b16 %v2070
        %v2154 = vunpack.c.l.b16 %v2071
        %v2155 = vunpack.c.h.b16 %v2071
        %v2156 = vunpack.c.l.b16 %v2072
        %v2157 = vunpack.c.h.b16 %v2072
        %v2158 = vunpack.c.l.b16 %v2073
        %v2159 = vunpack.c.h.b16 %v2073
        %v2160 = vunpack.c.l.b16 %v2074
        %v2161 = vunpack.c.h.b16 %v2074
        %v2162 = vunpack.c.l.b16 %v2075
        %v2163 = vunpack.c.h.b16 %v2075
        %v2164 = vunpack.c.l.b16 %v2076
        %v2165 = vunpack.c.h.b16 %v2076
        %v2166 = vunpack.c.l.b16 %v2077
        %v2167 = vunpack.c.h.b16 %v2077
        %v2168 = vunpack.c.l.b16 %v2078
        %v2169 = vunpack.c.h.b16 %v2078
        %v2170 = vunpack.c.l.b16 %v2079
        %v2171 = vunpack.c.h.b16 %v2079
        %v2172 = vunpack.c.l.b16 %v2080
        %v2173 = vunpack.c.h.b16 %v2080
        %v2174 = vunpack.c.l.b16 %v2081
        %v2175 = vunpack.c.h.b16 %v2081
        %v2176 = vunpack.c.l.b16 %v2082
        %v2177 = vunpack.c.h.b16 %v2082
        %v2178 = vunpack.c.l.b16 %v2083
        %v2179 = vunpack.c.h.b16 %v2083
        %v2180 = vunpack.c.l.b16 %v2084
        %v2181 = vunpack.c.h.b16 %v2084
        %v2182 = vunpack.c.l.b16 %v2085
        %v2183 = vunpack.c.h.b16 %v2085
        %v2184 = vunpack.c.l.b16 %v2086
        %v2185 = vunpack.c.h.b16 %v2086
        %v2186 = vunpack.c.l.b16 %v2087
        %v2187 = vunpack.c.h.b16 %v2087
        %v2188 = vunpack.c.l.b16 %v2088
        %v2189 = vunpack.c.h.b16 %v2088
        %v2190 = vunpack.c.l.b16 %v2089
        %v2191 = vunpack.c.h.b16 %v2089
        %v2192 = vunpack.c.l.b16 %v2090
        %v2193 = vunpack.c.h.b16 %v2090
        %v2194 = vunpack.c.l.b16 %v2091
        %v2195 = vunpack.c.h.b16 %v2091
        %v2196 = vunpack.c.l.b16 %v2092
        %v2197 = vunpack.c.h.b16 %v2092
        %v2198 = vunpack.c.l.b16 %v2093
        %v2199 = vunpack.c.h.b16 %v2093
        %v2200 = vunpack.c.l.b16 %v2094
        %v2201 = vunpack.c.h.b16 %v2094
        %v2202 = vunpack.c.l.b16 %v2095
        %v2203 = vunpack.c.h.b16 %v2095
        %v2204 = vunpack.c.l.b16 %v2096
        %v2205 = vunpack.c.h.b16 %v2096
        %v2206 = vunpack.c.l.b16 %v2097
        %v2207 = vunpack.c.h.b16 %v2097
        %v2208 = vunpack.c.l.b16 %v2098
        %v2209 = vunpack.c.h.b16 %v2098
        %v2210 = vunpack.c.l.b16 %v2099
        %v2211 = vunpack.c.h.b16 %v2099
        %v2212 = vunpack.c.l.b16 %v2100
        %v2213 = vunpack.c.h.b16 %v2100
        %v2214 = vunpack.c.l.b16 %v2101
        %v2215 = vunpack.c.h.b16 %v2101
        %v2216 = vpack.c.b16 %v2154, %v2152
        %v2217 = vpack.c.b16 %v2155, %v2153
        %v2218 = vpack.c.b16 %v2158, %v2156
        %v2219 = vpack.c.b16 %v2159, %v2157
        %v2220 = vpack.c.b16 %v2162, %v2160
        %v2221 = vpack.c.b16 %v2163, %v2161
        %v2222 = vpack.c.b16 %v2166, %v2164
        %v2223 = vpack.c.b16 %v2167, %v2165
        %v2224 = vpack.c.b16 %v2170, %v2168
        %v2225 = vpack.c.b16 %v2171, %v2169
        %v2226 = vpack.c.b16 %v2174, %v2172
        %v2227 = vpack.c.b16 %v2175, %v2173
        %v2228 = vpack.c.b16 %v2178, %v2176
        %v2229 = vpack.c.b16 %v2179, %v2177
        %v2230 = vpack.c.b16 %v2182, %v2180
        %v2231 = vpack.c.b16 %v2183, %v2181
        %v2232 = vpack.c.b16 %v2186, %v2184
        %v2233 = vpack.c.b16 %v2187, %v2185
        %v2234 = vpack.c.b16 %v2190, %v2188
        %v2235 = vpack.c.b16 %v2191, %v2189
        %v2236 = vpack.c.b16 %v2194, %v2192
        %v2237 = vpack.c.b16 %v2195, %v2193
        %v2238 = vpack.c.b16 %v2198, %v2196
        %v2239 = vpack.c.b16 %v2199, %v2197
        %v2240 = vpack.c.b16 %v2202, %v2200
        %v2241 = vpack.c.b16 %v2203, %v2201
        %v2242 = vpack.c.b16 %v2206, %v2204
        %v2243 = vpack.c.b16 %v2207, %v2205
        %v2244 = vpack.c.b16 %v2210, %v2208
        %v2245 = vpack.c.b16 %v2211, %v2209
        %v2246 = vpack.c.b16 %v2214, %v2212
        %v2247 = vpack.c.b16 %v2215, %v2213
        %v2281 = vunpack.c.l.b16 %v2103
        %v2282 = vunpack.c.l.b16 %v2104
        %v2283 = vunpack.c.l.b16 %v2105
        %v2284 = vunpack.c.l.b16 %v2106
        %v2285 = vunpack.c.l.b16 %v2107
        %v2286 = vunpack.c.l.b16 %v2108
        %v2287 = vunpack.c.l.b16 %v2109
        %v2288 = vunpack.c.l.b16 %v2110
        %v2289 = vunpack.c.l.b16 %v2111
        %v2290 = vunpack.c.l.b16 %v2112
        %v2291 = vunpack.c.l.b16 %v2113
        %v2292 = vunpack.c.l.b16 %v2114
        %v2293 = vunpack.c.l.b16 %v2115
        %v2294 = vunpack.c.l.b16 %v2116
        %v2295 = vunpack.c.l.b16 %v2117
        %v2296 = vunpack.c.l.b16 %v2118
        %v2297 = vunpack.c.l.b16 %v2119
        %v2298 = vpack.c.b16 %v2282, %v2281
        %v2299 = vpack.c.b16 %v2284, %v2283
        %v2300 = vpack.c.b16 %v2286, %v2285
        %v2301 = vpack.c.b16 %v2288, %v2287
        %v2302 = vpack.c.b16 %v2290, %v2289
        %v2303 = vpack.c.b16 %v2292, %v2291
        %v2304 = vpack.c.b16 %v2294, %v2293
        %v2305 = vpack.c.b16 %v2296, %v2295
        %v2306 = vpack.c.b16 %v2297, %v2297
        %v2316 = vsel %vm857, %v2217, 0
        %v2319 = vsel %vm857, %v2219, 0
        %v2322 = vsel %vm857, %v2221, 0
        %v2325 = vsel %vm857, %v2223, 0
        %v2328 = vsel %vm857, %v2225, 0
        %v2331 = vsel %vm857, %v2227, 0
        %v2334 = vsel %vm857, %v2229, 0
        %v2337 = vsel %vm857, %v2231, 0
        %v2340 = vsel %vm857, %v2233, 0
        %v2343 = vsel %vm857, %v2235, 0
        %v2346 = vsel %vm857, %v2237, 0
        %v2349 = vsel %vm857, %v2239, 0
        %v2352 = vsel %vm857, %v2241, 0
        %v2355 = vsel %vm857, %v2243, 0
        %v2358 = vsel %vm857, %v2245, 0
        %v2361 = vsel %vm857, %v2247, 0
        %v2364 = vand.u32 %v2306, %v909
        %2366 = vmatprep.subr.bf16.mxu0 0
        %2367 = vmatpush1.bf16.msra.mxu0 %v2298
        %2368 = vmatprep.subr.bf16.mxu0 0
        %2369 = vmatpush1.bf16.msra.mxu0 %v2299
        %2370 = vmatprep.subr.bf16.mxu0 0
        %2371 = vmatpush1.bf16.msra.mxu0 %v2300
        %2372 = vmatprep.subr.bf16.mxu0 0
        %2373 = vmatpush1.bf16.msra.mxu0 %v2301
        %2374 = vmatprep.subr.bf16.mxu0 0
        %2375 = vmatpush1.bf16.msra.mxu0 %v2302
        %2376 = vmatprep.subr.bf16.mxu0 0
        %2377 = vmatpush1.bf16.msra.mxu0 %v2303
        %2378 = vmatprep.subr.bf16.mxu0 0
        %2379 = vmatpush1.bf16.msra.mxu0 %v2304
        %2380 = vmatprep.subr.bf16.mxu0 0
        %2381 = vmatpush1.bf16.msra.mxu0 %v2305
        %2382 = vmatprep.subr.bf16.mxu0 0
        %2383 = vmatpush1.bf16.msra.mxu0 %v2364
        %2384 = vmatprep.subr.bf16.mxu0 0
        %2385 = vmatpush1.bf16.msra.mxu0 0
        %2386 = vmatprep.subr.bf16.mxu0 0
        %2387 = vmatpush1.bf16.msra.mxu0 0
        %2388 = vmatprep.subr.bf16.mxu0 0
        %2389 = vmatpush1.bf16.msra.mxu0 0
        %2390 = vmatprep.subr.bf16.mxu0 0
        %2391 = vmatpush1.bf16.msra.mxu0 0
        %2392 = vmatprep.subr.bf16.mxu0 0
        %2393 = vmatpush1.bf16.msra.mxu0 0
        %2394 = vmatprep.subr.bf16.mxu0 0
        %2395 = vmatpush1.bf16.msra.mxu0 0
        %2396 = vmatprep.subr.bf16.mxu0 0
        %2397 = vmatpush1.bf16.msra.mxu0 0
        %2398 = vmatprep.mubr.bf16.mxu0 %v2316
        %2399 = vmatmul.mubr.bf16.gmra.mrb[0].mxu0 %v2216
        %v2400 = vpop.f32.mrb[0].mxu0
        %v2401 = vadd.f32 0.0, %v2400
        %v2402 = vpop.f32.mrb[0].mxu0
        %v2403 = vpop.f32.mrb[0].mxu0
        %v2404 = vadd.f32 0.0, %v2403
        %v2405 = vpop.f32.mrb[0].mxu0
        %2406 = vmatprep.mubr.bf16.mxu0 %v2319
        %2407 = vmatmul.mubr.bf16.gmra.mrb[0].mxu0 %v2218
        %v2408 = vpop.f32.mrb[0].mxu0
        %v2409 = vadd.f32 0.0, %v2408
        %v2410 = vpop.f32.mrb[0].mxu0
        %v2411 = vpop.f32.mrb[0].mxu0
        %v2412 = vadd.f32 0.0, %v2411
        %v2413 = vpop.f32.mrb[0].mxu0
        %2414 = vmatprep.mubr.bf16.mxu0 %v2322
        %2415 = vmatmul.mubr.bf16.gmra.mrb[0].mxu0 %v2220
        %v2416 = vpop.f32.mrb[0].mxu0
        %v2417 = vadd.f32 0.0, %v2416
        %v2418 = vpop.f32.mrb[0].mxu0
        %v2419 = vpop.f32.mrb[0].mxu0
        %v2420 = vadd.f32 0.0, %v2419
        %v2421 = vpop.f32.mrb[0].mxu0
        %2422 = vmatprep.mubr.bf16.mxu0 %v2325
        %2423 = vmatmul.mubr.bf16.gmra.mrb[0].mxu0 %v2222
        %v2424 = vpop.f32.mrb[0].mxu0
        %v2425 = vadd.f32 0.0, %v2424
        %v2426 = vpop.f32.mrb[0].mxu0
        %v2427 = vpop.f32.mrb[0].mxu0
        %v2428 = vadd.f32 0.0, %v2427
        %v2429 = vpop.f32.mrb[0].mxu0
        %2430 = vmatprep.mubr.bf16.mxu0 %v2328
        %2431 = vmatmul.mubr.bf16.gmra.mrb[0].mxu0 %v2224
        %v2432 = vpop.f32.mrb[0].mxu0
        %v2433 = vadd.f32 0.0, %v2432
        %v2434 = vpop.f32.mrb[0].mxu0
        %v2435 = vpop.f32.mrb[0].mxu0
        %v2436 = vadd.f32 0.0, %v2435
        %v2437 = vpop.f32.mrb[0].mxu0
        %2438 = vmatprep.mubr.bf16.mxu0 %v2331
        %2439 = vmatmul.mubr.bf16.gmra.mrb[0].mxu0 %v2226
        %v2440 = vpop.f32.mrb[0].mxu0
        %v2441 = vadd.f32 0.0, %v2440
        %v2442 = vpop.f32.mrb[0].mxu0
        %v2443 = vpop.f32.mrb[0].mxu0
        %v2444 = vadd.f32 0.0, %v2443
        %v2445 = vpop.f32.mrb[0].mxu0
        %2446 = vmatprep.mubr.bf16.mxu0 %v2334
        %2447 = vmatmul.mubr.bf16.gmra.mrb[0].mxu0 %v2228
        %v2448 = vpop.f32.mrb[0].mxu0
        %v2449 = vadd.f32 0.0, %v2448
        %v2450 = vpop.f32.mrb[0].mxu0
        %v2451 = vpop.f32.mrb[0].mxu0
        %v2452 = vadd.f32 0.0, %v2451
        %v2453 = vpop.f32.mrb[0].mxu0
        %2454 = vmatprep.mubr.bf16.mxu0 %v2337
        %2455 = vmatmul.mubr.bf16.gmra.mrb[0].mxu0 %v2230
        %v2456 = vpop.f32.mrb[0].mxu0
        %v2457 = vadd.f32 0.0, %v2456
        %v2458 = vpop.f32.mrb[0].mxu0
        %v2459 = vpop.f32.mrb[0].mxu0
        %v2460 = vadd.f32 0.0, %v2459
        %v2461 = vpop.f32.mrb[0].mxu0
        %2462 = vmatprep.mubr.bf16.mxu0 %v2340
        %2463 = vmatmul.mubr.bf16.gmra.mrb[0].mxu0 %v2232
        %v2464 = vpop.f32.mrb[0].mxu0
        %v2465 = vadd.f32 0.0, %v2464
        %v2466 = vpop.f32.mrb[0].mxu0
        %v2467 = vpop.f32.mrb[0].mxu0
        %v2468 = vadd.f32 0.0, %v2467
        %v2469 = vpop.f32.mrb[0].mxu0
        %2470 = vmatprep.mubr.bf16.mxu0 %v2343
        %2471 = vmatmul.mubr.bf16.gmra.mrb[0].mxu0 %v2234
        %v2472 = vpop.f32.mrb[0].mxu0
        %v2473 = vadd.f32 0.0, %v2472
        %v2474 = vpop.f32.mrb[0].mxu0
        %v2475 = vpop.f32.mrb[0].mxu0
        %v2476 = vadd.f32 0.0, %v2475
        %v2477 = vpop.f32.mrb[0].mxu0
        %2478 = vmatprep.mubr.bf16.mxu0 %v2346
        %2479 = vmatmul.mubr.bf16.gmra.mrb[0].mxu0 %v2236
        %v2480 = vpop.f32.mrb[0].mxu0
        %v2481 = vadd.f32 0.0, %v2480
        %v2482 = vpop.f32.mrb[0].mxu0
        %v2483 = vpop.f32.mrb[0].mxu0
        %v2484 = vadd.f32 0.0, %v2483
        %v2485 = vpop.f32.mrb[0].mxu0
        %2486 = vmatprep.mubr.bf16.mxu0 %v2349
        %2487 = vmatmul.mubr.bf16.gmra.mrb[0].mxu0 %v2238
        %v2488 = vpop.f32.mrb[0].mxu0
        %v2489 = vadd.f32 0.0, %v2488
        %v2490 = vpop.f32.mrb[0].mxu0
        %v2491 = vpop.f32.mrb[0].mxu0
        %v2492 = vadd.f32 0.0, %v2491
        %v2493 = vpop.f32.mrb[0].mxu0
        %2494 = vmatprep.mubr.bf16.mxu0 %v2352
        %2495 = vmatmul.mubr.bf16.gmra.mrb[0].mxu0 %v2240
        %v2496 = vpop.f32.mrb[0].mxu0
        %v2497 = vadd.f32 0.0, %v2496
        %v2498 = vpop.f32.mrb[0].mxu0
        %v2499 = vpop.f32.mrb[0].mxu0
        %v2500 = vadd.f32 0.0, %v2499
        %v2501 = vpop.f32.mrb[0].mxu0
        %2502 = vmatprep.mubr.bf16.mxu0 %v2355
        %2503 = vmatmul.mubr.bf16.gmra.mrb[0].mxu0 %v2242
        %v2504 = vpop.f32.mrb[0].mxu0
        %v2505 = vadd.f32 0.0, %v2504
        %v2506 = vpop.f32.mrb[0].mxu0
        %v2507 = vpop.f32.mrb[0].mxu0
        %v2508 = vadd.f32 0.0, %v2507
        %v2509 = vpop.f32.mrb[0].mxu0
        %2510 = vmatprep.mubr.bf16.mxu0 %v2358
        %2511 = vmatmul.mubr.bf16.gmra.mrb[0].mxu0 %v2244
        %v2512 = vpop.f32.mrb[0].mxu0
        %v2513 = vadd.f32 0.0, %v2512
        %v2514 = vpop.f32.mrb[0].mxu0
        %v2515 = vpop.f32.mrb[0].mxu0
        %v2516 = vadd.f32 0.0, %v2515
        %v2517 = vpop.f32.mrb[0].mxu0
        %2518 = vmatprep.mubr.bf16.mxu0 %v2361
        %2519 = vmatmul.mubr.bf16.gmra.mrb[0].mxu0 %v2246
        %v2520 = vpop.f32.mrb[0].mxu0
        %v2521 = vadd.f32 0.0, %v2520
        %v2522 = vpop.f32.mrb[0].mxu0
        %v2523 = vpop.f32.mrb[0].mxu0
        %v2524 = vadd.f32 0.0, %v2523
        %v2525 = vpop.f32.mrb[0].mxu0
        %2526 = vdwg.mxu0
        %v2527 = vadd.f32 %v2037, %v2401
        %v2528 = vadd.f32 %v2038, %v2404
        %v2529 = vadd.f32 %v2039, %v2409
        %v2530 = vadd.f32 %v2040, %v2412
        %v2531 = vadd.f32 %v2041, %v2417
        %v2532 = vadd.f32 %v2042, %v2420
        %v2533 = vadd.f32 %v2043, %v2425
        %v2534 = vadd.f32 %v2044, %v2428
        %v2535 = vadd.f32 %v2045, %v2433
        %v2536 = vadd.f32 %v2046, %v2436
        %v2537 = vadd.f32 %v2047, %v2441
        %v2538 = vadd.f32 %v2048, %v2444
        %v2539 = vadd.f32 %v2049, %v2449
        %v2540 = vadd.f32 %v2050, %v2452
        %v2541 = vadd.f32 %v2051, %v2457
        %v2542 = vadd.f32 %v2052, %v2460
        %v2543 = vadd.f32 %v2053, %v2465
        %v2544 = vadd.f32 %v2054, %v2468
        %v2545 = vadd.f32 %v2055, %v2473
        %v2546 = vadd.f32 %v2056, %v2476
        %v2547 = vadd.f32 %v2057, %v2481
        %v2548 = vadd.f32 %v2058, %v2484
        %v2549 = vadd.f32 %v2059, %v2489
        %v2550 = vadd.f32 %v2060, %v2492
        %v2551 = vadd.f32 %v2061, %v2497
        %v2552 = vadd.f32 %v2062, %v2500
        %v2553 = vadd.f32 %v2063, %v2505
        %v2554 = vadd.f32 %v2064, %v2508
        %v2555 = vadd.f32 %v2065, %v2513
        %v2556 = vadd.f32 %v2066, %v2516
        %v2557 = vadd.f32 %v2067, %v2521
        %v2558 = vadd.f32 %v2068, %v2524
        %v2559 = vld [vmem:[%s2069] sm:$0xff]
        %v2560 = vld [vmem:[%s2069 + $0x8] sm:$0xff]
        %v2561 = vld [vmem:[%s2069 + $0x10] sm:$0x11]
        %v2562 = vld [vmem:[%s2069 + $0x18] sm:$0xff]
        %v2563 = vld [vmem:[%s2069 + $0x20] sm:$0xff]
        %v2564 = vld [vmem:[%s2069 + $0x28] sm:$0x11]
        %v2565 = vld [vmem:[%s2069 + $0x30] sm:$0xff]
        %v2566 = vld [vmem:[%s2069 + $0x38] sm:$0xff]
        %v2567 = vld [vmem:[%s2069 + $0x40] sm:$0x11]
        %v2568 = vld [vmem:[%s2069 + $0x48] sm:$0xff]
        %v2569 = vld [vmem:[%s2069 + $0x50] sm:$0xff]
        %v2570 = vld [vmem:[%s2069 + $0x58] sm:$0x11]
        %v2571 = vld [vmem:[%s2069 + $0x60] sm:$0xff]
        %v2572 = vld [vmem:[%s2069 + $0x68] sm:$0xff]
        %v2573 = vld [vmem:[%s2069 + $0x70] sm:$0x11]
        %v2574 = vld [vmem:[%s2069 + $0x78] sm:$0xff]
        %v2575 = vld [vmem:[%s2069 + $0x80] sm:$0xff]
        %v2576 = vld [vmem:[%s2069 + $0x88] sm:$0x11]
        %v2577 = vld [vmem:[%s2069 + $0x90] sm:$0xff]
        %v2578 = vld [vmem:[%s2069 + $0x98] sm:$0xff]
        %v2579 = vld [vmem:[%s2069 + $0xa0] sm:$0x11]
        %v2580 = vld [vmem:[%s2069 + $0xa8] sm:$0xff]
        %v2581 = vld [vmem:[%s2069 + $0xb0] sm:$0xff]
        %v2582 = vld [vmem:[%s2069 + $0xb8] sm:$0x11]
        %v2583 = vld [vmem:[%s2069 + $0xc0] sm:$0xff]
        %v2584 = vld [vmem:[%s2069 + $0xc8] sm:$0xff]
        %v2585 = vld [vmem:[%s2069 + $0xd0] sm:$0x11]
        %v2586 = vld [vmem:[%s2069 + $0xd8] sm:$0xff]
        %v2587 = vld [vmem:[%s2069 + $0xe0] sm:$0xff]
        %v2588 = vld [vmem:[%s2069 + $0xe8] sm:$0x11]
        %v2589 = vld [vmem:[%s2069 + $0xf0] sm:$0xff]
        %v2590 = vld [vmem:[%s2069 + $0xf8] sm:$0xff]
        %v2591 = vld [vmem:[%s2069 + $0x100] sm:$0x11]
        %v2592 = vld [vmem:[%s2069 + $0x108] sm:$0xff]
        %v2593 = vld [vmem:[%s2069 + $0x110] sm:$0xff]
        %v2594 = vld [vmem:[%s2069 + $0x118] sm:$0x11]
        %v2595 = vld [vmem:[%s2069 + $0x120] sm:$0xff]
        %v2596 = vld [vmem:[%s2069 + $0x128] sm:$0xff]
        %v2597 = vld [vmem:[%s2069 + $0x130] sm:$0x11]
        %v2598 = vld [vmem:[%s2069 + $0x138] sm:$0xff]
        %v2599 = vld [vmem:[%s2069 + $0x140] sm:$0xff]
        %v2600 = vld [vmem:[%s2069 + $0x148] sm:$0x11]
        %v2601 = vld [vmem:[%s2069 + $0x150] sm:$0xff]
        %v2602 = vld [vmem:[%s2069 + $0x158] sm:$0xff]
        %v2603 = vld [vmem:[%s2069 + $0x160] sm:$0x11]
        %v2604 = vld [vmem:[%s2069 + $0x168] sm:$0xff]
        %v2605 = vld [vmem:[%s2069 + $0x170] sm:$0xff]
        %v2606 = vld [vmem:[%s2069 + $0x178] sm:$0x11]
        %v2608 = vshrl.u32 %v2559, 16
        %v2610 = vrot.slane %v2608, 4
        %v2611 = vshll.u32 %v2559, 16
        %v2613 = vrot.slane %v2611, 5
        %v2614 = vor.u32 %v2610, %v2613
        %v2615 = vrot.slane %v2614, 4
        %v2617 = vshll.u32 %v2560, 16
        %v2619 = vrot.slane %v2617, 5
        %v2620 = vsel %vm291, %v2615, %v2619
        %v2621 = vshrl.u32 %v2560, 16
        %v2623 = vrot.slane %v2621, 4
        %v2624 = vor.u32 %v2623, %v2619
        %v2625 = vrot.slane %v2624, 4
        %v2627 = vshll.u32 %v2561, 16
        %v2629 = vrot.slane %v2627, 5
        %v2630 = vsel %vm291, %v2625, %v2629
        %v2632 = vshrl.u32 %v2562, 16
        %v2634 = vrot.slane %v2632, 4
        %v2635 = vshll.u32 %v2562, 16
        %v2637 = vrot.slane %v2635, 5
        %v2638 = vor.u32 %v2634, %v2637
        %v2639 = vrot.slane %v2638, 4
        %v2641 = vshll.u32 %v2563, 16
        %v2643 = vrot.slane %v2641, 5
        %v2644 = vsel %vm291, %v2639, %v2643
        %v2645 = vshrl.u32 %v2563, 16
        %v2647 = vrot.slane %v2645, 4
        %v2648 = vor.u32 %v2647, %v2643
        %v2649 = vrot.slane %v2648, 4
        %v2651 = vshll.u32 %v2564, 16
        %v2653 = vrot.slane %v2651, 5
        %v2654 = vsel %vm291, %v2649, %v2653
        %v2656 = vshrl.u32 %v2565, 16
        %v2658 = vrot.slane %v2656, 4
        %v2659 = vshll.u32 %v2565, 16
        %v2661 = vrot.slane %v2659, 5
        %v2662 = vor.u32 %v2658, %v2661
        %v2663 = vrot.slane %v2662, 4
        %v2665 = vshll.u32 %v2566, 16
        %v2667 = vrot.slane %v2665, 5
        %v2668 = vsel %vm291, %v2663, %v2667
        %v2669 = vshrl.u32 %v2566, 16
        %v2671 = vrot.slane %v2669, 4
        %v2672 = vor.u32 %v2671, %v2667
        %v2673 = vrot.slane %v2672, 4
        %v2675 = vshll.u32 %v2567, 16
        %v2677 = vrot.slane %v2675, 5
        %v2678 = vsel %vm291, %v2673, %v2677
        %v2680 = vshrl.u32 %v2568, 16
        %v2682 = vrot.slane %v2680, 4
        %v2683 = vshll.u32 %v2568, 16
        %v2685 = vrot.slane %v2683, 5
        %v2686 = vor.u32 %v2682, %v2685
        %v2687 = vrot.slane %v2686, 4
        %v2689 = vshll.u32 %v2569, 16
        %v2691 = vrot.slane %v2689, 5
        %v2692 = vsel %vm291, %v2687, %v2691
        %v2693 = vshrl.u32 %v2569, 16
        %v2695 = vrot.slane %v2693, 4
        %v2696 = vor.u32 %v2695, %v2691
        %v2697 = vrot.slane %v2696, 4
        %v2699 = vshll.u32 %v2570, 16
        %v2701 = vrot.slane %v2699, 5
        %v2702 = vsel %vm291, %v2697, %v2701
        %v2704 = vshrl.u32 %v2571, 16
        %v2706 = vrot.slane %v2704, 4
        %v2707 = vshll.u32 %v2571, 16
        %v2709 = vrot.slane %v2707, 5
        %v2710 = vor.u32 %v2706, %v2709
        %v2711 = vrot.slane %v2710, 4
        %v2713 = vshll.u32 %v2572, 16
        %v2715 = vrot.slane %v2713, 5
        %v2716 = vsel %vm291, %v2711, %v2715
        %v2717 = vshrl.u32 %v2572, 16
        %v2719 = vrot.slane %v2717, 4
        %v2720 = vor.u32 %v2719, %v2715
        %v2721 = vrot.slane %v2720, 4
        %v2723 = vshll.u32 %v2573, 16
        %v2725 = vrot.slane %v2723, 5
        %v2726 = vsel %vm291, %v2721, %v2725
        %v2728 = vshrl.u32 %v2574, 16
        %v2730 = vrot.slane %v2728, 4
        %v2731 = vshll.u32 %v2574, 16
        %v2733 = vrot.slane %v2731, 5
        %v2734 = vor.u32 %v2730, %v2733
        %v2735 = vrot.slane %v2734, 4
        %v2737 = vshll.u32 %v2575, 16
        %v2739 = vrot.slane %v2737, 5
        %v2740 = vsel %vm291, %v2735, %v2739
        %v2741 = vshrl.u32 %v2575, 16
        %v2743 = vrot.slane %v2741, 4
        %v2744 = vor.u32 %v2743, %v2739
        %v2745 = vrot.slane %v2744, 4
        %v2747 = vshll.u32 %v2576, 16
        %v2749 = vrot.slane %v2747, 5
        %v2750 = vsel %vm291, %v2745, %v2749
        %v2752 = vshrl.u32 %v2577, 16
        %v2754 = vrot.slane %v2752, 4
        %v2755 = vshll.u32 %v2577, 16
        %v2757 = vrot.slane %v2755, 5
        %v2758 = vor.u32 %v2754, %v2757
        %v2759 = vrot.slane %v2758, 4
        %v2761 = vshll.u32 %v2578, 16
        %v2763 = vrot.slane %v2761, 5
        %v2764 = vsel %vm291, %v2759, %v2763
        %v2765 = vshrl.u32 %v2578, 16
        %v2767 = vrot.slane %v2765, 4
        %v2768 = vor.u32 %v2767, %v2763
        %v2769 = vrot.slane %v2768, 4
        %v2771 = vshll.u32 %v2579, 16
        %v2773 = vrot.slane %v2771, 5
        %v2774 = vsel %vm291, %v2769, %v2773
        %v2776 = vshrl.u32 %v2580, 16
        %v2778 = vrot.slane %v2776, 4
        %v2779 = vshll.u32 %v2580, 16
        %v2781 = vrot.slane %v2779, 5
        %v2782 = vor.u32 %v2778, %v2781
        %v2783 = vrot.slane %v2782, 4
        %v2785 = vshll.u32 %v2581, 16
        %v2787 = vrot.slane %v2785, 5
        %v2788 = vsel %vm291, %v2783, %v2787
        %v2789 = vshrl.u32 %v2581, 16
        %v2791 = vrot.slane %v2789, 4
        %v2792 = vor.u32 %v2791, %v2787
        %v2793 = vrot.slane %v2792, 4
        %v2795 = vshll.u32 %v2582, 16
        %v2797 = vrot.slane %v2795, 5
        %v2798 = vsel %vm291, %v2793, %v2797
        %v2800 = vshrl.u32 %v2583, 16
        %v2802 = vrot.slane %v2800, 4
        %v2803 = vshll.u32 %v2583, 16
        %v2805 = vrot.slane %v2803, 5
        %v2806 = vor.u32 %v2802, %v2805
        %v2807 = vrot.slane %v2806, 4
        %v2809 = vshll.u32 %v2584, 16
        %v2811 = vrot.slane %v2809, 5
        %v2812 = vsel %vm291, %v2807, %v2811
        %v2813 = vshrl.u32 %v2584, 16
        %v2815 = vrot.slane %v2813, 4
        %v2816 = vor.u32 %v2815, %v2811
        %v2817 = vrot.slane %v2816, 4
        %v2819 = vshll.u32 %v2585, 16
        %v2821 = vrot.slane %v2819, 5
        %v2822 = vsel %vm291, %v2817, %v2821
        %v2824 = vshrl.u32 %v2586, 16
        %v2826 = vrot.slane %v2824, 4
        %v2827 = vshll.u32 %v2586, 16
        %v2829 = vrot.slane %v2827, 5
        %v2830 = vor.u32 %v2826, %v2829
        %v2831 = vrot.slane %v2830, 4
        %v2833 = vshll.u32 %v2587, 16
        %v2835 = vrot.slane %v2833, 5
        %v2836 = vsel %vm291, %v2831, %v2835
        %v2837 = vshrl.u32 %v2587, 16
        %v2839 = vrot.slane %v2837, 4
        %v2840 = vor.u32 %v2839, %v2835
        %v2841 = vrot.slane %v2840, 4
        %v2843 = vshll.u32 %v2588, 16
        %v2845 = vrot.slane %v2843, 5
        %v2846 = vsel %vm291, %v2841, %v2845
        %v2848 = vshrl.u32 %v2589, 16
        %v2850 = vrot.slane %v2848, 4
        %v2851 = vshll.u32 %v2589, 16
        %v2853 = vrot.slane %v2851, 5
        %v2854 = vor.u32 %v2850, %v2853
        %v2855 = vrot.slane %v2854, 4
        %v2857 = vshll.u32 %v2590, 16
        %v2859 = vrot.slane %v2857, 5
        %v2860 = vsel %vm291, %v2855, %v2859
        %v2861 = vshrl.u32 %v2590, 16
        %v2863 = vrot.slane %v2861, 4
        %v2864 = vor.u32 %v2863, %v2859
        %v2865 = vrot.slane %v2864, 4
        %v2867 = vshll.u32 %v2591, 16
        %v2869 = vrot.slane %v2867, 5
        %v2870 = vsel %vm291, %v2865, %v2869
        %v2872 = vshrl.u32 %v2592, 16
        %v2874 = vrot.slane %v2872, 4
        %v2875 = vshll.u32 %v2592, 16
        %v2877 = vrot.slane %v2875, 5
        %v2878 = vor.u32 %v2874, %v2877
        %v2879 = vrot.slane %v2878, 4
        %v2881 = vshll.u32 %v2593, 16
        %v2883 = vrot.slane %v2881, 5
        %v2884 = vsel %vm291, %v2879, %v2883
        %v2885 = vshrl.u32 %v2593, 16
        %v2887 = vrot.slane %v2885, 4
        %v2888 = vor.u32 %v2887, %v2883
        %v2889 = vrot.slane %v2888, 4
        %v2891 = vshll.u32 %v2594, 16
        %v2893 = vrot.slane %v2891, 5
        %v2894 = vsel %vm291, %v2889, %v2893
        %v2896 = vshrl.u32 %v2595, 16
        %v2898 = vrot.slane %v2896, 4
        %v2899 = vshll.u32 %v2595, 16
        %v2901 = vrot.slane %v2899, 5
        %v2902 = vor.u32 %v2898, %v2901
        %v2903 = vrot.slane %v2902, 4
        %v2905 = vshll.u32 %v2596, 16
        %v2907 = vrot.slane %v2905, 5
        %v2908 = vsel %vm291, %v2903, %v2907
        %v2909 = vshrl.u32 %v2596, 16
        %v2911 = vrot.slane %v2909, 4
        %v2912 = vor.u32 %v2911, %v2907
        %v2913 = vrot.slane %v2912, 4
        %v2915 = vshll.u32 %v2597, 16
        %v2917 = vrot.slane %v2915, 5
        %v2918 = vsel %vm291, %v2913, %v2917
        %v2920 = vshrl.u32 %v2598, 16
        %v2922 = vrot.slane %v2920, 4
        %v2923 = vshll.u32 %v2598, 16
        %v2925 = vrot.slane %v2923, 5
        %v2926 = vor.u32 %v2922, %v2925
        %v2927 = vrot.slane %v2926, 4
        %v2929 = vshll.u32 %v2599, 16
        %v2931 = vrot.slane %v2929, 5
        %v2932 = vsel %vm291, %v2927, %v2931
        %v2933 = vshrl.u32 %v2599, 16
        %v2935 = vrot.slane %v2933, 4
        %v2936 = vor.u32 %v2935, %v2931
        %v2937 = vrot.slane %v2936, 4
        %v2939 = vshll.u32 %v2600, 16
        %v2941 = vrot.slane %v2939, 5
        %v2942 = vsel %vm291, %v2937, %v2941
        %v2944 = vshrl.u32 %v2601, 16
        %v2946 = vrot.slane %v2944, 4
        %v2947 = vshll.u32 %v2601, 16
        %v2949 = vrot.slane %v2947, 5
        %v2950 = vor.u32 %v2946, %v2949
        %v2951 = vrot.slane %v2950, 4
        %v2953 = vshll.u32 %v2602, 16
        %v2955 = vrot.slane %v2953, 5
        %v2956 = vsel %vm291, %v2951, %v2955
        %v2957 = vshrl.u32 %v2602, 16
        %v2959 = vrot.slane %v2957, 4
        %v2960 = vor.u32 %v2959, %v2955
        %v2961 = vrot.slane %v2960, 4
        %v2963 = vshll.u32 %v2603, 16
        %v2965 = vrot.slane %v2963, 5
        %v2966 = vsel %vm291, %v2961, %v2965
        %v2968 = vshrl.u32 %v2604, 16
        %v2970 = vrot.slane %v2968, 4
        %v2971 = vshll.u32 %v2604, 16
        %v2973 = vrot.slane %v2971, 5
        %v2974 = vor.u32 %v2970, %v2973
        %v2975 = vrot.slane %v2974, 4
        %v2977 = vshll.u32 %v2605, 16
        %v2979 = vrot.slane %v2977, 5
        %v2980 = vsel %vm291, %v2975, %v2979
        %v2981 = vshrl.u32 %v2605, 16
        %v2983 = vrot.slane %v2981, 4
        %v2984 = vor.u32 %v2983, %v2979
        %v2985 = vrot.slane %v2984, 4
        %v2987 = vshll.u32 %v2606, 16
        %v2989 = vrot.slane %v2987, 5
        %v2990 = vsel %vm291, %v2985, %v2989
        %s2991 = scalar_lea.vmem %s1, 272
        %v2992 = vld [vmem:[%s2991] sm:$0xf]
        %v2993 = vld [vmem:[%s2991 + $0x4] sm:$0xf]
        %v2994 = vld [vmem:[%s2991 + $0x8] sm:$0xf]
        %v2995 = vld [vmem:[%s2991 + $0xc] sm:$0xf]
        %v2996 = vld [vmem:[%s2991 + $0x10] sm:$0xf]
        %v2997 = vld [vmem:[%s2991 + $0x14] sm:$0xf]
        %v2998 = vld [vmem:[%s2991 + $0x18] sm:$0xf]
        %v2999 = vld [vmem:[%s2991 + $0x1c] sm:$0xf]
        %v3000 = vld [vmem:[%s2991 + $0x20] sm:$0xf]
        %v3001 = vld [vmem:[%s2991 + $0x24] sm:$0xf]
        %v3002 = vld [vmem:[%s2991 + $0x28] sm:$0xf]
        %v3003 = vld [vmem:[%s2991 + $0x2c] sm:$0xf]
        %v3004 = vld [vmem:[%s2991 + $0x30] sm:$0xf]
        %v3005 = vld [vmem:[%s2991 + $0x34] sm:$0xf]
        %v3006 = vld [vmem:[%s2991 + $0x38] sm:$0xf]
        %v3007 = vld [vmem:[%s2991 + $0x3c] sm:$0xf]
        %v3008 = vld [vmem:[%s2991 + $0x40] sm:$0x3]
        %v3009 = vunpack.c.l.b16 %v2620
        %v3010 = vunpack.c.h.b16 %v2620
        %v3011 = vunpack.c.l.b16 %v2630
        %v3012 = vunpack.c.h.b16 %v2630
        %v3013 = vunpack.c.l.b16 %v2644
        %v3014 = vunpack.c.h.b16 %v2644
        %v3015 = vunpack.c.l.b16 %v2654
        %v3016 = vunpack.c.h.b16 %v2654
        %v3017 = vunpack.c.l.b16 %v2668
        %v3018 = vunpack.c.h.b16 %v2668
        %v3019 = vunpack.c.l.b16 %v2678
        %v3020 = vunpack.c.h.b16 %v2678
        %v3021 = vunpack.c.l.b16 %v2692
        %v3022 = vunpack.c.h.b16 %v2692
        %v3023 = vunpack.c.l.b16 %v2702
        %v3024 = vunpack.c.h.b16 %v2702
        %v3025 = vunpack.c.l.b16 %v2716
        %v3026 = vunpack.c.h.b16 %v2716
        %v3027 = vunpack.c.l.b16 %v2726
        %v3028 = vunpack.c.h.b16 %v2726
        %v3029 = vunpack.c.l.b16 %v2740
        %v3030 = vunpack.c.h.b16 %v2740
        %v3031 = vunpack.c.l.b16 %v2750
        %v3032 = vunpack.c.h.b16 %v2750
        %v3033 = vunpack.c.l.b16 %v2764
        %v3034 = vunpack.c.h.b16 %v2764
        %v3035 = vunpack.c.l.b16 %v2774
        %v3036 = vunpack.c.h.b16 %v2774
        %v3037 = vunpack.c.l.b16 %v2788
        %v3038 = vunpack.c.h.b16 %v2788
        %v3039 = vunpack.c.l.b16 %v2798
        %v3040 = vunpack.c.h.b16 %v2798
        %v3041 = vunpack.c.l.b16 %v2812
        %v3042 = vunpack.c.h.b16 %v2812
        %v3043 = vunpack.c.l.b16 %v2822
        %v3044 = vunpack.c.h.b16 %v2822
        %v3045 = vunpack.c.l.b16 %v2836
        %v3046 = vunpack.c.h.b16 %v2836
        %v3047 = vunpack.c.l.b16 %v2846
        %v3048 = vunpack.c.h.b16 %v2846
        %v3049 = vunpack.c.l.b16 %v2860
        %v3050 = vunpack.c.h.b16 %v2860
        %v3051 = vunpack.c.l.b16 %v2870
        %v3052 = vunpack.c.h.b16 %v2870
        %v3053 = vunpack.c.l.b16 %v2884
        %v3054 = vunpack.c.h.b16 %v2884
        %v3055 = vunpack.c.l.b16 %v2894
        %v3056 = vunpack.c.h.b16 %v2894
        %v3057 = vunpack.c.l.b16 %v2908
        %v3058 = vunpack.c.h.b16 %v2908
        %v3059 = vunpack.c.l.b16 %v2918
        %v3060 = vunpack.c.h.b16 %v2918
        %v3061 = vunpack.c.l.b16 %v2932
        %v3062 = vunpack.c.h.b16 %v2932
        %v3063 = vunpack.c.l.b16 %v2942
        %v3064 = vunpack.c.h.b16 %v2942
        %v3065 = vunpack.c.l.b16 %v2956
        %v3066 = vunpack.c.h.b16 %v2956
        %v3067 = vunpack.c.l.b16 %v2966
        %v3068 = vunpack.c.h.b16 %v2966
        %v3069 = vunpack.c.l.b16 %v2980
        %v3070 = vunpack.c.h.b16 %v2980
        %v3071 = vunpack.c.l.b16 %v2990
        %v3072 = vunpack.c.h.b16 %v2990
        %v3073 = vpack.c.b16 %v3011, %v3009
        %v3074 = vpack.c.b16 %v3012, %v3010
        %v3075 = vpack.c.b16 %v3015, %v3013
        %v3076 = vpack.c.b16 %v3016, %v3014
        %v3077 = vpack.c.b16 %v3019, %v3017
        %v3078 = vpack.c.b16 %v3020, %v3018
        %v3079 = vpack.c.b16 %v3023, %v3021
        %v3080 = vpack.c.b16 %v3024, %v3022
        %v3081 = vpack.c.b16 %v3027, %v3025
        %v3082 = vpack.c.b16 %v3028, %v3026
        %v3083 = vpack.c.b16 %v3031, %v3029
        %v3084 = vpack.c.b16 %v3032, %v3030
        %v3085 = vpack.c.b16 %v3035, %v3033
        %v3086 = vpack.c.b16 %v3036, %v3034
        %v3087 = vpack.c.b16 %v3039, %v3037
        %v3088 = vpack.c.b16 %v3040, %v3038
        %v3089 = vpack.c.b16 %v3043, %v3041
        %v3090 = vpack.c.b16 %v3044, %v3042
        %v3091 = vpack.c.b16 %v3047, %v3045
        %v3092 = vpack.c.b16 %v3048, %v3046
        %v3093 = vpack.c.b16 %v3051, %v3049
        %v3094 = vpack.c.b16 %v3052, %v3050
        %v3095 = vpack.c.b16 %v3055, %v3053
        %v3096 = vpack.c.b16 %v3056, %v3054
        %v3097 = vpack.c.b16 %v3059, %v3057
        %v3098 = vpack.c.b16 %v3060, %v3058
        %v3099 = vpack.c.b16 %v3063, %v3061
        %v3100 = vpack.c.b16 %v3064, %v3062
        %v3101 = vpack.c.b16 %v3067, %v3065
        %v3102 = vpack.c.b16 %v3068, %v3066
        %v3103 = vpack.c.b16 %v3071, %v3069
        %v3104 = vpack.c.b16 %v3072, %v3070
        %v3138 = vunpack.c.l.b16 %v2992
        %v3139 = vunpack.c.l.b16 %v2993
        %v3140 = vunpack.c.l.b16 %v2994
        %v3141 = vunpack.c.l.b16 %v2995
        %v3142 = vunpack.c.l.b16 %v2996
        %v3143 = vunpack.c.l.b16 %v2997
        %v3144 = vunpack.c.l.b16 %v2998
        %v3145 = vunpack.c.l.b16 %v2999
        %v3146 = vunpack.c.l.b16 %v3000
        %v3147 = vunpack.c.l.b16 %v3001
        %v3148 = vunpack.c.l.b16 %v3002
        %v3149 = vunpack.c.l.b16 %v3003
        %v3150 = vunpack.c.l.b16 %v3004
        %v3151 = vunpack.c.l.b16 %v3005
        %v3152 = vunpack.c.l.b16 %v3006
        %v3153 = vunpack.c.l.b16 %v3007
        %v3154 = vunpack.c.l.b16 %v3008
        %v3155 = vpack.c.b16 %v3139, %v3138
        %v3156 = vpack.c.b16 %v3141, %v3140
        %v3157 = vpack.c.b16 %v3143, %v3142
        %v3158 = vpack.c.b16 %v3145, %v3144
        %v3159 = vpack.c.b16 %v3147, %v3146
        %v3160 = vpack.c.b16 %v3149, %v3148
        %v3161 = vpack.c.b16 %v3151, %v3150
        %v3162 = vpack.c.b16 %v3153, %v3152
        %v3163 = vpack.c.b16 %v3154, %v3154
        %v3173 = vsel %vm857, %v3074, 0
        %v3176 = vsel %vm857, %v3076, 0
        %v3179 = vsel %vm857, %v3078, 0
        %v3182 = vsel %vm857, %v3080, 0
        %v3185 = vsel %vm857, %v3082, 0
        %v3188 = vsel %vm857, %v3084, 0
        %v3191 = vsel %vm857, %v3086, 0
        %v3194 = vsel %vm857, %v3088, 0
        %v3197 = vsel %vm857, %v3090, 0
        %v3200 = vsel %vm857, %v3092, 0
        %v3203 = vsel %vm857, %v3094, 0
        %v3206 = vsel %vm857, %v3096, 0
        %v3209 = vsel %vm857, %v3098, 0
        %v3212 = vsel %vm857, %v3100, 0
        %v3215 = vsel %vm857, %v3102, 0
        %v3218 = vsel %vm857, %v3104, 0
        %v3221 = vand.u32 %v3163, %v909
        %3223 = vmatprep.subr.bf16.mxu0 0
        %3224 = vmatpush1.bf16.msra.mxu0 %v3155
        %3225 = vmatprep.subr.bf16.mxu0 0
        %3226 = vmatpush1.bf16.msra.mxu0 %v3156
        %3227 = vmatprep.subr.bf16.mxu0 0
        %3228 = vmatpush1.bf16.msra.mxu0 %v3157
        %3229 = vmatprep.subr.bf16.mxu0 0
        %3230 = vmatpush1.bf16.msra.mxu0 %v3158
        %3231 = vmatprep.subr.bf16.mxu0 0
        %3232 = vmatpush1.bf16.msra.mxu0 %v3159
        %3233 = vmatprep.subr.bf16.mxu0 0
        %3234 = vmatpush1.bf16.msra.mxu0 %v3160
        %3235 = vmatprep.subr.bf16.mxu0 0
        %3236 = vmatpush1.bf16.msra.mxu0 %v3161
        %3237 = vmatprep.subr.bf16.mxu0 0
        %3238 = vmatpush1.bf16.msra.mxu0 %v3162
        %3239 = vmatprep.subr.bf16.mxu0 0
        %3240 = vmatpush1.bf16.msra.mxu0 %v3221
        %3241 = vmatprep.subr.bf16.mxu0 0
        %3242 = vmatpush1.bf16.msra.mxu0 0
        %3243 = vmatprep.subr.bf16.mxu0 0
        %3244 = vmatpush1.bf16.msra.mxu0 0
        %3245 = vmatprep.subr.bf16.mxu0 0
        %3246 = vmatpush1.bf16.msra.mxu0 0
        %3247 = vmatprep.subr.bf16.mxu0 0
        %3248 = vmatpush1.bf16.msra.mxu0 0
        %3249 = vmatprep.subr.bf16.mxu0 0
        %3250 = vmatpush1.bf16.msra.mxu0 0
        %3251 = vmatprep.subr.bf16.mxu0 0
        %3252 = vmatpush1.bf16.msra.mxu0 0
        %3253 = vmatprep.subr.bf16.mxu0 0
        %3254 = vmatpush1.bf16.msra.mxu0 0
        %3255 = vmatprep.mubr.bf16.mxu0 %v3173
        %3256 = vmatmul.mubr.bf16.gmra.mrb[0].mxu0 %v3073
        %v3257 = vpop.f32.mrb[0].mxu0
        %v3258 = vadd.f32 0.0, %v3257
        %v3259 = vpop.f32.mrb[0].mxu0
        %v3260 = vpop.f32.mrb[0].mxu0
        %v3261 = vadd.f32 0.0, %v3260
        %v3262 = vpop.f32.mrb[0].mxu0
        %3263 = vmatprep.mubr.bf16.mxu0 %v3176
        %3264 = vmatmul.mubr.bf16.gmra.mrb[0].mxu0 %v3075
        %v3265 = vpop.f32.mrb[0].mxu0
        %v3266 = vadd.f32 0.0, %v3265
        %v3267 = vpop.f32.mrb[0].mxu0
        %v3268 = vpop.f32.mrb[0].mxu0
        %v3269 = vadd.f32 0.0, %v3268
        %v3270 = vpop.f32.mrb[0].mxu0
        %3271 = vmatprep.mubr.bf16.mxu0 %v3179
        %3272 = vmatmul.mubr.bf16.gmra.mrb[0].mxu0 %v3077
        %v3273 = vpop.f32.mrb[0].mxu0
        %v3274 = vadd.f32 0.0, %v3273
        %v3275 = vpop.f32.mrb[0].mxu0
        %v3276 = vpop.f32.mrb[0].mxu0
        %v3277 = vadd.f32 0.0, %v3276
        %v3278 = vpop.f32.mrb[0].mxu0
        %3279 = vmatprep.mubr.bf16.mxu0 %v3182
        %3280 = vmatmul.mubr.bf16.gmra.mrb[0].mxu0 %v3079
        %v3281 = vpop.f32.mrb[0].mxu0
        %v3282 = vadd.f32 0.0, %v3281
        %v3283 = vpop.f32.mrb[0].mxu0
        %v3284 = vpop.f32.mrb[0].mxu0
        %v3285 = vadd.f32 0.0, %v3284
        %v3286 = vpop.f32.mrb[0].mxu0
        %3287 = vmatprep.mubr.bf16.mxu0 %v3185
        %3288 = vmatmul.mubr.bf16.gmra.mrb[0].mxu0 %v3081
        %v3289 = vpop.f32.mrb[0].mxu0
        %v3290 = vadd.f32 0.0, %v3289
        %v3291 = vpop.f32.mrb[0].mxu0
        %v3292 = vpop.f32.mrb[0].mxu0
        %v3293 = vadd.f32 0.0, %v3292
        %v3294 = vpop.f32.mrb[0].mxu0
        %3295 = vmatprep.mubr.bf16.mxu0 %v3188
        %3296 = vmatmul.mubr.bf16.gmra.mrb[0].mxu0 %v3083
        %v3297 = vpop.f32.mrb[0].mxu0
        %v3298 = vadd.f32 0.0, %v3297
        %v3299 = vpop.f32.mrb[0].mxu0
        %v3300 = vpop.f32.mrb[0].mxu0
        %v3301 = vadd.f32 0.0, %v3300
        %v3302 = vpop.f32.mrb[0].mxu0
        %3303 = vmatprep.mubr.bf16.mxu0 %v3191
        %3304 = vmatmul.mubr.bf16.gmra.mrb[0].mxu0 %v3085
        %v3305 = vpop.f32.mrb[0].mxu0
        %v3306 = vadd.f32 0.0, %v3305
        %v3307 = vpop.f32.mrb[0].mxu0
        %v3308 = vpop.f32.mrb[0].mxu0
        %v3309 = vadd.f32 0.0, %v3308
        %v3310 = vpop.f32.mrb[0].mxu0
        %3311 = vmatprep.mubr.bf16.mxu0 %v3194
        %3312 = vmatmul.mubr.bf16.gmra.mrb[0].mxu0 %v3087
        %v3313 = vpop.f32.mrb[0].mxu0
        %v3314 = vadd.f32 0.0, %v3313
        %v3315 = vpop.f32.mrb[0].mxu0
        %v3316 = vpop.f32.mrb[0].mxu0
        %v3317 = vadd.f32 0.0, %v3316
        %v3318 = vpop.f32.mrb[0].mxu0
        %3319 = vmatprep.mubr.bf16.mxu0 %v3197
        %3320 = vmatmul.mubr.bf16.gmra.mrb[0].mxu0 %v3089
        %v3321 = vpop.f32.mrb[0].mxu0
        %v3322 = vadd.f32 0.0, %v3321
        %v3323 = vpop.f32.mrb[0].mxu0
        %v3324 = vpop.f32.mrb[0].mxu0
        %v3325 = vadd.f32 0.0, %v3324
        %v3326 = vpop.f32.mrb[0].mxu0
        %3327 = vmatprep.mubr.bf16.mxu0 %v3200
        %3328 = vmatmul.mubr.bf16.gmra.mrb[0].mxu0 %v3091
        %v3329 = vpop.f32.mrb[0].mxu0
        %v3330 = vadd.f32 0.0, %v3329
        %v3331 = vpop.f32.mrb[0].mxu0
        %v3332 = vpop.f32.mrb[0].mxu0
        %v3333 = vadd.f32 0.0, %v3332
        %v3334 = vpop.f32.mrb[0].mxu0
        %3335 = vmatprep.mubr.bf16.mxu0 %v3203
        %3336 = vmatmul.mubr.bf16.gmra.mrb[0].mxu0 %v3093
        %v3337 = vpop.f32.mrb[0].mxu0
        %v3338 = vadd.f32 0.0, %v3337
        %v3339 = vpop.f32.mrb[0].mxu0
        %v3340 = vpop.f32.mrb[0].mxu0
        %v3341 = vadd.f32 0.0, %v3340
        %v3342 = vpop.f32.mrb[0].mxu0
        %3343 = vmatprep.mubr.bf16.mxu0 %v3206
        %3344 = vmatmul.mubr.bf16.gmra.mrb[0].mxu0 %v3095
        %v3345 = vpop.f32.mrb[0].mxu0
        %v3346 = vadd.f32 0.0, %v3345
        %v3347 = vpop.f32.mrb[0].mxu0
        %v3348 = vpop.f32.mrb[0].mxu0
        %v3349 = vadd.f32 0.0, %v3348
        %v3350 = vpop.f32.mrb[0].mxu0
        %3351 = vmatprep.mubr.bf16.mxu0 %v3209
        %3352 = vmatmul.mubr.bf16.gmra.mrb[0].mxu0 %v3097
        %v3353 = vpop.f32.mrb[0].mxu0
        %v3354 = vadd.f32 0.0, %v3353
        %v3355 = vpop.f32.mrb[0].mxu0
        %v3356 = vpop.f32.mrb[0].mxu0
        %v3357 = vadd.f32 0.0, %v3356
        %v3358 = vpop.f32.mrb[0].mxu0
        %3359 = vmatprep.mubr.bf16.mxu0 %v3212
        %3360 = vmatmul.mubr.bf16.gmra.mrb[0].mxu0 %v3099
        %v3361 = vpop.f32.mrb[0].mxu0
        %v3362 = vadd.f32 0.0, %v3361
        %v3363 = vpop.f32.mrb[0].mxu0
        %v3364 = vpop.f32.mrb[0].mxu0
        %v3365 = vadd.f32 0.0, %v3364
        %v3366 = vpop.f32.mrb[0].mxu0
        %3367 = vmatprep.mubr.bf16.mxu0 %v3215
        %3368 = vmatmul.mubr.bf16.gmra.mrb[0].mxu0 %v3101
        %v3369 = vpop.f32.mrb[0].mxu0
        %v3370 = vadd.f32 0.0, %v3369
        %v3371 = vpop.f32.mrb[0].mxu0
        %v3372 = vpop.f32.mrb[0].mxu0
        %v3373 = vadd.f32 0.0, %v3372
        %v3374 = vpop.f32.mrb[0].mxu0
        %3375 = vmatprep.mubr.bf16.mxu0 %v3218
        %3376 = vmatmul.mubr.bf16.gmra.mrb[0].mxu0 %v3103
        %v3377 = vpop.f32.mrb[0].mxu0
        %v3378 = vadd.f32 0.0, %v3377
        %v3379 = vpop.f32.mrb[0].mxu0
        %v3380 = vpop.f32.mrb[0].mxu0
        %v3381 = vadd.f32 0.0, %v3380
        %v3382 = vpop.f32.mrb[0].mxu0
        %3383 = vdwg.mxu0
        %v3384 = vadd.f32 %v2527, %v3258
        %v3385 = vadd.f32 %v2528, %v3261
        %v3386 = vadd.f32 %v2529, %v3266
        %v3387 = vadd.f32 %v2530, %v3269
        %v3388 = vadd.f32 %v2531, %v3274
        %v3389 = vadd.f32 %v2532, %v3277
        %v3390 = vadd.f32 %v2533, %v3282
        %v3391 = vadd.f32 %v2534, %v3285
        %v3392 = vadd.f32 %v2535, %v3290
        %v3393 = vadd.f32 %v2536, %v3293
        %v3394 = vadd.f32 %v2537, %v3298
        %v3395 = vadd.f32 %v2538, %v3301
        %v3396 = vadd.f32 %v2539, %v3306
        %v3397 = vadd.f32 %v2540, %v3309
        %v3398 = vadd.f32 %v2541, %v3314
        %v3399 = vadd.f32 %v2542, %v3317
        %v3400 = vadd.f32 %v2543, %v3322
        %v3401 = vadd.f32 %v2544, %v3325
        %v3402 = vadd.f32 %v2545, %v3330
        %v3403 = vadd.f32 %v2546, %v3333
        %v3404 = vadd.f32 %v2547, %v3338
        %v3405 = vadd.f32 %v2548, %v3341
        %v3406 = vadd.f32 %v2549, %v3346
        %v3407 = vadd.f32 %v2550, %v3349
        %v3408 = vadd.f32 %v2551, %v3354
        %v3409 = vadd.f32 %v2552, %v3357
        %v3410 = vadd.f32 %v2553, %v3362
        %v3411 = vadd.f32 %v2554, %v3365
        %v3412 = vadd.f32 %v2555, %v3370
        %v3413 = vadd.f32 %v2556, %v3373
        %v3414 = vadd.f32 %v2557, %v3378
        %v3415 = vadd.f32 %v2558, %v3381
        %v3416 = vld [vmem:[%s2069] sm:$0xee]
        %v3417 = vld [vmem:[%s2069 + $0x18] sm:$0xee]
        %v3418 = vld [vmem:[%s2069 + $0x30] sm:$0xee]
        %v3419 = vld [vmem:[%s2069 + $0x48] sm:$0xee]
        %v3420 = vld [vmem:[%s2069 + $0x60] sm:$0xee]
        %v3421 = vld [vmem:[%s2069 + $0x78] sm:$0xee]
        %v3422 = vld [vmem:[%s2069 + $0x90] sm:$0xee]
        %v3423 = vld [vmem:[%s2069 + $0xa8] sm:$0xee]
        %v3424 = vld [vmem:[%s2069 + $0xc0] sm:$0xee]
        %v3425 = vld [vmem:[%s2069 + $0xd8] sm:$0xee]
        %v3426 = vld [vmem:[%s2069 + $0xf0] sm:$0xee]
        %v3427 = vld [vmem:[%s2069 + $0x108] sm:$0xee]
        %v3428 = vld [vmem:[%s2069 + $0x120] sm:$0xee]
        %v3429 = vld [vmem:[%s2069 + $0x138] sm:$0xee]
        %v3430 = vld [vmem:[%s2069 + $0x150] sm:$0xee]
        %v3431 = vld [vmem:[%s2069 + $0x168] sm:$0xee]
        %v3480 = vrot.slane %v3416, 5
        %v3481 = vrot.slane %v3480, 4
        %v3482 = vrot.slane %v2560, 5
        %v3483 = vsel %vm1531, %v3481, %v3482
        %v3484 = vrot.slane %v3482, 4
        %v3485 = vrot.slane %v2561, 5
        %v3486 = vsel %vm1531, %v3484, %v3485
        %v3487 = vrot.slane %v3417, 5
        %v3488 = vrot.slane %v3487, 4
        %v3489 = vrot.slane %v2563, 5
        %v3490 = vsel %vm1531, %v3488, %v3489
        %v3491 = vrot.slane %v3489, 4
        %v3492 = vrot.slane %v2564, 5
        %v3493 = vsel %vm1531, %v3491, %v3492
        %v3494 = vrot.slane %v3418, 5
        %v3495 = vrot.slane %v3494, 4
        %v3496 = vrot.slane %v2566, 5
        %v3497 = vsel %vm1531, %v3495, %v3496
        %v3498 = vrot.slane %v3496, 4
        %v3499 = vrot.slane %v2567, 5
        %v3500 = vsel %vm1531, %v3498, %v3499
        %v3501 = vrot.slane %v3419, 5
        %v3502 = vrot.slane %v3501, 4
        %v3503 = vrot.slane %v2569, 5
        %v3504 = vsel %vm1531, %v3502, %v3503
        %v3505 = vrot.slane %v3503, 4
        %v3506 = vrot.slane %v2570, 5
        %v3507 = vsel %vm1531, %v3505, %v3506
        %v3508 = vrot.slane %v3420, 5
        %v3509 = vrot.slane %v3508, 4
        %v3510 = vrot.slane %v2572, 5
        %v3511 = vsel %vm1531, %v3509, %v3510
        %v3512 = vrot.slane %v3510, 4
        %v3513 = vrot.slane %v2573, 5
        %v3514 = vsel %vm1531, %v3512, %v3513
        %v3515 = vrot.slane %v3421, 5
        %v3516 = vrot.slane %v3515, 4
        %v3517 = vrot.slane %v2575, 5
        %v3518 = vsel %vm1531, %v3516, %v3517
        %v3519 = vrot.slane %v3517, 4
        %v3520 = vrot.slane %v2576, 5
        %v3521 = vsel %vm1531, %v3519, %v3520
        %v3522 = vrot.slane %v3422, 5
        %v3523 = vrot.slane %v3522, 4
        %v3524 = vrot.slane %v2578, 5
        %v3525 = vsel %vm1531, %v3523, %v3524
        %v3526 = vrot.slane %v3524, 4
        %v3527 = vrot.slane %v2579, 5
        %v3528 = vsel %vm1531, %v3526, %v3527
        %v3529 = vrot.slane %v3423, 5
        %v3530 = vrot.slane %v3529, 4
        %v3531 = vrot.slane %v2581, 5
        %v3532 = vsel %vm1531, %v3530, %v3531
        %v3533 = vrot.slane %v3531, 4
        %v3534 = vrot.slane %v2582, 5
        %v3535 = vsel %vm1531, %v3533, %v3534
        %v3536 = vrot.slane %v3424, 5
        %v3537 = vrot.slane %v3536, 4
        %v3538 = vrot.slane %v2584, 5
        %v3539 = vsel %vm1531, %v3537, %v3538
        %v3540 = vrot.slane %v3538, 4
        %v3541 = vrot.slane %v2585, 5
        %v3542 = vsel %vm1531, %v3540, %v3541
        %v3543 = vrot.slane %v3425, 5
        %v3544 = vrot.slane %v3543, 4
        %v3545 = vrot.slane %v2587, 5
        %v3546 = vsel %vm1531, %v3544, %v3545
        %v3547 = vrot.slane %v3545, 4
        %v3548 = vrot.slane %v2588, 5
        %v3549 = vsel %vm1531, %v3547, %v3548
        %v3550 = vrot.slane %v3426, 5
        %v3551 = vrot.slane %v3550, 4
        %v3552 = vrot.slane %v2590, 5
        %v3553 = vsel %vm1531, %v3551, %v3552
        %v3554 = vrot.slane %v3552, 4
        %v3555 = vrot.slane %v2591, 5
        %v3556 = vsel %vm1531, %v3554, %v3555
        %v3557 = vrot.slane %v3427, 5
        %v3558 = vrot.slane %v3557, 4
        %v3559 = vrot.slane %v2593, 5
        %v3560 = vsel %vm1531, %v3558, %v3559
        %v3561 = vrot.slane %v3559, 4
        %v3562 = vrot.slane %v2594, 5
        %v3563 = vsel %vm1531, %v3561, %v3562
        %v3564 = vrot.slane %v3428, 5
        %v3565 = vrot.slane %v3564, 4
        %v3566 = vrot.slane %v2596, 5
        %v3567 = vsel %vm1531, %v3565, %v3566
        %v3568 = vrot.slane %v3566, 4
        %v3569 = vrot.slane %v2597, 5
        %v3570 = vsel %vm1531, %v3568, %v3569
        %v3571 = vrot.slane %v3429, 5
        %v3572 = vrot.slane %v3571, 4
        %v3573 = vrot.slane %v2599, 5
        %v3574 = vsel %vm1531, %v3572, %v3573
        %v3575 = vrot.slane %v3573, 4
        %v3576 = vrot.slane %v2600, 5
        %v3577 = vsel %vm1531, %v3575, %v3576
        %v3578 = vrot.slane %v3430, 5
        %v3579 = vrot.slane %v3578, 4
        %v3580 = vrot.slane %v2602, 5
        %v3581 = vsel %vm1531, %v3579, %v3580
        %v3582 = vrot.slane %v3580, 4
        %v3583 = vrot.slane %v2603, 5
        %v3584 = vsel %vm1531, %v3582, %v3583
        %v3585 = vrot.slane %v3431, 5
        %v3586 = vrot.slane %v3585, 4
        %v3587 = vrot.slane %v2605, 5
        %v3588 = vsel %vm1531, %v3586, %v3587
        %v3589 = vrot.slane %v3587, 4
        %v3590 = vrot.slane %v2606, 5
        %v3591 = vsel %vm1531, %v3589, %v3590
        %s3592 = scalar_lea.vmem %s1, 340
        %v3593 = vld [vmem:[%s3592] sm:$0xf]
        %v3594 = vld [vmem:[%s3592 + $0x4] sm:$0xf]
        %v3595 = vld [vmem:[%s3592 + $0x8] sm:$0xf]
        %v3596 = vld [vmem:[%s3592 + $0xc] sm:$0xf]
        %v3597 = vld [vmem:[%s3592 + $0x10] sm:$0xf]
        %v3598 = vld [vmem:[%s3592 + $0x14] sm:$0xf]
        %v3599 = vld [vmem:[%s3592 + $0x18] sm:$0xf]
        %v3600 = vld [vmem:[%s3592 + $0x1c] sm:$0xf]
        %v3601 = vld [vmem:[%s3592 + $0x20] sm:$0xf]
        %v3602 = vld [vmem:[%s3592 + $0x24] sm:$0xf]
        %v3603 = vld [vmem:[%s3592 + $0x28] sm:$0xf]
        %v3604 = vld [vmem:[%s3592 + $0x2c] sm:$0xf]
        %v3605 = vld [vmem:[%s3592 + $0x30] sm:$0xf]
        %v3606 = vld [vmem:[%s3592 + $0x34] sm:$0xf]
        %v3607 = vld [vmem:[%s3592 + $0x38] sm:$0xf]
        %v3608 = vld [vmem:[%s3592 + $0x3c] sm:$0xf]
        %v3609 = vld [vmem:[%s3592 + $0x40] sm:$0x3]
        %v3610 = vunpack.c.l.b16 %v3483
        %v3611 = vunpack.c.h.b16 %v3483
        %v3612 = vunpack.c.l.b16 %v3486
        %v3613 = vunpack.c.h.b16 %v3486
        %v3614 = vunpack.c.l.b16 %v3490
        %v3615 = vunpack.c.h.b16 %v3490
        %v3616 = vunpack.c.l.b16 %v3493
        %v3617 = vunpack.c.h.b16 %v3493
        %v3618 = vunpack.c.l.b16 %v3497
        %v3619 = vunpack.c.h.b16 %v3497
        %v3620 = vunpack.c.l.b16 %v3500
        %v3621 = vunpack.c.h.b16 %v3500
        %v3622 = vunpack.c.l.b16 %v3504
        %v3623 = vunpack.c.h.b16 %v3504
        %v3624 = vunpack.c.l.b16 %v3507
        %v3625 = vunpack.c.h.b16 %v3507
        %v3626 = vunpack.c.l.b16 %v3511
        %v3627 = vunpack.c.h.b16 %v3511
        %v3628 = vunpack.c.l.b16 %v3514
        %v3629 = vunpack.c.h.b16 %v3514
        %v3630 = vunpack.c.l.b16 %v3518
        %v3631 = vunpack.c.h.b16 %v3518
        %v3632 = vunpack.c.l.b16 %v3521
        %v3633 = vunpack.c.h.b16 %v3521
        %v3634 = vunpack.c.l.b16 %v3525
        %v3635 = vunpack.c.h.b16 %v3525
        %v3636 = vunpack.c.l.b16 %v3528
        %v3637 = vunpack.c.h.b16 %v3528
        %v3638 = vunpack.c.l.b16 %v3532
        %v3639 = vunpack.c.h.b16 %v3532
        %v3640 = vunpack.c.l.b16 %v3535
        %v3641 = vunpack.c.h.b16 %v3535
        %v3642 = vunpack.c.l.b16 %v3539
        %v3643 = vunpack.c.h.b16 %v3539
        %v3644 = vunpack.c.l.b16 %v3542
        %v3645 = vunpack.c.h.b16 %v3542
        %v3646 = vunpack.c.l.b16 %v3546
        %v3647 = vunpack.c.h.b16 %v3546
        %v3648 = vunpack.c.l.b16 %v3549
        %v3649 = vunpack.c.h.b16 %v3549
        %v3650 = vunpack.c.l.b16 %v3553
        %v3651 = vunpack.c.h.b16 %v3553
        %v3652 = vunpack.c.l.b16 %v3556
        %v3653 = vunpack.c.h.b16 %v3556
        %v3654 = vunpack.c.l.b16 %v3560
        %v3655 = vunpack.c.h.b16 %v3560
        %v3656 = vunpack.c.l.b16 %v3563
        %v3657 = vunpack.c.h.b16 %v3563
        %v3658 = vunpack.c.l.b16 %v3567
        %v3659 = vunpack.c.h.b16 %v3567
        %v3660 = vunpack.c.l.b16 %v3570
        %v3661 = vunpack.c.h.b16 %v3570
        %v3662 = vunpack.c.l.b16 %v3574
        %v3663 = vunpack.c.h.b16 %v3574
        %v3664 = vunpack.c.l.b16 %v3577
        %v3665 = vunpack.c.h.b16 %v3577
        %v3666 = vunpack.c.l.b16 %v3581
        %v3667 = vunpack.c.h.b16 %v3581
        %v3668 = vunpack.c.l.b16 %v3584
        %v3669 = vunpack.c.h.b16 %v3584
        %v3670 = vunpack.c.l.b16 %v3588
        %v3671 = vunpack.c.h.b16 %v3588
        %v3672 = vunpack.c.l.b16 %v3591
        %v3673 = vunpack.c.h.b16 %v3591
        %v3674 = vpack.c.b16 %v3612, %v3610
        %v3675 = vpack.c.b16 %v3613, %v3611
        %v3676 = vpack.c.b16 %v3616, %v3614
        %v3677 = vpack.c.b16 %v3617, %v3615
        %v3678 = vpack.c.b16 %v3620, %v3618
        %v3679 = vpack.c.b16 %v3621, %v3619
        %v3680 = vpack.c.b16 %v3624, %v3622
        %v3681 = vpack.c.b16 %v3625, %v3623
        %v3682 = vpack.c.b16 %v3628, %v3626
        %v3683 = vpack.c.b16 %v3629, %v3627
        %v3684 = vpack.c.b16 %v3632, %v3630
        %v3685 = vpack.c.b16 %v3633, %v3631
        %v3686 = vpack.c.b16 %v3636, %v3634
        %v3687 = vpack.c.b16 %v3637, %v3635
        %v3688 = vpack.c.b16 %v3640, %v3638
        %v3689 = vpack.c.b16 %v3641, %v3639
        %v3690 = vpack.c.b16 %v3644, %v3642
        %v3691 = vpack.c.b16 %v3645, %v3643
        %v3692 = vpack.c.b16 %v3648, %v3646
        %v3693 = vpack.c.b16 %v3649, %v3647
        %v3694 = vpack.c.b16 %v3652, %v3650
        %v3695 = vpack.c.b16 %v3653, %v3651
        %v3696 = vpack.c.b16 %v3656, %v3654
        %v3697 = vpack.c.b16 %v3657, %v3655
        %v3698 = vpack.c.b16 %v3660, %v3658
        %v3699 = vpack.c.b16 %v3661, %v3659
        %v3700 = vpack.c.b16 %v3664, %v3662
        %v3701 = vpack.c.b16 %v3665, %v3663
        %v3702 = vpack.c.b16 %v3668, %v3666
        %v3703 = vpack.c.b16 %v3669, %v3667
        %v3704 = vpack.c.b16 %v3672, %v3670
        %v3705 = vpack.c.b16 %v3673, %v3671
        %v3739 = vunpack.c.l.b16 %v3593
        %v3740 = vunpack.c.l.b16 %v3594
        %v3741 = vunpack.c.l.b16 %v3595
        %v3742 = vunpack.c.l.b16 %v3596
        %v3743 = vunpack.c.l.b16 %v3597
        %v3744 = vunpack.c.l.b16 %v3598
        %v3745 = vunpack.c.l.b16 %v3599
        %v3746 = vunpack.c.l.b16 %v3600
        %v3747 = vunpack.c.l.b16 %v3601
        %v3748 = vunpack.c.l.b16 %v3602
        %v3749 = vunpack.c.l.b16 %v3603
        %v3750 = vunpack.c.l.b16 %v3604
        %v3751 = vunpack.c.l.b16 %v3605
        %v3752 = vunpack.c.l.b16 %v3606
        %v3753 = vunpack.c.l.b16 %v3607
        %v3754 = vunpack.c.l.b16 %v3608
        %v3755 = vunpack.c.l.b16 %v3609
        %v3756 = vpack.c.b16 %v3740, %v3739
        %v3757 = vpack.c.b16 %v3742, %v3741
        %v3758 = vpack.c.b16 %v3744, %v3743
        %v3759 = vpack.c.b16 %v3746, %v3745
        %v3760 = vpack.c.b16 %v3748, %v3747
        %v3761 = vpack.c.b16 %v3750, %v3749
        %v3762 = vpack.c.b16 %v3752, %v3751
        %v3763 = vpack.c.b16 %v3754, %v3753
        %v3764 = vpack.c.b16 %v3755, %v3755
        %v3774 = vsel %vm857, %v3675, 0
        %v3777 = vsel %vm857, %v3677, 0
        %v3780 = vsel %vm857, %v3679, 0
        %v3783 = vsel %vm857, %v3681, 0
        %v3786 = vsel %vm857, %v3683, 0
        %v3789 = vsel %vm857, %v3685, 0
        %v3792 = vsel %vm857, %v3687, 0
        %v3795 = vsel %vm857, %v3689, 0
        %v3798 = vsel %vm857, %v3691, 0
        %v3801 = vsel %vm857, %v3693, 0
        %v3804 = vsel %vm857, %v3695, 0
        %v3807 = vsel %vm857, %v3697, 0
        %v3810 = vsel %vm857, %v3699, 0
        %v3813 = vsel %vm857, %v3701, 0
        %v3816 = vsel %vm857, %v3703, 0
        %v3819 = vsel %vm857, %v3705, 0
        %v3822 = vand.u32 %v3764, %v909
        %3824 = vmatprep.subr.bf16.mxu0 0
        %3825 = vmatpush1.bf16.msra.mxu0 %v3756
        %3826 = vmatprep.subr.bf16.mxu0 0
        %3827 = vmatpush1.bf16.msra.mxu0 %v3757
        %3828 = vmatprep.subr.bf16.mxu0 0
        %3829 = vmatpush1.bf16.msra.mxu0 %v3758
        %3830 = vmatprep.subr.bf16.mxu0 0
        %3831 = vmatpush1.bf16.msra.mxu0 %v3759
        %3832 = vmatprep.subr.bf16.mxu0 0
        %3833 = vmatpush1.bf16.msra.mxu0 %v3760
        %3834 = vmatprep.subr.bf16.mxu0 0
        %3835 = vmatpush1.bf16.msra.mxu0 %v3761
        %3836 = vmatprep.subr.bf16.mxu0 0
        %3837 = vmatpush1.bf16.msra.mxu0 %v3762
        %3838 = vmatprep.subr.bf16.mxu0 0
        %3839 = vmatpush1.bf16.msra.mxu0 %v3763
        %3840 = vmatprep.subr.bf16.mxu0 0
        %3841 = vmatpush1.bf16.msra.mxu0 %v3822
        %3842 = vmatprep.subr.bf16.mxu0 0
        %3843 = vmatpush1.bf16.msra.mxu0 0
        %3844 = vmatprep.subr.bf16.mxu0 0
        %3845 = vmatpush1.bf16.msra.mxu0 0
        %3846 = vmatprep.subr.bf16.mxu0 0
        %3847 = vmatpush1.bf16.msra.mxu0 0
        %3848 = vmatprep.subr.bf16.mxu0 0
        %3849 = vmatpush1.bf16.msra.mxu0 0
        %3850 = vmatprep.subr.bf16.mxu0 0
        %3851 = vmatpush1.bf16.msra.mxu0 0
        %3852 = vmatprep.subr.bf16.mxu0 0
        %3853 = vmatpush1.bf16.msra.mxu0 0
        %3854 = vmatprep.subr.bf16.mxu0 0
        %3855 = vmatpush1.bf16.msra.mxu0 0
        %3856 = vmatprep.mubr.bf16.mxu0 %v3774
        %3857 = vmatmul.mubr.bf16.gmra.mrb[0].mxu0 %v3674
        %v3858 = vpop.f32.mrb[0].mxu0
        %v3859 = vadd.f32 0.0, %v3858
        %v3860 = vpop.f32.mrb[0].mxu0
        %v3861 = vpop.f32.mrb[0].mxu0
        %v3862 = vadd.f32 0.0, %v3861
        %v3863 = vpop.f32.mrb[0].mxu0
        %3864 = vmatprep.mubr.bf16.mxu0 %v3777
        %3865 = vmatmul.mubr.bf16.gmra.mrb[0].mxu0 %v3676
        %v3866 = vpop.f32.mrb[0].mxu0
        %v3867 = vadd.f32 0.0, %v3866
        %v3868 = vpop.f32.mrb[0].mxu0
        %v3869 = vpop.f32.mrb[0].mxu0
        %v3870 = vadd.f32 0.0, %v3869
        %v3871 = vpop.f32.mrb[0].mxu0
        %3872 = vmatprep.mubr.bf16.mxu0 %v3780
        %3873 = vmatmul.mubr.bf16.gmra.mrb[0].mxu0 %v3678
        %v3874 = vpop.f32.mrb[0].mxu0
        %v3875 = vadd.f32 0.0, %v3874
        %v3876 = vpop.f32.mrb[0].mxu0
        %v3877 = vpop.f32.mrb[0].mxu0
        %v3878 = vadd.f32 0.0, %v3877
        %v3879 = vpop.f32.mrb[0].mxu0
        %3880 = vmatprep.mubr.bf16.mxu0 %v3783
        %3881 = vmatmul.mubr.bf16.gmra.mrb[0].mxu0 %v3680
        %v3882 = vpop.f32.mrb[0].mxu0
        %v3883 = vadd.f32 0.0, %v3882
        %v3884 = vpop.f32.mrb[0].mxu0
        %v3885 = vpop.f32.mrb[0].mxu0
        %v3886 = vadd.f32 0.0, %v3885
        %v3887 = vpop.f32.mrb[0].mxu0
        %3888 = vmatprep.mubr.bf16.mxu0 %v3786
        %3889 = vmatmul.mubr.bf16.gmra.mrb[0].mxu0 %v3682
        %v3890 = vpop.f32.mrb[0].mxu0
        %v3891 = vadd.f32 0.0, %v3890
        %v3892 = vpop.f32.mrb[0].mxu0
        %v3893 = vpop.f32.mrb[0].mxu0
        %v3894 = vadd.f32 0.0, %v3893
        %v3895 = vpop.f32.mrb[0].mxu0
        %3896 = vmatprep.mubr.bf16.mxu0 %v3789
        %3897 = vmatmul.mubr.bf16.gmra.mrb[0].mxu0 %v3684
        %v3898 = vpop.f32.mrb[0].mxu0
        %v3899 = vadd.f32 0.0, %v3898
        %v3900 = vpop.f32.mrb[0].mxu0
        %v3901 = vpop.f32.mrb[0].mxu0
        %v3902 = vadd.f32 0.0, %v3901
        %v3903 = vpop.f32.mrb[0].mxu0
        %3904 = vmatprep.mubr.bf16.mxu0 %v3792
        %3905 = vmatmul.mubr.bf16.gmra.mrb[0].mxu0 %v3686
        %v3906 = vpop.f32.mrb[0].mxu0
        %v3907 = vadd.f32 0.0, %v3906
        %v3908 = vpop.f32.mrb[0].mxu0
        %v3909 = vpop.f32.mrb[0].mxu0
        %v3910 = vadd.f32 0.0, %v3909
        %v3911 = vpop.f32.mrb[0].mxu0
        %3912 = vmatprep.mubr.bf16.mxu0 %v3795
        %3913 = vmatmul.mubr.bf16.gmra.mrb[0].mxu0 %v3688
        %v3914 = vpop.f32.mrb[0].mxu0
        %v3915 = vadd.f32 0.0, %v3914
        %v3916 = vpop.f32.mrb[0].mxu0
        %v3917 = vpop.f32.mrb[0].mxu0
        %v3918 = vadd.f32 0.0, %v3917
        %v3919 = vpop.f32.mrb[0].mxu0
        %3920 = vmatprep.mubr.bf16.mxu0 %v3798
        %3921 = vmatmul.mubr.bf16.gmra.mrb[0].mxu0 %v3690
        %v3922 = vpop.f32.mrb[0].mxu0
        %v3923 = vadd.f32 0.0, %v3922
        %v3924 = vpop.f32.mrb[0].mxu0
        %v3925 = vpop.f32.mrb[0].mxu0
        %v3926 = vadd.f32 0.0, %v3925
        %v3927 = vpop.f32.mrb[0].mxu0
        %3928 = vmatprep.mubr.bf16.mxu0 %v3801
        %3929 = vmatmul.mubr.bf16.gmra.mrb[0].mxu0 %v3692
        %v3930 = vpop.f32.mrb[0].mxu0
        %v3931 = vadd.f32 0.0, %v3930
        %v3932 = vpop.f32.mrb[0].mxu0
        %v3933 = vpop.f32.mrb[0].mxu0
        %v3934 = vadd.f32 0.0, %v3933
        %v3935 = vpop.f32.mrb[0].mxu0
        %3936 = vmatprep.mubr.bf16.mxu0 %v3804
        %3937 = vmatmul.mubr.bf16.gmra.mrb[0].mxu0 %v3694
        %v3938 = vpop.f32.mrb[0].mxu0
        %v3939 = vadd.f32 0.0, %v3938
        %v3940 = vpop.f32.mrb[0].mxu0
        %v3941 = vpop.f32.mrb[0].mxu0
        %v3942 = vadd.f32 0.0, %v3941
        %v3943 = vpop.f32.mrb[0].mxu0
        %3944 = vmatprep.mubr.bf16.mxu0 %v3807
        %3945 = vmatmul.mubr.bf16.gmra.mrb[0].mxu0 %v3696
        %v3946 = vpop.f32.mrb[0].mxu0
        %v3947 = vadd.f32 0.0, %v3946
        %v3948 = vpop.f32.mrb[0].mxu0
        %v3949 = vpop.f32.mrb[0].mxu0
        %v3950 = vadd.f32 0.0, %v3949
        %v3951 = vpop.f32.mrb[0].mxu0
        %3952 = vmatprep.mubr.bf16.mxu0 %v3810
        %3953 = vmatmul.mubr.bf16.gmra.mrb[0].mxu0 %v3698
        %v3954 = vpop.f32.mrb[0].mxu0
        %v3955 = vadd.f32 0.0, %v3954
        %v3956 = vpop.f32.mrb[0].mxu0
        %v3957 = vpop.f32.mrb[0].mxu0
        %v3958 = vadd.f32 0.0, %v3957
        %v3959 = vpop.f32.mrb[0].mxu0
        %3960 = vmatprep.mubr.bf16.mxu0 %v3813
        %3961 = vmatmul.mubr.bf16.gmra.mrb[0].mxu0 %v3700
        %v3962 = vpop.f32.mrb[0].mxu0
        %v3963 = vadd.f32 0.0, %v3962
        %v3964 = vpop.f32.mrb[0].mxu0
        %v3965 = vpop.f32.mrb[0].mxu0
        %v3966 = vadd.f32 0.0, %v3965
        %v3967 = vpop.f32.mrb[0].mxu0
        %3968 = vmatprep.mubr.bf16.mxu0 %v3816
        %3969 = vmatmul.mubr.bf16.gmra.mrb[0].mxu0 %v3702
        %v3970 = vpop.f32.mrb[0].mxu0
        %v3971 = vadd.f32 0.0, %v3970
        %v3972 = vpop.f32.mrb[0].mxu0
        %v3973 = vpop.f32.mrb[0].mxu0
        %v3974 = vadd.f32 0.0, %v3973
        %v3975 = vpop.f32.mrb[0].mxu0
        %3976 = vmatprep.mubr.bf16.mxu0 %v3819
        %3977 = vmatmul.mubr.bf16.gmra.mrb[0].mxu0 %v3704
        %v3978 = vpop.f32.mrb[0].mxu0
        %v3979 = vadd.f32 0.0, %v3978
        %v3980 = vpop.f32.mrb[0].mxu0
        %v3981 = vpop.f32.mrb[0].mxu0
        %v3982 = vadd.f32 0.0, %v3981
        %v3983 = vpop.f32.mrb[0].mxu0
        %3984 = vdwg.mxu0
        %v3985 = vadd.f32 %v3384, %v3859
        %v3986 = vadd.f32 %v3385, %v3862
        %v3987 = vadd.f32 %v3386, %v3867
        %v3988 = vadd.f32 %v3387, %v3870
        %v3989 = vadd.f32 %v3388, %v3875
        %v3990 = vadd.f32 %v3389, %v3878
        %v3991 = vadd.f32 %v3390, %v3883
        %v3992 = vadd.f32 %v3391, %v3886
        %v3993 = vadd.f32 %v3392, %v3891
        %v3994 = vadd.f32 %v3393, %v3894
        %v3995 = vadd.f32 %v3394, %v3899
        %v3996 = vadd.f32 %v3395, %v3902
        %v3997 = vadd.f32 %v3396, %v3907
        %v3998 = vadd.f32 %v3397, %v3910
        %v3999 = vadd.f32 %v3398, %v3915
        %v4000 = vadd.f32 %v3399, %v3918
        %v4001 = vadd.f32 %v3400, %v3923
        %v4002 = vadd.f32 %v3401, %v3926
        %v4003 = vadd.f32 %v3402, %v3931
        %v4004 = vadd.f32 %v3403, %v3934
        %v4005 = vadd.f32 %v3404, %v3939
        %v4006 = vadd.f32 %v3405, %v3942
        %v4007 = vadd.f32 %v3406, %v3947
        %v4008 = vadd.f32 %v3407, %v3950
        %v4009 = vadd.f32 %v3408, %v3955
        %v4010 = vadd.f32 %v3409, %v3958
        %v4011 = vadd.f32 %v3410, %v3963
        %v4012 = vadd.f32 %v3411, %v3966
        %v4013 = vadd.f32 %v3412, %v3971
        %v4014 = vadd.f32 %v3413, %v3974
        %v4015 = vadd.f32 %v3414, %v3979
        %v4016 = vadd.f32 %v3415, %v3982
        %s4017 = scalar_lea.vmem %s222, 48
        %v4018 = vld [vmem:[%s4017] sm:$0xff]
        %v4019 = vld [vmem:[%s4017 + $0x8] sm:$0xff]
        %v4020 = vld [vmem:[%s4017 + $0x18] sm:$0xff]
        %v4021 = vld [vmem:[%s4017 + $0x20] sm:$0xff]
        %v4022 = vld [vmem:[%s4017 + $0x30] sm:$0xff]
        %v4023 = vld [vmem:[%s4017 + $0x38] sm:$0xff]
        %v4024 = vld [vmem:[%s4017 + $0x48] sm:$0xff]
        %v4025 = vld [vmem:[%s4017 + $0x50] sm:$0xff]
        %v4026 = vld [vmem:[%s4017 + $0x60] sm:$0xff]
        %v4027 = vld [vmem:[%s4017 + $0x68] sm:$0xff]
        %v4028 = vld [vmem:[%s4017 + $0x78] sm:$0xff]
        %v4029 = vld [vmem:[%s4017 + $0x80] sm:$0xff]
        %v4030 = vld [vmem:[%s4017 + $0x90] sm:$0xff]
        %v4031 = vld [vmem:[%s4017 + $0x98] sm:$0xff]
        %v4032 = vld [vmem:[%s4017 + $0xa8] sm:$0xff]
        %v4033 = vld [vmem:[%s4017 + $0xb0] sm:$0xff]
        %v4034 = vld [vmem:[%s4017 + $0xc0] sm:$0xff]
        %v4035 = vld [vmem:[%s4017 + $0xc8] sm:$0xff]
        %v4036 = vld [vmem:[%s4017 + $0xd8] sm:$0xff]
        %v4037 = vld [vmem:[%s4017 + $0xe0] sm:$0xff]
        %v4038 = vld [vmem:[%s4017 + $0xf0] sm:$0xff]
        %v4039 = vld [vmem:[%s4017 + $0xf8] sm:$0xff]
        %v4040 = vld [vmem:[%s4017 + $0x108] sm:$0xff]
        %v4041 = vld [vmem:[%s4017 + $0x110] sm:$0xff]
        %v4042 = vld [vmem:[%s4017 + $0x120] sm:$0xff]
        %v4043 = vld [vmem:[%s4017 + $0x128] sm:$0xff]
        %v4044 = vld [vmem:[%s4017 + $0x138] sm:$0xff]
        %v4045 = vld [vmem:[%s4017 + $0x140] sm:$0xff]
        %v4046 = vld [vmem:[%s4017 + $0x150] sm:$0xff]
        %v4047 = vld [vmem:[%s4017 + $0x158] sm:$0xff]
        %v4048 = vld [vmem:[%s4017 + $0x168] sm:$0xff]
        %v4049 = vld [vmem:[%s4017 + $0x170] sm:$0xff]
        %s4050 = scalar_lea.vmem %s1, 408
        %v4051 = vld [vmem:[%s4050] sm:$0xf]
        %v4052 = vld [vmem:[%s4050 + $0x4] sm:$0xf]
        %v4053 = vld [vmem:[%s4050 + $0x8] sm:$0xf]
        %v4054 = vld [vmem:[%s4050 + $0xc] sm:$0xf]
        %v4055 = vld [vmem:[%s4050 + $0x10] sm:$0xf]
        %v4056 = vld [vmem:[%s4050 + $0x14] sm:$0xf]
        %v4057 = vld [vmem:[%s4050 + $0x18] sm:$0xf]
        %v4058 = vld [vmem:[%s4050 + $0x1c] sm:$0xf]
        %v4059 = vld [vmem:[%s4050 + $0x20] sm:$0xf]
        %v4060 = vld [vmem:[%s4050 + $0x24] sm:$0xf]
        %v4061 = vld [vmem:[%s4050 + $0x28] sm:$0xf]
        %v4062 = vld [vmem:[%s4050 + $0x2c] sm:$0xf]
        %v4063 = vld [vmem:[%s4050 + $0x30] sm:$0xf]
        %v4064 = vld [vmem:[%s4050 + $0x34] sm:$0xf]
        %v4065 = vld [vmem:[%s4050 + $0x38] sm:$0xf]
        %v4066 = vld [vmem:[%s4050 + $0x3c] sm:$0xf]
        %v4067 = vld [vmem:[%s4050 + $0x40] sm:$0x3]
        %v4100 = vunpack.c.l.b16 %v4018
        %v4101 = vunpack.c.h.b16 %v4018
        %v4102 = vunpack.c.l.b16 %v4019
        %v4103 = vunpack.c.h.b16 %v4019
        %v4104 = vunpack.c.l.b16 %v4020
        %v4105 = vunpack.c.h.b16 %v4020
        %v4106 = vunpack.c.l.b16 %v4021
        %v4107 = vunpack.c.h.b16 %v4021
        %v4108 = vunpack.c.l.b16 %v4022
        %v4109 = vunpack.c.h.b16 %v4022
        %v4110 = vunpack.c.l.b16 %v4023
        %v4111 = vunpack.c.h.b16 %v4023
        %v4112 = vunpack.c.l.b16 %v4024
        %v4113 = vunpack.c.h.b16 %v4024
        %v4114 = vunpack.c.l.b16 %v4025
        %v4115 = vunpack.c.h.b16 %v4025
        %v4116 = vunpack.c.l.b16 %v4026
        %v4117 = vunpack.c.h.b16 %v4026
        %v4118 = vunpack.c.l.b16 %v4027
        %v4119 = vunpack.c.h.b16 %v4027
        %v4120 = vunpack.c.l.b16 %v4028
        %v4121 = vunpack.c.h.b16 %v4028
        %v4122 = vunpack.c.l.b16 %v4029
        %v4123 = vunpack.c.h.b16 %v4029
        %v4124 = vunpack.c.l.b16 %v4030
        %v4125 = vunpack.c.h.b16 %v4030
        %v4126 = vunpack.c.l.b16 %v4031
        %v4127 = vunpack.c.h.b16 %v4031
        %v4128 = vunpack.c.l.b16 %v4032
        %v4129 = vunpack.c.h.b16 %v4032
        %v4130 = vunpack.c.l.b16 %v4033
        %v4131 = vunpack.c.h.b16 %v4033
        %v4132 = vunpack.c.l.b16 %v4034
        %v4133 = vunpack.c.h.b16 %v4034
        %v4134 = vunpack.c.l.b16 %v4035
        %v4135 = vunpack.c.h.b16 %v4035
        %v4136 = vunpack.c.l.b16 %v4036
        %v4137 = vunpack.c.h.b16 %v4036
        %v4138 = vunpack.c.l.b16 %v4037
        %v4139 = vunpack.c.h.b16 %v4037
        %v4140 = vunpack.c.l.b16 %v4038
        %v4141 = vunpack.c.h.b16 %v4038
        %v4142 = vunpack.c.l.b16 %v4039
        %v4143 = vunpack.c.h.b16 %v4039
        %v4144 = vunpack.c.l.b16 %v4040
        %v4145 = vunpack.c.h.b16 %v4040
        %v4146 = vunpack.c.l.b16 %v4041
        %v4147 = vunpack.c.h.b16 %v4041
        %v4148 = vunpack.c.l.b16 %v4042
        %v4149 = vunpack.c.h.b16 %v4042
        %v4150 = vunpack.c.l.b16 %v4043
        %v4151 = vunpack.c.h.b16 %v4043
        %v4152 = vunpack.c.l.b16 %v4044
        %v4153 = vunpack.c.h.b16 %v4044
        %v4154 = vunpack.c.l.b16 %v4045
        %v4155 = vunpack.c.h.b16 %v4045
        %v4156 = vunpack.c.l.b16 %v4046
        %v4157 = vunpack.c.h.b16 %v4046
        %v4158 = vunpack.c.l.b16 %v4047
        %v4159 = vunpack.c.h.b16 %v4047
        %v4160 = vunpack.c.l.b16 %v4048
        %v4161 = vunpack.c.h.b16 %v4048
        %v4162 = vunpack.c.l.b16 %v4049
        %v4163 = vunpack.c.h.b16 %v4049
        %v4164 = vpack.c.b16 %v4102, %v4100
        %v4165 = vpack.c.b16 %v4103, %v4101
        %v4166 = vpack.c.b16 %v4106, %v4104
        %v4167 = vpack.c.b16 %v4107, %v4105
        %v4168 = vpack.c.b16 %v4110, %v4108
        %v4169 = vpack.c.b16 %v4111, %v4109
        %v4170 = vpack.c.b16 %v4114, %v4112
        %v4171 = vpack.c.b16 %v4115, %v4113
        %v4172 = vpack.c.b16 %v4118, %v4116
        %v4173 = vpack.c.b16 %v4119, %v4117
        %v4174 = vpack.c.b16 %v4122, %v4120
        %v4175 = vpack.c.b16 %v4123, %v4121
        %v4176 = vpack.c.b16 %v4126, %v4124
        %v4177 = vpack.c.b16 %v4127, %v4125
        %v4178 = vpack.c.b16 %v4130, %v4128
        %v4179 = vpack.c.b16 %v4131, %v4129
        %v4180 = vpack.c.b16 %v4134, %v4132
        %v4181 = vpack.c.b16 %v4135, %v4133
        %v4182 = vpack.c.b16 %v4138, %v4136
        %v4183 = vpack.c.b16 %v4139, %v4137
        %v4184 = vpack.c.b16 %v4142, %v4140
        %v4185 = vpack.c.b16 %v4143, %v4141
        %v4186 = vpack.c.b16 %v4146, %v4144
        %v4187 = vpack.c.b16 %v4147, %v4145
        %v4188 = vpack.c.b16 %v4150, %v4148
        %v4189 = vpack.c.b16 %v4151, %v4149
        %v4190 = vpack.c.b16 %v4154, %v4152
        %v4191 = vpack.c.b16 %v4155, %v4153
        %v4192 = vpack.c.b16 %v4158, %v4156
        %v4193 = vpack.c.b16 %v4159, %v4157
        %v4194 = vpack.c.b16 %v4162, %v4160
        %v4195 = vpack.c.b16 %v4163, %v4161
        %v4229 = vunpack.c.l.b16 %v4051
        %v4230 = vunpack.c.l.b16 %v4052
        %v4231 = vunpack.c.l.b16 %v4053
        %v4232 = vunpack.c.l.b16 %v4054
        %v4233 = vunpack.c.l.b16 %v4055
        %v4234 = vunpack.c.l.b16 %v4056
        %v4235 = vunpack.c.l.b16 %v4057
        %v4236 = vunpack.c.l.b16 %v4058
        %v4237 = vunpack.c.l.b16 %v4059
        %v4238 = vunpack.c.l.b16 %v4060
        %v4239 = vunpack.c.l.b16 %v4061
        %v4240 = vunpack.c.l.b16 %v4062
        %v4241 = vunpack.c.l.b16 %v4063
        %v4242 = vunpack.c.l.b16 %v4064
        %v4243 = vunpack.c.l.b16 %v4065
        %v4244 = vunpack.c.l.b16 %v4066
        %v4245 = vunpack.c.l.b16 %v4067
        %v4246 = vpack.c.b16 %v4230, %v4229
        %v4247 = vpack.c.b16 %v4232, %v4231
        %v4248 = vpack.c.b16 %v4234, %v4233
        %v4249 = vpack.c.b16 %v4236, %v4235
        %v4250 = vpack.c.b16 %v4238, %v4237
        %v4251 = vpack.c.b16 %v4240, %v4239
        %v4252 = vpack.c.b16 %v4242, %v4241
        %v4253 = vpack.c.b16 %v4244, %v4243
        %v4254 = vpack.c.b16 %v4245, %v4245
        %v4264 = vsel %vm857, %v4165, 0
        %v4267 = vsel %vm857, %v4167, 0
        %v4270 = vsel %vm857, %v4169, 0
        %v4273 = vsel %vm857, %v4171, 0
        %v4276 = vsel %vm857, %v4173, 0
        %v4279 = vsel %vm857, %v4175, 0
        %v4282 = vsel %vm857, %v4177, 0
        %v4285 = vsel %vm857, %v4179, 0
        %v4288 = vsel %vm857, %v4181, 0
        %v4291 = vsel %vm857, %v4183, 0
        %v4294 = vsel %vm857, %v4185, 0
        %v4297 = vsel %vm857, %v4187, 0
        %v4300 = vsel %vm857, %v4189, 0
        %v4303 = vsel %vm857, %v4191, 0
        %v4306 = vsel %vm857, %v4193, 0
        %v4309 = vsel %vm857, %v4195, 0
        %v4312 = vand.u32 %v4254, %v909
        %4314 = vmatprep.subr.bf16.mxu0 0
        %4315 = vmatpush1.bf16.msra.mxu0 %v4246
        %4316 = vmatprep.subr.bf16.mxu0 0
        %4317 = vmatpush1.bf16.msra.mxu0 %v4247
        %4318 = vmatprep.subr.bf16.mxu0 0
        %4319 = vmatpush1.bf16.msra.mxu0 %v4248
        %4320 = vmatprep.subr.bf16.mxu0 0
        %4321 = vmatpush1.bf16.msra.mxu0 %v4249
        %4322 = vmatprep.subr.bf16.mxu0 0
        %4323 = vmatpush1.bf16.msra.mxu0 %v4250
        %4324 = vmatprep.subr.bf16.mxu0 0
        %4325 = vmatpush1.bf16.msra.mxu0 %v4251
        %4326 = vmatprep.subr.bf16.mxu0 0
        %4327 = vmatpush1.bf16.msra.mxu0 %v4252
        %4328 = vmatprep.subr.bf16.mxu0 0
        %4329 = vmatpush1.bf16.msra.mxu0 %v4253
        %4330 = vmatprep.subr.bf16.mxu0 0
        %4331 = vmatpush1.bf16.msra.mxu0 %v4312
        %4332 = vmatprep.subr.bf16.mxu0 0
        %4333 = vmatpush1.bf16.msra.mxu0 0
        %4334 = vmatprep.subr.bf16.mxu0 0
        %4335 = vmatpush1.bf16.msra.mxu0 0
        %4336 = vmatprep.subr.bf16.mxu0 0
        %4337 = vmatpush1.bf16.msra.mxu0 0
        %4338 = vmatprep.subr.bf16.mxu0 0
        %4339 = vmatpush1.bf16.msra.mxu0 0
        %4340 = vmatprep.subr.bf16.mxu0 0
        %4341 = vmatpush1.bf16.msra.mxu0 0
        %4342 = vmatprep.subr.bf16.mxu0 0
        %4343 = vmatpush1.bf16.msra.mxu0 0
        %4344 = vmatprep.subr.bf16.mxu0 0
        %4345 = vmatpush1.bf16.msra.mxu0 0
        %4346 = vmatprep.mubr.bf16.mxu0 %v4264
        %4347 = vmatmul.mubr.bf16.gmra.mrb[0].mxu0 %v4164
        %v4348 = vpop.f32.mrb[0].mxu0
        %v4349 = vadd.f32 0.0, %v4348
        %v4350 = vpop.f32.mrb[0].mxu0
        %v4351 = vpop.f32.mrb[0].mxu0
        %v4352 = vadd.f32 0.0, %v4351
        %v4353 = vpop.f32.mrb[0].mxu0
        %4354 = vmatprep.mubr.bf16.mxu0 %v4267
        %4355 = vmatmul.mubr.bf16.gmra.mrb[0].mxu0 %v4166
        %v4356 = vpop.f32.mrb[0].mxu0
        %v4357 = vadd.f32 0.0, %v4356
        %v4358 = vpop.f32.mrb[0].mxu0
        %v4359 = vpop.f32.mrb[0].mxu0
        %v4360 = vadd.f32 0.0, %v4359
        %v4361 = vpop.f32.mrb[0].mxu0
        %4362 = vmatprep.mubr.bf16.mxu0 %v4270
        %4363 = vmatmul.mubr.bf16.gmra.mrb[0].mxu0 %v4168
        %v4364 = vpop.f32.mrb[0].mxu0
        %v4365 = vadd.f32 0.0, %v4364
        %v4366 = vpop.f32.mrb[0].mxu0
        %v4367 = vpop.f32.mrb[0].mxu0
        %v4368 = vadd.f32 0.0, %v4367
        %v4369 = vpop.f32.mrb[0].mxu0
        %4370 = vmatprep.mubr.bf16.mxu0 %v4273
        %4371 = vmatmul.mubr.bf16.gmra.mrb[0].mxu0 %v4170
        %v4372 = vpop.f32.mrb[0].mxu0
        %v4373 = vadd.f32 0.0, %v4372
        %v4374 = vpop.f32.mrb[0].mxu0
        %v4375 = vpop.f32.mrb[0].mxu0
        %v4376 = vadd.f32 0.0, %v4375
        %v4377 = vpop.f32.mrb[0].mxu0
        %4378 = vmatprep.mubr.bf16.mxu0 %v4276
        %4379 = vmatmul.mubr.bf16.gmra.mrb[0].mxu0 %v4172
        %v4380 = vpop.f32.mrb[0].mxu0
        %v4381 = vadd.f32 0.0, %v4380
        %v4382 = vpop.f32.mrb[0].mxu0
        %v4383 = vpop.f32.mrb[0].mxu0
        %v4384 = vadd.f32 0.0, %v4383
        %v4385 = vpop.f32.mrb[0].mxu0
        %4386 = vmatprep.mubr.bf16.mxu0 %v4279
        %4387 = vmatmul.mubr.bf16.gmra.mrb[0].mxu0 %v4174
        %v4388 = vpop.f32.mrb[0].mxu0
        %v4389 = vadd.f32 0.0, %v4388
        %v4390 = vpop.f32.mrb[0].mxu0
        %v4391 = vpop.f32.mrb[0].mxu0
        %v4392 = vadd.f32 0.0, %v4391
        %v4393 = vpop.f32.mrb[0].mxu0
        %4394 = vmatprep.mubr.bf16.mxu0 %v4282
        %4395 = vmatmul.mubr.bf16.gmra.mrb[0].mxu0 %v4176
        %v4396 = vpop.f32.mrb[0].mxu0
        %v4397 = vadd.f32 0.0, %v4396
        %v4398 = vpop.f32.mrb[0].mxu0
        %v4399 = vpop.f32.mrb[0].mxu0
        %v4400 = vadd.f32 0.0, %v4399
        %v4401 = vpop.f32.mrb[0].mxu0
        %4402 = vmatprep.mubr.bf16.mxu0 %v4285
        %4403 = vmatmul.mubr.bf16.gmra.mrb[0].mxu0 %v4178
        %v4404 = vpop.f32.mrb[0].mxu0
        %v4405 = vadd.f32 0.0, %v4404
        %v4406 = vpop.f32.mrb[0].mxu0
        %v4407 = vpop.f32.mrb[0].mxu0
        %v4408 = vadd.f32 0.0, %v4407
        %v4409 = vpop.f32.mrb[0].mxu0
        %4410 = vmatprep.mubr.bf16.mxu0 %v4288
        %4411 = vmatmul.mubr.bf16.gmra.mrb[0].mxu0 %v4180
        %v4412 = vpop.f32.mrb[0].mxu0
        %v4413 = vadd.f32 0.0, %v4412
        %v4414 = vpop.f32.mrb[0].mxu0
        %v4415 = vpop.f32.mrb[0].mxu0
        %v4416 = vadd.f32 0.0, %v4415
        %v4417 = vpop.f32.mrb[0].mxu0
        %4418 = vmatprep.mubr.bf16.mxu0 %v4291
        %4419 = vmatmul.mubr.bf16.gmra.mrb[0].mxu0 %v4182
        %v4420 = vpop.f32.mrb[0].mxu0
        %v4421 = vadd.f32 0.0, %v4420
        %v4422 = vpop.f32.mrb[0].mxu0
        %v4423 = vpop.f32.mrb[0].mxu0
        %v4424 = vadd.f32 0.0, %v4423
        %v4425 = vpop.f32.mrb[0].mxu0
        %4426 = vmatprep.mubr.bf16.mxu0 %v4294
        %4427 = vmatmul.mubr.bf16.gmra.mrb[0].mxu0 %v4184
        %v4428 = vpop.f32.mrb[0].mxu0
        %v4429 = vadd.f32 0.0, %v4428
        %v4430 = vpop.f32.mrb[0].mxu0
        %v4431 = vpop.f32.mrb[0].mxu0
        %v4432 = vadd.f32 0.0, %v4431
        %v4433 = vpop.f32.mrb[0].mxu0
        %4434 = vmatprep.mubr.bf16.mxu0 %v4297
        %4435 = vmatmul.mubr.bf16.gmra.mrb[0].mxu0 %v4186
        %v4436 = vpop.f32.mrb[0].mxu0
        %v4437 = vadd.f32 0.0, %v4436
        %v4438 = vpop.f32.mrb[0].mxu0
        %v4439 = vpop.f32.mrb[0].mxu0
        %v4440 = vadd.f32 0.0, %v4439
        %v4441 = vpop.f32.mrb[0].mxu0
        %4442 = vmatprep.mubr.bf16.mxu0 %v4300
        %4443 = vmatmul.mubr.bf16.gmra.mrb[0].mxu0 %v4188
        %v4444 = vpop.f32.mrb[0].mxu0
        %v4445 = vadd.f32 0.0, %v4444
        %v4446 = vpop.f32.mrb[0].mxu0
        %v4447 = vpop.f32.mrb[0].mxu0
        %v4448 = vadd.f32 0.0, %v4447
        %v4449 = vpop.f32.mrb[0].mxu0
        %4450 = vmatprep.mubr.bf16.mxu0 %v4303
        %4451 = vmatmul.mubr.bf16.gmra.mrb[0].mxu0 %v4190
        %v4452 = vpop.f32.mrb[0].mxu0
        %v4453 = vadd.f32 0.0, %v4452
        %v4454 = vpop.f32.mrb[0].mxu0
        %v4455 = vpop.f32.mrb[0].mxu0
        %v4456 = vadd.f32 0.0, %v4455
        %v4457 = vpop.f32.mrb[0].mxu0
        %4458 = vmatprep.mubr.bf16.mxu0 %v4306
        %4459 = vmatmul.mubr.bf16.gmra.mrb[0].mxu0 %v4192
        %v4460 = vpop.f32.mrb[0].mxu0
        %v4461 = vadd.f32 0.0, %v4460
        %v4462 = vpop.f32.mrb[0].mxu0
        %v4463 = vpop.f32.mrb[0].mxu0
        %v4464 = vadd.f32 0.0, %v4463
        %v4465 = vpop.f32.mrb[0].mxu0
        %4466 = vmatprep.mubr.bf16.mxu0 %v4309
        %4467 = vmatmul.mubr.bf16.gmra.mrb[0].mxu0 %v4194
        %v4468 = vpop.f32.mrb[0].mxu0
        %v4469 = vadd.f32 0.0, %v4468
        %v4470 = vpop.f32.mrb[0].mxu0
        %v4471 = vpop.f32.mrb[0].mxu0
        %v4472 = vadd.f32 0.0, %v4471
        %v4473 = vpop.f32.mrb[0].mxu0
        %4474 = vdwg.mxu0
        %v4475 = vadd.f32 %v3985, %v4349
        %v4476 = vadd.f32 %v3986, %v4352
        %v4477 = vadd.f32 %v3987, %v4357
        %v4478 = vadd.f32 %v3988, %v4360
        %v4479 = vadd.f32 %v3989, %v4365
        %v4480 = vadd.f32 %v3990, %v4368
        %v4481 = vadd.f32 %v3991, %v4373
        %v4482 = vadd.f32 %v3992, %v4376
        %v4483 = vadd.f32 %v3993, %v4381
        %v4484 = vadd.f32 %v3994, %v4384
        %v4485 = vadd.f32 %v3995, %v4389
        %v4486 = vadd.f32 %v3996, %v4392
        %v4487 = vadd.f32 %v3997, %v4397
        %v4488 = vadd.f32 %v3998, %v4400
        %v4489 = vadd.f32 %v3999, %v4405
        %v4490 = vadd.f32 %v4000, %v4408
        %v4491 = vadd.f32 %v4001, %v4413
        %v4492 = vadd.f32 %v4002, %v4416
        %v4493 = vadd.f32 %v4003, %v4421
        %v4494 = vadd.f32 %v4004, %v4424
        %v4495 = vadd.f32 %v4005, %v4429
        %v4496 = vadd.f32 %v4006, %v4432
        %v4497 = vadd.f32 %v4007, %v4437
        %v4498 = vadd.f32 %v4008, %v4440
        %v4499 = vadd.f32 %v4009, %v4445
        %v4500 = vadd.f32 %v4010, %v4448
        %v4501 = vadd.f32 %v4011, %v4453
        %v4502 = vadd.f32 %v4012, %v4456
        %v4503 = vadd.f32 %v4013, %v4461
        %v4504 = vadd.f32 %v4014, %v4464
        %v4505 = vadd.f32 %v4015, %v4469
        %v4506 = vadd.f32 %v4016, %v4472
        %v4507 = vld [vmem:[%s4017] sm:$0xff]
        %v4508 = vld [vmem:[%s4017 + $0x8] sm:$0xff]
        %v4509 = vld [vmem:[%s4017 + $0x10] sm:$0x11]
        %v4510 = vld [vmem:[%s4017 + $0x18] sm:$0xff]
        %v4511 = vld [vmem:[%s4017 + $0x20] sm:$0xff]
        %v4512 = vld [vmem:[%s4017 + $0x28] sm:$0x11]
        %v4513 = vld [vmem:[%s4017 + $0x30] sm:$0xff]
        %v4514 = vld [vmem:[%s4017 + $0x38] sm:$0xff]
        %v4515 = vld [vmem:[%s4017 + $0x40] sm:$0x11]
        %v4516 = vld [vmem:[%s4017 + $0x48] sm:$0xff]
        %v4517 = vld [vmem:[%s4017 + $0x50] sm:$0xff]
        %v4518 = vld [vmem:[%s4017 + $0x58] sm:$0x11]
        %v4519 = vld [vmem:[%s4017 + $0x60] sm:$0xff]
        %v4520 = vld [vmem:[%s4017 + $0x68] sm:$0xff]
        %v4521 = vld [vmem:[%s4017 + $0x70] sm:$0x11]
        %v4522 = vld [vmem:[%s4017 + $0x78] sm:$0xff]
        %v4523 = vld [vmem:[%s4017 + $0x80] sm:$0xff]
        %v4524 = vld [vmem:[%s4017 + $0x88] sm:$0x11]
        %v4525 = vld [vmem:[%s4017 + $0x90] sm:$0xff]
        %v4526 = vld [vmem:[%s4017 + $0x98] sm:$0xff]
        %v4527 = vld [vmem:[%s4017 + $0xa0] sm:$0x11]
        %v4528 = vld [vmem:[%s4017 + $0xa8] sm:$0xff]
        %v4529 = vld [vmem:[%s4017 + $0xb0] sm:$0xff]
        %v4530 = vld [vmem:[%s4017 + $0xb8] sm:$0x11]
        %v4531 = vld [vmem:[%s4017 + $0xc0] sm:$0xff]
        %v4532 = vld [vmem:[%s4017 + $0xc8] sm:$0xff]
        %v4533 = vld [vmem:[%s4017 + $0xd0] sm:$0x11]
        %v4534 = vld [vmem:[%s4017 + $0xd8] sm:$0xff]
        %v4535 = vld [vmem:[%s4017 + $0xe0] sm:$0xff]
        %v4536 = vld [vmem:[%s4017 + $0xe8] sm:$0x11]
        %v4537 = vld [vmem:[%s4017 + $0xf0] sm:$0xff]
        %v4538 = vld [vmem:[%s4017 + $0xf8] sm:$0xff]
        %v4539 = vld [vmem:[%s4017 + $0x100] sm:$0x11]
        %v4540 = vld [vmem:[%s4017 + $0x108] sm:$0xff]
        %v4541 = vld [vmem:[%s4017 + $0x110] sm:$0xff]
        %v4542 = vld [vmem:[%s4017 + $0x118] sm:$0x11]
        %v4543 = vld [vmem:[%s4017 + $0x120] sm:$0xff]
        %v4544 = vld [vmem:[%s4017 + $0x128] sm:$0xff]
        %v4545 = vld [vmem:[%s4017 + $0x130] sm:$0x11]
        %v4546 = vld [vmem:[%s4017 + $0x138] sm:$0xff]
        %v4547 = vld [vmem:[%s4017 + $0x140] sm:$0xff]
        %v4548 = vld [vmem:[%s4017 + $0x148] sm:$0x11]
        %v4549 = vld [vmem:[%s4017 + $0x150] sm:$0xff]
        %v4550 = vld [vmem:[%s4017 + $0x158] sm:$0xff]
        %v4551 = vld [vmem:[%s4017 + $0x160] sm:$0x11]
        %v4552 = vld [vmem:[%s4017 + $0x168] sm:$0xff]
        %v4553 = vld [vmem:[%s4017 + $0x170] sm:$0xff]
        %v4554 = vld [vmem:[%s4017 + $0x178] sm:$0x11]
        %v4556 = vshrl.u32 %v4507, 16
        %v4558 = vrot.slane %v4556, 4
        %v4559 = vshll.u32 %v4507, 16
        %v4561 = vrot.slane %v4559, 5
        %v4562 = vor.u32 %v4558, %v4561
        %v4563 = vrot.slane %v4562, 4
        %v4565 = vshll.u32 %v4508, 16
        %v4567 = vrot.slane %v4565, 5
        %v4568 = vsel %vm291, %v4563, %v4567
        %v4569 = vshrl.u32 %v4508, 16
        %v4571 = vrot.slane %v4569, 4
        %v4572 = vor.u32 %v4571, %v4567
        %v4573 = vrot.slane %v4572, 4
        %v4575 = vshll.u32 %v4509, 16
        %v4577 = vrot.slane %v4575, 5
        %v4578 = vsel %vm291, %v4573, %v4577
        %v4580 = vshrl.u32 %v4510, 16
        %v4582 = vrot.slane %v4580, 4
        %v4583 = vshll.u32 %v4510, 16
        %v4585 = vrot.slane %v4583, 5
        %v4586 = vor.u32 %v4582, %v4585
        %v4587 = vrot.slane %v4586, 4
        %v4589 = vshll.u32 %v4511, 16
        %v4591 = vrot.slane %v4589, 5
        %v4592 = vsel %vm291, %v4587, %v4591
        %v4593 = vshrl.u32 %v4511, 16
        %v4595 = vrot.slane %v4593, 4
        %v4596 = vor.u32 %v4595, %v4591
        %v4597 = vrot.slane %v4596, 4
        %v4599 = vshll.u32 %v4512, 16
        %v4601 = vrot.slane %v4599, 5
        %v4602 = vsel %vm291, %v4597, %v4601
        %v4604 = vshrl.u32 %v4513, 16
        %v4606 = vrot.slane %v4604, 4
        %v4607 = vshll.u32 %v4513, 16
        %v4609 = vrot.slane %v4607, 5
        %v4610 = vor.u32 %v4606, %v4609
        %v4611 = vrot.slane %v4610, 4
        %v4613 = vshll.u32 %v4514, 16
        %v4615 = vrot.slane %v4613, 5
        %v4616 = vsel %vm291, %v4611, %v4615
        %v4617 = vshrl.u32 %v4514, 16
        %v4619 = vrot.slane %v4617, 4
        %v4620 = vor.u32 %v4619, %v4615
        %v4621 = vrot.slane %v4620, 4
        %v4623 = vshll.u32 %v4515, 16
        %v4625 = vrot.slane %v4623, 5
        %v4626 = vsel %vm291, %v4621, %v4625
        %v4628 = vshrl.u32 %v4516, 16
        %v4630 = vrot.slane %v4628, 4
        %v4631 = vshll.u32 %v4516, 16
        %v4633 = vrot.slane %v4631, 5
        %v4634 = vor.u32 %v4630, %v4633
        %v4635 = vrot.slane %v4634, 4
        %v4637 = vshll.u32 %v4517, 16
        %v4639 = vrot.slane %v4637, 5
        %v4640 = vsel %vm291, %v4635, %v4639
        %v4641 = vshrl.u32 %v4517, 16
        %v4643 = vrot.slane %v4641, 4
        %v4644 = vor.u32 %v4643, %v4639
        %v4645 = vrot.slane %v4644, 4
        %v4647 = vshll.u32 %v4518, 16
        %v4649 = vrot.slane %v4647, 5
        %v4650 = vsel %vm291, %v4645, %v4649
        %v4652 = vshrl.u32 %v4519, 16
        %v4654 = vrot.slane %v4652, 4
        %v4655 = vshll.u32 %v4519, 16
        %v4657 = vrot.slane %v4655, 5
        %v4658 = vor.u32 %v4654, %v4657
        %v4659 = vrot.slane %v4658, 4
        %v4661 = vshll.u32 %v4520, 16
        %v4663 = vrot.slane %v4661, 5
        %v4664 = vsel %vm291, %v4659, %v4663
        %v4665 = vshrl.u32 %v4520, 16
        %v4667 = vrot.slane %v4665, 4
        %v4668 = vor.u32 %v4667, %v4663
        %v4669 = vrot.slane %v4668, 4
        %v4671 = vshll.u32 %v4521, 16
        %v4673 = vrot.slane %v4671, 5
        %v4674 = vsel %vm291, %v4669, %v4673
        %v4676 = vshrl.u32 %v4522, 16
        %v4678 = vrot.slane %v4676, 4
        %v4679 = vshll.u32 %v4522, 16
        %v4681 = vrot.slane %v4679, 5
        %v4682 = vor.u32 %v4678, %v4681
        %v4683 = vrot.slane %v4682, 4
        %v4685 = vshll.u32 %v4523, 16
        %v4687 = vrot.slane %v4685, 5
        %v4688 = vsel %vm291, %v4683, %v4687
        %v4689 = vshrl.u32 %v4523, 16
        %v4691 = vrot.slane %v4689, 4
        %v4692 = vor.u32 %v4691, %v4687
        %v4693 = vrot.slane %v4692, 4
        %v4695 = vshll.u32 %v4524, 16
        %v4697 = vrot.slane %v4695, 5
        %v4698 = vsel %vm291, %v4693, %v4697
        %v4700 = vshrl.u32 %v4525, 16
        %v4702 = vrot.slane %v4700, 4
        %v4703 = vshll.u32 %v4525, 16
        %v4705 = vrot.slane %v4703, 5
        %v4706 = vor.u32 %v4702, %v4705
        %v4707 = vrot.slane %v4706, 4
        %v4709 = vshll.u32 %v4526, 16
        %v4711 = vrot.slane %v4709, 5
        %v4712 = vsel %vm291, %v4707, %v4711
        %v4713 = vshrl.u32 %v4526, 16
        %v4715 = vrot.slane %v4713, 4
        %v4716 = vor.u32 %v4715, %v4711
        %v4717 = vrot.slane %v4716, 4
        %v4719 = vshll.u32 %v4527, 16
        %v4721 = vrot.slane %v4719, 5
        %v4722 = vsel %vm291, %v4717, %v4721
        %v4724 = vshrl.u32 %v4528, 16
        %v4726 = vrot.slane %v4724, 4
        %v4727 = vshll.u32 %v4528, 16
        %v4729 = vrot.slane %v4727, 5
        %v4730 = vor.u32 %v4726, %v4729
        %v4731 = vrot.slane %v4730, 4
        %v4733 = vshll.u32 %v4529, 16
        %v4735 = vrot.slane %v4733, 5
        %v4736 = vsel %vm291, %v4731, %v4735
        %v4737 = vshrl.u32 %v4529, 16
        %v4739 = vrot.slane %v4737, 4
        %v4740 = vor.u32 %v4739, %v4735
        %v4741 = vrot.slane %v4740, 4
        %v4743 = vshll.u32 %v4530, 16
        %v4745 = vrot.slane %v4743, 5
        %v4746 = vsel %vm291, %v4741, %v4745
        %v4748 = vshrl.u32 %v4531, 16
        %v4750 = vrot.slane %v4748, 4
        %v4751 = vshll.u32 %v4531, 16
        %v4753 = vrot.slane %v4751, 5
        %v4754 = vor.u32 %v4750, %v4753
        %v4755 = vrot.slane %v4754, 4
        %v4757 = vshll.u32 %v4532, 16
        %v4759 = vrot.slane %v4757, 5
        %v4760 = vsel %vm291, %v4755, %v4759
        %v4761 = vshrl.u32 %v4532, 16
        %v4763 = vrot.slane %v4761, 4
        %v4764 = vor.u32 %v4763, %v4759
        %v4765 = vrot.slane %v4764, 4
        %v4767 = vshll.u32 %v4533, 16
        %v4769 = vrot.slane %v4767, 5
        %v4770 = vsel %vm291, %v4765, %v4769
        %v4772 = vshrl.u32 %v4534, 16
        %v4774 = vrot.slane %v4772, 4
        %v4775 = vshll.u32 %v4534, 16
        %v4777 = vrot.slane %v4775, 5
        %v4778 = vor.u32 %v4774, %v4777
        %v4779 = vrot.slane %v4778, 4
        %v4781 = vshll.u32 %v4535, 16
        %v4783 = vrot.slane %v4781, 5
        %v4784 = vsel %vm291, %v4779, %v4783
        %v4785 = vshrl.u32 %v4535, 16
        %v4787 = vrot.slane %v4785, 4
        %v4788 = vor.u32 %v4787, %v4783
        %v4789 = vrot.slane %v4788, 4
        %v4791 = vshll.u32 %v4536, 16
        %v4793 = vrot.slane %v4791, 5
        %v4794 = vsel %vm291, %v4789, %v4793
        %v4796 = vshrl.u32 %v4537, 16
        %v4798 = vrot.slane %v4796, 4
        %v4799 = vshll.u32 %v4537, 16
        %v4801 = vrot.slane %v4799, 5
        %v4802 = vor.u32 %v4798, %v4801
        %v4803 = vrot.slane %v4802, 4
        %v4805 = vshll.u32 %v4538, 16
        %v4807 = vrot.slane %v4805, 5
        %v4808 = vsel %vm291, %v4803, %v4807
        %v4809 = vshrl.u32 %v4538, 16
        %v4811 = vrot.slane %v4809, 4
        %v4812 = vor.u32 %v4811, %v4807
        %v4813 = vrot.slane %v4812, 4
        %v4815 = vshll.u32 %v4539, 16
        %v4817 = vrot.slane %v4815, 5
        %v4818 = vsel %vm291, %v4813, %v4817
        %v4820 = vshrl.u32 %v4540, 16
        %v4822 = vrot.slane %v4820, 4
        %v4823 = vshll.u32 %v4540, 16
        %v4825 = vrot.slane %v4823, 5
        %v4826 = vor.u32 %v4822, %v4825
        %v4827 = vrot.slane %v4826, 4
        %v4829 = vshll.u32 %v4541, 16
        %v4831 = vrot.slane %v4829, 5
        %v4832 = vsel %vm291, %v4827, %v4831
        %v4833 = vshrl.u32 %v4541, 16
        %v4835 = vrot.slane %v4833, 4
        %v4836 = vor.u32 %v4835, %v4831
        %v4837 = vrot.slane %v4836, 4
        %v4839 = vshll.u32 %v4542, 16
        %v4841 = vrot.slane %v4839, 5
        %v4842 = vsel %vm291, %v4837, %v4841
        %v4844 = vshrl.u32 %v4543, 16
        %v4846 = vrot.slane %v4844, 4
        %v4847 = vshll.u32 %v4543, 16
        %v4849 = vrot.slane %v4847, 5
        %v4850 = vor.u32 %v4846, %v4849
        %v4851 = vrot.slane %v4850, 4
        %v4853 = vshll.u32 %v4544, 16
        %v4855 = vrot.slane %v4853, 5
        %v4856 = vsel %vm291, %v4851, %v4855
        %v4857 = vshrl.u32 %v4544, 16
        %v4859 = vrot.slane %v4857, 4
        %v4860 = vor.u32 %v4859, %v4855
        %v4861 = vrot.slane %v4860, 4
        %v4863 = vshll.u32 %v4545, 16
        %v4865 = vrot.slane %v4863, 5
        %v4866 = vsel %vm291, %v4861, %v4865
        %v4868 = vshrl.u32 %v4546, 16
        %v4870 = vrot.slane %v4868, 4
        %v4871 = vshll.u32 %v4546, 16
        %v4873 = vrot.slane %v4871, 5
        %v4874 = vor.u32 %v4870, %v4873
        %v4875 = vrot.slane %v4874, 4
        %v4877 = vshll.u32 %v4547, 16
        %v4879 = vrot.slane %v4877, 5
        %v4880 = vsel %vm291, %v4875, %v4879
        %v4881 = vshrl.u32 %v4547, 16
        %v4883 = vrot.slane %v4881, 4
        %v4884 = vor.u32 %v4883, %v4879
        %v4885 = vrot.slane %v4884, 4
        %v4887 = vshll.u32 %v4548, 16
        %v4889 = vrot.slane %v4887, 5
        %v4890 = vsel %vm291, %v4885, %v4889
        %v4892 = vshrl.u32 %v4549, 16
        %v4894 = vrot.slane %v4892, 4
        %v4895 = vshll.u32 %v4549, 16
        %v4897 = vrot.slane %v4895, 5
        %v4898 = vor.u32 %v4894, %v4897
        %v4899 = vrot.slane %v4898, 4
        %v4901 = vshll.u32 %v4550, 16
        %v4903 = vrot.slane %v4901, 5
        %v4904 = vsel %vm291, %v4899, %v4903
        %v4905 = vshrl.u32 %v4550, 16
        %v4907 = vrot.slane %v4905, 4
        %v4908 = vor.u32 %v4907, %v4903
        %v4909 = vrot.slane %v4908, 4
        %v4911 = vshll.u32 %v4551, 16
        %v4913 = vrot.slane %v4911, 5
        %v4914 = vsel %vm291, %v4909, %v4913
        %v4916 = vshrl.u32 %v4552, 16
        %v4918 = vrot.slane %v4916, 4
        %v4919 = vshll.u32 %v4552, 16
        %v4921 = vrot.slane %v4919, 5
        %v4922 = vor.u32 %v4918, %v4921
        %v4923 = vrot.slane %v4922, 4
        %v4925 = vshll.u32 %v4553, 16
        %v4927 = vrot.slane %v4925, 5
        %v4928 = vsel %vm291, %v4923, %v4927
        %v4929 = vshrl.u32 %v4553, 16
        %v4931 = vrot.slane %v4929, 4
        %v4932 = vor.u32 %v4931, %v4927
        %v4933 = vrot.slane %v4932, 4
        %v4935 = vshll.u32 %v4554, 16
        %v4937 = vrot.slane %v4935, 5
        %v4938 = vsel %vm291, %v4933, %v4937
        %s4939 = scalar_lea.vmem %s1, 476
        %v4940 = vld [vmem:[%s4939] sm:$0xf]
        %v4941 = vld [vmem:[%s4939 + $0x4] sm:$0xf]
        %v4942 = vld [vmem:[%s4939 + $0x8] sm:$0xf]
        %v4943 = vld [vmem:[%s4939 + $0xc] sm:$0xf]
        %v4944 = vld [vmem:[%s4939 + $0x10] sm:$0xf]
        %v4945 = vld [vmem:[%s4939 + $0x14] sm:$0xf]
        %v4946 = vld [vmem:[%s4939 + $0x18] sm:$0xf]
        %v4947 = vld [vmem:[%s4939 + $0x1c] sm:$0xf]
        %v4948 = vld [vmem:[%s4939 + $0x20] sm:$0xf]
        %v4949 = vld [vmem:[%s4939 + $0x24] sm:$0xf]
        %v4950 = vld [vmem:[%s4939 + $0x28] sm:$0xf]
        %v4951 = vld [vmem:[%s4939 + $0x2c] sm:$0xf]
        %v4952 = vld [vmem:[%s4939 + $0x30] sm:$0xf]
        %v4953 = vld [vmem:[%s4939 + $0x34] sm:$0xf]
        %v4954 = vld [vmem:[%s4939 + $0x38] sm:$0xf]
        %v4955 = vld [vmem:[%s4939 + $0x3c] sm:$0xf]
        %v4956 = vld [vmem:[%s4939 + $0x40] sm:$0x3]
        %v4957 = vunpack.c.l.b16 %v4568
        %v4958 = vunpack.c.h.b16 %v4568
        %v4959 = vunpack.c.l.b16 %v4578
        %v4960 = vunpack.c.h.b16 %v4578
        %v4961 = vunpack.c.l.b16 %v4592
        %v4962 = vunpack.c.h.b16 %v4592
        %v4963 = vunpack.c.l.b16 %v4602
        %v4964 = vunpack.c.h.b16 %v4602
        %v4965 = vunpack.c.l.b16 %v4616
        %v4966 = vunpack.c.h.b16 %v4616
        %v4967 = vunpack.c.l.b16 %v4626
        %v4968 = vunpack.c.h.b16 %v4626
        %v4969 = vunpack.c.l.b16 %v4640
        %v4970 = vunpack.c.h.b16 %v4640
        %v4971 = vunpack.c.l.b16 %v4650
        %v4972 = vunpack.c.h.b16 %v4650
        %v4973 = vunpack.c.l.b16 %v4664
        %v4974 = vunpack.c.h.b16 %v4664
        %v4975 = vunpack.c.l.b16 %v4674
        %v4976 = vunpack.c.h.b16 %v4674
        %v4977 = vunpack.c.l.b16 %v4688
        %v4978 = vunpack.c.h.b16 %v4688
        %v4979 = vunpack.c.l.b16 %v4698
        %v4980 = vunpack.c.h.b16 %v4698
        %v4981 = vunpack.c.l.b16 %v4712
        %v4982 = vunpack.c.h.b16 %v4712
        %v4983 = vunpack.c.l.b16 %v4722
        %v4984 = vunpack.c.h.b16 %v4722
        %v4985 = vunpack.c.l.b16 %v4736
        %v4986 = vunpack.c.h.b16 %v4736
        %v4987 = vunpack.c.l.b16 %v4746
        %v4988 = vunpack.c.h.b16 %v4746
        %v4989 = vunpack.c.l.b16 %v4760
        %v4990 = vunpack.c.h.b16 %v4760
        %v4991 = vunpack.c.l.b16 %v4770
        %v4992 = vunpack.c.h.b16 %v4770
        %v4993 = vunpack.c.l.b16 %v4784
        %v4994 = vunpack.c.h.b16 %v4784
        %v4995 = vunpack.c.l.b16 %v4794
        %v4996 = vunpack.c.h.b16 %v4794
        %v4997 = vunpack.c.l.b16 %v4808
        %v4998 = vunpack.c.h.b16 %v4808
        %v4999 = vunpack.c.l.b16 %v4818
        %v5000 = vunpack.c.h.b16 %v4818
        %v5001 = vunpack.c.l.b16 %v4832
        %v5002 = vunpack.c.h.b16 %v4832
        %v5003 = vunpack.c.l.b16 %v4842
        %v5004 = vunpack.c.h.b16 %v4842
        %v5005 = vunpack.c.l.b16 %v4856
        %v5006 = vunpack.c.h.b16 %v4856
        %v5007 = vunpack.c.l.b16 %v4866
        %v5008 = vunpack.c.h.b16 %v4866
        %v5009 = vunpack.c.l.b16 %v4880
        %v5010 = vunpack.c.h.b16 %v4880
        %v5011 = vunpack.c.l.b16 %v4890
        %v5012 = vunpack.c.h.b16 %v4890
        %v5013 = vunpack.c.l.b16 %v4904
        %v5014 = vunpack.c.h.b16 %v4904
        %v5015 = vunpack.c.l.b16 %v4914
        %v5016 = vunpack.c.h.b16 %v4914
        %v5017 = vunpack.c.l.b16 %v4928
        %v5018 = vunpack.c.h.b16 %v4928
        %v5019 = vunpack.c.l.b16 %v4938
        %v5020 = vunpack.c.h.b16 %v4938
        %v5021 = vpack.c.b16 %v4959, %v4957
        %v5022 = vpack.c.b16 %v4960, %v4958
        %v5023 = vpack.c.b16 %v4963, %v4961
        %v5024 = vpack.c.b16 %v4964, %v4962
        %v5025 = vpack.c.b16 %v4967, %v4965
        %v5026 = vpack.c.b16 %v4968, %v4966
        %v5027 = vpack.c.b16 %v4971, %v4969
        %v5028 = vpack.c.b16 %v4972, %v4970
        %v5029 = vpack.c.b16 %v4975, %v4973
        %v5030 = vpack.c.b16 %v4976, %v4974
        %v5031 = vpack.c.b16 %v4979, %v4977
        %v5032 = vpack.c.b16 %v4980, %v4978
        %v5033 = vpack.c.b16 %v4983, %v4981
        %v5034 = vpack.c.b16 %v4984, %v4982
        %v5035 = vpack.c.b16 %v4987, %v4985
        %v5036 = vpack.c.b16 %v4988, %v4986
        %v5037 = vpack.c.b16 %v4991, %v4989
        %v5038 = vpack.c.b16 %v4992, %v4990
        %v5039 = vpack.c.b16 %v4995, %v4993
        %v5040 = vpack.c.b16 %v4996, %v4994
        %v5041 = vpack.c.b16 %v4999, %v4997
        %v5042 = vpack.c.b16 %v5000, %v4998
        %v5043 = vpack.c.b16 %v5003, %v5001
        %v5044 = vpack.c.b16 %v5004, %v5002
        %v5045 = vpack.c.b16 %v5007, %v5005
        %v5046 = vpack.c.b16 %v5008, %v5006
        %v5047 = vpack.c.b16 %v5011, %v5009
        %v5048 = vpack.c.b16 %v5012, %v5010
        %v5049 = vpack.c.b16 %v5015, %v5013
        %v5050 = vpack.c.b16 %v5016, %v5014
        %v5051 = vpack.c.b16 %v5019, %v5017
        %v5052 = vpack.c.b16 %v5020, %v5018
        %v5086 = vunpack.c.l.b16 %v4940
        %v5087 = vunpack.c.l.b16 %v4941
        %v5088 = vunpack.c.l.b16 %v4942
        %v5089 = vunpack.c.l.b16 %v4943
        %v5090 = vunpack.c.l.b16 %v4944
        %v5091 = vunpack.c.l.b16 %v4945
        %v5092 = vunpack.c.l.b16 %v4946
        %v5093 = vunpack.c.l.b16 %v4947
        %v5094 = vunpack.c.l.b16 %v4948
        %v5095 = vunpack.c.l.b16 %v4949
        %v5096 = vunpack.c.l.b16 %v4950
        %v5097 = vunpack.c.l.b16 %v4951
        %v5098 = vunpack.c.l.b16 %v4952
        %v5099 = vunpack.c.l.b16 %v4953
        %v5100 = vunpack.c.l.b16 %v4954
        %v5101 = vunpack.c.l.b16 %v4955
        %v5102 = vunpack.c.l.b16 %v4956
        %v5103 = vpack.c.b16 %v5087, %v5086
        %v5104 = vpack.c.b16 %v5089, %v5088
        %v5105 = vpack.c.b16 %v5091, %v5090
        %v5106 = vpack.c.b16 %v5093, %v5092
        %v5107 = vpack.c.b16 %v5095, %v5094
        %v5108 = vpack.c.b16 %v5097, %v5096
        %v5109 = vpack.c.b16 %v5099, %v5098
        %v5110 = vpack.c.b16 %v5101, %v5100
        %v5111 = vpack.c.b16 %v5102, %v5102
        %v5121 = vsel %vm857, %v5022, 0
        %v5124 = vsel %vm857, %v5024, 0
        %v5127 = vsel %vm857, %v5026, 0
        %v5130 = vsel %vm857, %v5028, 0
        %v5133 = vsel %vm857, %v5030, 0
        %v5136 = vsel %vm857, %v5032, 0
        %v5139 = vsel %vm857, %v5034, 0
        %v5142 = vsel %vm857, %v5036, 0
        %v5145 = vsel %vm857, %v5038, 0
        %v5148 = vsel %vm857, %v5040, 0
        %v5151 = vsel %vm857, %v5042, 0
        %v5154 = vsel %vm857, %v5044, 0
        %v5157 = vsel %vm857, %v5046, 0
        %v5160 = vsel %vm857, %v5048, 0
        %v5163 = vsel %vm857, %v5050, 0
        %v5166 = vsel %vm857, %v5052, 0
        %v5169 = vand.u32 %v5111, %v909
        %5171 = vmatprep.subr.bf16.mxu0 0
        %5172 = vmatpush1.bf16.msra.mxu0 %v5103
        %5173 = vmatprep.subr.bf16.mxu0 0
        %5174 = vmatpush1.bf16.msra.mxu0 %v5104
        %5175 = vmatprep.subr.bf16.mxu0 0
        %5176 = vmatpush1.bf16.msra.mxu0 %v5105
        %5177 = vmatprep.subr.bf16.mxu0 0
        %5178 = vmatpush1.bf16.msra.mxu0 %v5106
        %5179 = vmatprep.subr.bf16.mxu0 0
        %5180 = vmatpush1.bf16.msra.mxu0 %v5107
        %5181 = vmatprep.subr.bf16.mxu0 0
        %5182 = vmatpush1.bf16.msra.mxu0 %v5108
        %5183 = vmatprep.subr.bf16.mxu0 0
        %5184 = vmatpush1.bf16.msra.mxu0 %v5109
        %5185 = vmatprep.subr.bf16.mxu0 0
        %5186 = vmatpush1.bf16.msra.mxu0 %v5110
        %5187 = vmatprep.subr.bf16.mxu0 0
        %5188 = vmatpush1.bf16.msra.mxu0 %v5169
        %5189 = vmatprep.subr.bf16.mxu0 0
        %5190 = vmatpush1.bf16.msra.mxu0 0
        %5191 = vmatprep.subr.bf16.mxu0 0
        %5192 = vmatpush1.bf16.msra.mxu0 0
        %5193 = vmatprep.subr.bf16.mxu0 0
        %5194 = vmatpush1.bf16.msra.mxu0 0
        %5195 = vmatprep.subr.bf16.mxu0 0
        %5196 = vmatpush1.bf16.msra.mxu0 0
        %5197 = vmatprep.subr.bf16.mxu0 0
        %5198 = vmatpush1.bf16.msra.mxu0 0
        %5199 = vmatprep.subr.bf16.mxu0 0
        %5200 = vmatpush1.bf16.msra.mxu0 0
        %5201 = vmatprep.subr.bf16.mxu0 0
        %5202 = vmatpush1.bf16.msra.mxu0 0
        %5203 = vmatprep.mubr.bf16.mxu0 %v5121
        %5204 = vmatmul.mubr.bf16.gmra.mrb[0].mxu0 %v5021
        %v5205 = vpop.f32.mrb[0].mxu0
        %v5206 = vadd.f32 0.0, %v5205
        %v5207 = vpop.f32.mrb[0].mxu0
        %v5208 = vpop.f32.mrb[0].mxu0
        %v5209 = vadd.f32 0.0, %v5208
        %v5210 = vpop.f32.mrb[0].mxu0
        %5211 = vmatprep.mubr.bf16.mxu0 %v5124
        %5212 = vmatmul.mubr.bf16.gmra.mrb[0].mxu0 %v5023
        %v5213 = vpop.f32.mrb[0].mxu0
        %v5214 = vadd.f32 0.0, %v5213
        %v5215 = vpop.f32.mrb[0].mxu0
        %v5216 = vpop.f32.mrb[0].mxu0
        %v5217 = vadd.f32 0.0, %v5216
        %v5218 = vpop.f32.mrb[0].mxu0
        %5219 = vmatprep.mubr.bf16.mxu0 %v5127
        %5220 = vmatmul.mubr.bf16.gmra.mrb[0].mxu0 %v5025
        %v5221 = vpop.f32.mrb[0].mxu0
        %v5222 = vadd.f32 0.0, %v5221
        %v5223 = vpop.f32.mrb[0].mxu0
        %v5224 = vpop.f32.mrb[0].mxu0
        %v5225 = vadd.f32 0.0, %v5224
        %v5226 = vpop.f32.mrb[0].mxu0
        %5227 = vmatprep.mubr.bf16.mxu0 %v5130
        %5228 = vmatmul.mubr.bf16.gmra.mrb[0].mxu0 %v5027
        %v5229 = vpop.f32.mrb[0].mxu0
        %v5230 = vadd.f32 0.0, %v5229
        %v5231 = vpop.f32.mrb[0].mxu0
        %v5232 = vpop.f32.mrb[0].mxu0
        %v5233 = vadd.f32 0.0, %v5232
        %v5234 = vpop.f32.mrb[0].mxu0
        %5235 = vmatprep.mubr.bf16.mxu0 %v5133
        %5236 = vmatmul.mubr.bf16.gmra.mrb[0].mxu0 %v5029
        %v5237 = vpop.f32.mrb[0].mxu0
        %v5238 = vadd.f32 0.0, %v5237
        %v5239 = vpop.f32.mrb[0].mxu0
        %v5240 = vpop.f32.mrb[0].mxu0
        %v5241 = vadd.f32 0.0, %v5240
        %v5242 = vpop.f32.mrb[0].mxu0
        %5243 = vmatprep.mubr.bf16.mxu0 %v5136
        %5244 = vmatmul.mubr.bf16.gmra.mrb[0].mxu0 %v5031
        %v5245 = vpop.f32.mrb[0].mxu0
        %v5246 = vadd.f32 0.0, %v5245
        %v5247 = vpop.f32.mrb[0].mxu0
        %v5248 = vpop.f32.mrb[0].mxu0
        %v5249 = vadd.f32 0.0, %v5248
        %v5250 = vpop.f32.mrb[0].mxu0
        %5251 = vmatprep.mubr.bf16.mxu0 %v5139
        %5252 = vmatmul.mubr.bf16.gmra.mrb[0].mxu0 %v5033
        %v5253 = vpop.f32.mrb[0].mxu0
        %v5254 = vadd.f32 0.0, %v5253
        %v5255 = vpop.f32.mrb[0].mxu0
        %v5256 = vpop.f32.mrb[0].mxu0
        %v5257 = vadd.f32 0.0, %v5256
        %v5258 = vpop.f32.mrb[0].mxu0
        %5259 = vmatprep.mubr.bf16.mxu0 %v5142
        %5260 = vmatmul.mubr.bf16.gmra.mrb[0].mxu0 %v5035
        %v5261 = vpop.f32.mrb[0].mxu0
        %v5262 = vadd.f32 0.0, %v5261
        %v5263 = vpop.f32.mrb[0].mxu0
        %v5264 = vpop.f32.mrb[0].mxu0
        %v5265 = vadd.f32 0.0, %v5264
        %v5266 = vpop.f32.mrb[0].mxu0
        %5267 = vmatprep.mubr.bf16.mxu0 %v5145
        %5268 = vmatmul.mubr.bf16.gmra.mrb[0].mxu0 %v5037
        %v5269 = vpop.f32.mrb[0].mxu0
        %v5270 = vadd.f32 0.0, %v5269
        %v5271 = vpop.f32.mrb[0].mxu0
        %v5272 = vpop.f32.mrb[0].mxu0
        %v5273 = vadd.f32 0.0, %v5272
        %v5274 = vpop.f32.mrb[0].mxu0
        %5275 = vmatprep.mubr.bf16.mxu0 %v5148
        %5276 = vmatmul.mubr.bf16.gmra.mrb[0].mxu0 %v5039
        %v5277 = vpop.f32.mrb[0].mxu0
        %v5278 = vadd.f32 0.0, %v5277
        %v5279 = vpop.f32.mrb[0].mxu0
        %v5280 = vpop.f32.mrb[0].mxu0
        %v5281 = vadd.f32 0.0, %v5280
        %v5282 = vpop.f32.mrb[0].mxu0
        %5283 = vmatprep.mubr.bf16.mxu0 %v5151
        %5284 = vmatmul.mubr.bf16.gmra.mrb[0].mxu0 %v5041
        %v5285 = vpop.f32.mrb[0].mxu0
        %v5286 = vadd.f32 0.0, %v5285
        %v5287 = vpop.f32.mrb[0].mxu0
        %v5288 = vpop.f32.mrb[0].mxu0
        %v5289 = vadd.f32 0.0, %v5288
        %v5290 = vpop.f32.mrb[0].mxu0
        %5291 = vmatprep.mubr.bf16.mxu0 %v5154
        %5292 = vmatmul.mubr.bf16.gmra.mrb[0].mxu0 %v5043
        %v5293 = vpop.f32.mrb[0].mxu0
        %v5294 = vadd.f32 0.0, %v5293
        %v5295 = vpop.f32.mrb[0].mxu0
        %v5296 = vpop.f32.mrb[0].mxu0
        %v5297 = vadd.f32 0.0, %v5296
        %v5298 = vpop.f32.mrb[0].mxu0
        %5299 = vmatprep.mubr.bf16.mxu0 %v5157
        %5300 = vmatmul.mubr.bf16.gmra.mrb[0].mxu0 %v5045
        %v5301 = vpop.f32.mrb[0].mxu0
        %v5302 = vadd.f32 0.0, %v5301
        %v5303 = vpop.f32.mrb[0].mxu0
        %v5304 = vpop.f32.mrb[0].mxu0
        %v5305 = vadd.f32 0.0, %v5304
        %v5306 = vpop.f32.mrb[0].mxu0
        %5307 = vmatprep.mubr.bf16.mxu0 %v5160
        %5308 = vmatmul.mubr.bf16.gmra.mrb[0].mxu0 %v5047
        %v5309 = vpop.f32.mrb[0].mxu0
        %v5310 = vadd.f32 0.0, %v5309
        %v5311 = vpop.f32.mrb[0].mxu0
        %v5312 = vpop.f32.mrb[0].mxu0
        %v5313 = vadd.f32 0.0, %v5312
        %v5314 = vpop.f32.mrb[0].mxu0
        %5315 = vmatprep.mubr.bf16.mxu0 %v5163
        %5316 = vmatmul.mubr.bf16.gmra.mrb[0].mxu0 %v5049
        %v5317 = vpop.f32.mrb[0].mxu0
        %v5318 = vadd.f32 0.0, %v5317
        %v5319 = vpop.f32.mrb[0].mxu0
        %v5320 = vpop.f32.mrb[0].mxu0
        %v5321 = vadd.f32 0.0, %v5320
        %v5322 = vpop.f32.mrb[0].mxu0
        %5323 = vmatprep.mubr.bf16.mxu0 %v5166
        %5324 = vmatmul.mubr.bf16.gmra.mrb[0].mxu0 %v5051
        %v5325 = vpop.f32.mrb[0].mxu0
        %v5326 = vadd.f32 0.0, %v5325
        %v5327 = vpop.f32.mrb[0].mxu0
        %v5328 = vpop.f32.mrb[0].mxu0
        %v5329 = vadd.f32 0.0, %v5328
        %v5330 = vpop.f32.mrb[0].mxu0
        %5331 = vdwg.mxu0
        %v5332 = vadd.f32 %v4475, %v5206
        %v5333 = vadd.f32 %v4476, %v5209
        %v5334 = vadd.f32 %v4477, %v5214
        %v5335 = vadd.f32 %v4478, %v5217
        %v5336 = vadd.f32 %v4479, %v5222
        %v5337 = vadd.f32 %v4480, %v5225
        %v5338 = vadd.f32 %v4481, %v5230
        %v5339 = vadd.f32 %v4482, %v5233
        %v5340 = vadd.f32 %v4483, %v5238
        %v5341 = vadd.f32 %v4484, %v5241
        %v5342 = vadd.f32 %v4485, %v5246
        %v5343 = vadd.f32 %v4486, %v5249
        %v5344 = vadd.f32 %v4487, %v5254
        %v5345 = vadd.f32 %v4488, %v5257
        %v5346 = vadd.f32 %v4489, %v5262
        %v5347 = vadd.f32 %v4490, %v5265
        %v5348 = vadd.f32 %v4491, %v5270
        %v5349 = vadd.f32 %v4492, %v5273
        %v5350 = vadd.f32 %v4493, %v5278
        %v5351 = vadd.f32 %v4494, %v5281
        %v5352 = vadd.f32 %v4495, %v5286
        %v5353 = vadd.f32 %v4496, %v5289
        %v5354 = vadd.f32 %v4497, %v5294
        %v5355 = vadd.f32 %v4498, %v5297
        %v5356 = vadd.f32 %v4499, %v5302
        %v5357 = vadd.f32 %v4500, %v5305
        %v5358 = vadd.f32 %v4501, %v5310
        %v5359 = vadd.f32 %v4502, %v5313
        %v5360 = vadd.f32 %v4503, %v5318
        %v5361 = vadd.f32 %v4504, %v5321
        %v5362 = vadd.f32 %v4505, %v5326
        %v5363 = vadd.f32 %v4506, %v5329
        %v5364 = vld [vmem:[%s4017] sm:$0xee]
        %v5365 = vld [vmem:[%s4017 + $0x18] sm:$0xee]
        %v5366 = vld [vmem:[%s4017 + $0x30] sm:$0xee]
        %v5367 = vld [vmem:[%s4017 + $0x48] sm:$0xee]
        %v5368 = vld [vmem:[%s4017 + $0x60] sm:$0xee]
        %v5369 = vld [vmem:[%s4017 + $0x78] sm:$0xee]
        %v5370 = vld [vmem:[%s4017 + $0x90] sm:$0xee]
        %v5371 = vld [vmem:[%s4017 + $0xa8] sm:$0xee]
        %v5372 = vld [vmem:[%s4017 + $0xc0] sm:$0xee]
        %v5373 = vld [vmem:[%s4017 + $0xd8] sm:$0xee]
        %v5374 = vld [vmem:[%s4017 + $0xf0] sm:$0xee]
        %v5375 = vld [vmem:[%s4017 + $0x108] sm:$0xee]
        %v5376 = vld [vmem:[%s4017 + $0x120] sm:$0xee]
        %v5377 = vld [vmem:[%s4017 + $0x138] sm:$0xee]
        %v5378 = vld [vmem:[%s4017 + $0x150] sm:$0xee]
        %v5379 = vld [vmem:[%s4017 + $0x168] sm:$0xee]
        %v5428 = vrot.slane %v5364, 5
        %v5429 = vrot.slane %v5428, 4
        %v5430 = vrot.slane %v4508, 5
        %v5431 = vsel %vm1531, %v5429, %v5430
        %v5432 = vrot.slane %v5430, 4
        %v5433 = vrot.slane %v4509, 5
        %v5434 = vsel %vm1531, %v5432, %v5433
        %v5435 = vrot.slane %v5365, 5
        %v5436 = vrot.slane %v5435, 4
        %v5437 = vrot.slane %v4511, 5
        %v5438 = vsel %vm1531, %v5436, %v5437
        %v5439 = vrot.slane %v5437, 4
        %v5440 = vrot.slane %v4512, 5
        %v5441 = vsel %vm1531, %v5439, %v5440
        %v5442 = vrot.slane %v5366, 5
        %v5443 = vrot.slane %v5442, 4
        %v5444 = vrot.slane %v4514, 5
        %v5445 = vsel %vm1531, %v5443, %v5444
        %v5446 = vrot.slane %v5444, 4
        %v5447 = vrot.slane %v4515, 5
        %v5448 = vsel %vm1531, %v5446, %v5447
        %v5449 = vrot.slane %v5367, 5
        %v5450 = vrot.slane %v5449, 4
        %v5451 = vrot.slane %v4517, 5
        %v5452 = vsel %vm1531, %v5450, %v5451
        %v5453 = vrot.slane %v5451, 4
        %v5454 = vrot.slane %v4518, 5
        %v5455 = vsel %vm1531, %v5453, %v5454
        %v5456 = vrot.slane %v5368, 5
        %v5457 = vrot.slane %v5456, 4
        %v5458 = vrot.slane %v4520, 5
        %v5459 = vsel %vm1531, %v5457, %v5458
        %v5460 = vrot.slane %v5458, 4
        %v5461 = vrot.slane %v4521, 5
        %v5462 = vsel %vm1531, %v5460, %v5461
        %v5463 = vrot.slane %v5369, 5
        %v5464 = vrot.slane %v5463, 4
        %v5465 = vrot.slane %v4523, 5
        %v5466 = vsel %vm1531, %v5464, %v5465
        %v5467 = vrot.slane %v5465, 4
        %v5468 = vrot.slane %v4524, 5
        %v5469 = vsel %vm1531, %v5467, %v5468
        %v5470 = vrot.slane %v5370, 5
        %v5471 = vrot.slane %v5470, 4
        %v5472 = vrot.slane %v4526, 5
        %v5473 = vsel %vm1531, %v5471, %v5472
        %v5474 = vrot.slane %v5472, 4
        %v5475 = vrot.slane %v4527, 5
        %v5476 = vsel %vm1531, %v5474, %v5475
        %v5477 = vrot.slane %v5371, 5
        %v5478 = vrot.slane %v5477, 4
        %v5479 = vrot.slane %v4529, 5
        %v5480 = vsel %vm1531, %v5478, %v5479
        %v5481 = vrot.slane %v5479, 4
        %v5482 = vrot.slane %v4530, 5
        %v5483 = vsel %vm1531, %v5481, %v5482
        %v5484 = vrot.slane %v5372, 5
        %v5485 = vrot.slane %v5484, 4
        %v5486 = vrot.slane %v4532, 5
        %v5487 = vsel %vm1531, %v5485, %v5486
        %v5488 = vrot.slane %v5486, 4
        %v5489 = vrot.slane %v4533, 5
        %v5490 = vsel %vm1531, %v5488, %v5489
        %v5491 = vrot.slane %v5373, 5
        %v5492 = vrot.slane %v5491, 4
        %v5493 = vrot.slane %v4535, 5
        %v5494 = vsel %vm1531, %v5492, %v5493
        %v5495 = vrot.slane %v5493, 4
        %v5496 = vrot.slane %v4536, 5
        %v5497 = vsel %vm1531, %v5495, %v5496
        %v5498 = vrot.slane %v5374, 5
        %v5499 = vrot.slane %v5498, 4
        %v5500 = vrot.slane %v4538, 5
        %v5501 = vsel %vm1531, %v5499, %v5500
        %v5502 = vrot.slane %v5500, 4
        %v5503 = vrot.slane %v4539, 5
        %v5504 = vsel %vm1531, %v5502, %v5503
        %v5505 = vrot.slane %v5375, 5
        %v5506 = vrot.slane %v5505, 4
        %v5507 = vrot.slane %v4541, 5
        %v5508 = vsel %vm1531, %v5506, %v5507
        %v5509 = vrot.slane %v5507, 4
        %v5510 = vrot.slane %v4542, 5
        %v5511 = vsel %vm1531, %v5509, %v5510
        %v5512 = vrot.slane %v5376, 5
        %v5513 = vrot.slane %v5512, 4
        %v5514 = vrot.slane %v4544, 5
        %v5515 = vsel %vm1531, %v5513, %v5514
        %v5516 = vrot.slane %v5514, 4
        %v5517 = vrot.slane %v4545, 5
        %v5518 = vsel %vm1531, %v5516, %v5517
        %v5519 = vrot.slane %v5377, 5
        %v5520 = vrot.slane %v5519, 4
        %v5521 = vrot.slane %v4547, 5
        %v5522 = vsel %vm1531, %v5520, %v5521
        %v5523 = vrot.slane %v5521, 4
        %v5524 = vrot.slane %v4548, 5
        %v5525 = vsel %vm1531, %v5523, %v5524
        %v5526 = vrot.slane %v5378, 5
        %v5527 = vrot.slane %v5526, 4
        %v5528 = vrot.slane %v4550, 5
        %v5529 = vsel %vm1531, %v5527, %v5528
        %v5530 = vrot.slane %v5528, 4
        %v5531 = vrot.slane %v4551, 5
        %v5532 = vsel %vm1531, %v5530, %v5531
        %v5533 = vrot.slane %v5379, 5
        %v5534 = vrot.slane %v5533, 4
        %v5535 = vrot.slane %v4553, 5
        %v5536 = vsel %vm1531, %v5534, %v5535
        %v5537 = vrot.slane %v5535, 4
        %v5538 = vrot.slane %v4554, 5
        %v5539 = vsel %vm1531, %v5537, %v5538
        %s5540 = scalar_lea.vmem %s1, 544
        %v5541 = vld [vmem:[%s5540] sm:$0xf]
        %v5542 = vld [vmem:[%s5540 + $0x4] sm:$0xf]
        %v5543 = vld [vmem:[%s5540 + $0x8] sm:$0xf]
        %v5544 = vld [vmem:[%s5540 + $0xc] sm:$0xf]
        %v5545 = vld [vmem:[%s5540 + $0x10] sm:$0xf]
        %v5546 = vld [vmem:[%s5540 + $0x14] sm:$0xf]
        %v5547 = vld [vmem:[%s5540 + $0x18] sm:$0xf]
        %v5548 = vld [vmem:[%s5540 + $0x1c] sm:$0xf]
        %v5549 = vld [vmem:[%s5540 + $0x20] sm:$0xf]
        %v5550 = vld [vmem:[%s5540 + $0x24] sm:$0xf]
        %v5551 = vld [vmem:[%s5540 + $0x28] sm:$0xf]
        %v5552 = vld [vmem:[%s5540 + $0x2c] sm:$0xf]
        %v5553 = vld [vmem:[%s5540 + $0x30] sm:$0xf]
        %v5554 = vld [vmem:[%s5540 + $0x34] sm:$0xf]
        %v5555 = vld [vmem:[%s5540 + $0x38] sm:$0xf]
        %v5556 = vld [vmem:[%s5540 + $0x3c] sm:$0xf]
        %v5557 = vld [vmem:[%s5540 + $0x40] sm:$0x3]
        %v5558 = vunpack.c.l.b16 %v5431
        %v5559 = vunpack.c.h.b16 %v5431
        %v5560 = vunpack.c.l.b16 %v5434
        %v5561 = vunpack.c.h.b16 %v5434
        %v5562 = vunpack.c.l.b16 %v5438
        %v5563 = vunpack.c.h.b16 %v5438
        %v5564 = vunpack.c.l.b16 %v5441
        %v5565 = vunpack.c.h.b16 %v5441
        %v5566 = vunpack.c.l.b16 %v5445
        %v5567 = vunpack.c.h.b16 %v5445
        %v5568 = vunpack.c.l.b16 %v5448
        %v5569 = vunpack.c.h.b16 %v5448
        %v5570 = vunpack.c.l.b16 %v5452
        %v5571 = vunpack.c.h.b16 %v5452
        %v5572 = vunpack.c.l.b16 %v5455
        %v5573 = vunpack.c.h.b16 %v5455
        %v5574 = vunpack.c.l.b16 %v5459
        %v5575 = vunpack.c.h.b16 %v5459
        %v5576 = vunpack.c.l.b16 %v5462
        %v5577 = vunpack.c.h.b16 %v5462
        %v5578 = vunpack.c.l.b16 %v5466
        %v5579 = vunpack.c.h.b16 %v5466
        %v5580 = vunpack.c.l.b16 %v5469
        %v5581 = vunpack.c.h.b16 %v5469
        %v5582 = vunpack.c.l.b16 %v5473
        %v5583 = vunpack.c.h.b16 %v5473
        %v5584 = vunpack.c.l.b16 %v5476
        %v5585 = vunpack.c.h.b16 %v5476
        %v5586 = vunpack.c.l.b16 %v5480
        %v5587 = vunpack.c.h.b16 %v5480
        %v5588 = vunpack.c.l.b16 %v5483
        %v5589 = vunpack.c.h.b16 %v5483
        %v5590 = vunpack.c.l.b16 %v5487
        %v5591 = vunpack.c.h.b16 %v5487
        %v5592 = vunpack.c.l.b16 %v5490
        %v5593 = vunpack.c.h.b16 %v5490
        %v5594 = vunpack.c.l.b16 %v5494
        %v5595 = vunpack.c.h.b16 %v5494
        %v5596 = vunpack.c.l.b16 %v5497
        %v5597 = vunpack.c.h.b16 %v5497
        %v5598 = vunpack.c.l.b16 %v5501
        %v5599 = vunpack.c.h.b16 %v5501
        %v5600 = vunpack.c.l.b16 %v5504
        %v5601 = vunpack.c.h.b16 %v5504
        %v5602 = vunpack.c.l.b16 %v5508
        %v5603 = vunpack.c.h.b16 %v5508
        %v5604 = vunpack.c.l.b16 %v5511
        %v5605 = vunpack.c.h.b16 %v5511
        %v5606 = vunpack.c.l.b16 %v5515
        %v5607 = vunpack.c.h.b16 %v5515
        %v5608 = vunpack.c.l.b16 %v5518
        %v5609 = vunpack.c.h.b16 %v5518
        %v5610 = vunpack.c.l.b16 %v5522
        %v5611 = vunpack.c.h.b16 %v5522
        %v5612 = vunpack.c.l.b16 %v5525
        %v5613 = vunpack.c.h.b16 %v5525
        %v5614 = vunpack.c.l.b16 %v5529
        %v5615 = vunpack.c.h.b16 %v5529
        %v5616 = vunpack.c.l.b16 %v5532
        %v5617 = vunpack.c.h.b16 %v5532
        %v5618 = vunpack.c.l.b16 %v5536
        %v5619 = vunpack.c.h.b16 %v5536
        %v5620 = vunpack.c.l.b16 %v5539
        %v5621 = vunpack.c.h.b16 %v5539
        %v5622 = vpack.c.b16 %v5560, %v5558
        %v5623 = vpack.c.b16 %v5561, %v5559
        %v5624 = vpack.c.b16 %v5564, %v5562
        %v5625 = vpack.c.b16 %v5565, %v5563
        %v5626 = vpack.c.b16 %v5568, %v5566
        %v5627 = vpack.c.b16 %v5569, %v5567
        %v5628 = vpack.c.b16 %v5572, %v5570
        %v5629 = vpack.c.b16 %v5573, %v5571
        %v5630 = vpack.c.b16 %v5576, %v5574
        %v5631 = vpack.c.b16 %v5577, %v5575
        %v5632 = vpack.c.b16 %v5580, %v5578
        %v5633 = vpack.c.b16 %v5581, %v5579
        %v5634 = vpack.c.b16 %v5584, %v5582
        %v5635 = vpack.c.b16 %v5585, %v5583
        %v5636 = vpack.c.b16 %v5588, %v5586
        %v5637 = vpack.c.b16 %v5589, %v5587
        %v5638 = vpack.c.b16 %v5592, %v5590
        %v5639 = vpack.c.b16 %v5593, %v5591
        %v5640 = vpack.c.b16 %v5596, %v5594
        %v5641 = vpack.c.b16 %v5597, %v5595
        %v5642 = vpack.c.b16 %v5600, %v5598
        %v5643 = vpack.c.b16 %v5601, %v5599
        %v5644 = vpack.c.b16 %v5604, %v5602
        %v5645 = vpack.c.b16 %v5605, %v5603
        %v5646 = vpack.c.b16 %v5608, %v5606
        %v5647 = vpack.c.b16 %v5609, %v5607
        %v5648 = vpack.c.b16 %v5612, %v5610
        %v5649 = vpack.c.b16 %v5613, %v5611
        %v5650 = vpack.c.b16 %v5616, %v5614
        %v5651 = vpack.c.b16 %v5617, %v5615
        %v5652 = vpack.c.b16 %v5620, %v5618
        %v5653 = vpack.c.b16 %v5621, %v5619
        %v5687 = vunpack.c.l.b16 %v5541
        %v5688 = vunpack.c.l.b16 %v5542
        %v5689 = vunpack.c.l.b16 %v5543
        %v5690 = vunpack.c.l.b16 %v5544
        %v5691 = vunpack.c.l.b16 %v5545
        %v5692 = vunpack.c.l.b16 %v5546
        %v5693 = vunpack.c.l.b16 %v5547
        %v5694 = vunpack.c.l.b16 %v5548
        %v5695 = vunpack.c.l.b16 %v5549
        %v5696 = vunpack.c.l.b16 %v5550
        %v5697 = vunpack.c.l.b16 %v5551
        %v5698 = vunpack.c.l.b16 %v5552
        %v5699 = vunpack.c.l.b16 %v5553
        %v5700 = vunpack.c.l.b16 %v5554
        %v5701 = vunpack.c.l.b16 %v5555
        %v5702 = vunpack.c.l.b16 %v5556
        %v5703 = vunpack.c.l.b16 %v5557
        %v5704 = vpack.c.b16 %v5688, %v5687
        %v5705 = vpack.c.b16 %v5690, %v5689
        %v5706 = vpack.c.b16 %v5692, %v5691
        %v5707 = vpack.c.b16 %v5694, %v5693
        %v5708 = vpack.c.b16 %v5696, %v5695
        %v5709 = vpack.c.b16 %v5698, %v5697
        %v5710 = vpack.c.b16 %v5700, %v5699
        %v5711 = vpack.c.b16 %v5702, %v5701
        %v5712 = vpack.c.b16 %v5703, %v5703
        %v5722 = vsel %vm857, %v5623, 0
        %v5725 = vsel %vm857, %v5625, 0
        %v5728 = vsel %vm857, %v5627, 0
        %v5731 = vsel %vm857, %v5629, 0
        %v5734 = vsel %vm857, %v5631, 0
        %v5737 = vsel %vm857, %v5633, 0
        %v5740 = vsel %vm857, %v5635, 0
        %v5743 = vsel %vm857, %v5637, 0
        %v5746 = vsel %vm857, %v5639, 0
        %v5749 = vsel %vm857, %v5641, 0
        %v5752 = vsel %vm857, %v5643, 0
        %v5755 = vsel %vm857, %v5645, 0
        %v5758 = vsel %vm857, %v5647, 0
        %v5761 = vsel %vm857, %v5649, 0
        %v5764 = vsel %vm857, %v5651, 0
        %v5767 = vsel %vm857, %v5653, 0
        %v5770 = vand.u32 %v5712, %v909
        %5772 = vmatprep.subr.bf16.mxu0 0
        %5773 = vmatpush1.bf16.msra.mxu0 %v5704
        %5774 = vmatprep.subr.bf16.mxu0 0
        %5775 = vmatpush1.bf16.msra.mxu0 %v5705
        %5776 = vmatprep.subr.bf16.mxu0 0
        %5777 = vmatpush1.bf16.msra.mxu0 %v5706
        %5778 = vmatprep.subr.bf16.mxu0 0
        %5779 = vmatpush1.bf16.msra.mxu0 %v5707
        %5780 = vmatprep.subr.bf16.mxu0 0
        %5781 = vmatpush1.bf16.msra.mxu0 %v5708
        %5782 = vmatprep.subr.bf16.mxu0 0
        %5783 = vmatpush1.bf16.msra.mxu0 %v5709
        %5784 = vmatprep.subr.bf16.mxu0 0
        %5785 = vmatpush1.bf16.msra.mxu0 %v5710
        %5786 = vmatprep.subr.bf16.mxu0 0
        %5787 = vmatpush1.bf16.msra.mxu0 %v5711
        %5788 = vmatprep.subr.bf16.mxu0 0
        %5789 = vmatpush1.bf16.msra.mxu0 %v5770
        %5790 = vmatprep.subr.bf16.mxu0 0
        %5791 = vmatpush1.bf16.msra.mxu0 0
        %5792 = vmatprep.subr.bf16.mxu0 0
        %5793 = vmatpush1.bf16.msra.mxu0 0
        %5794 = vmatprep.subr.bf16.mxu0 0
        %5795 = vmatpush1.bf16.msra.mxu0 0
        %5796 = vmatprep.subr.bf16.mxu0 0
        %5797 = vmatpush1.bf16.msra.mxu0 0
        %5798 = vmatprep.subr.bf16.mxu0 0
        %5799 = vmatpush1.bf16.msra.mxu0 0
        %5800 = vmatprep.subr.bf16.mxu0 0
        %5801 = vmatpush1.bf16.msra.mxu0 0
        %5802 = vmatprep.subr.bf16.mxu0 0
        %5803 = vmatpush1.bf16.msra.mxu0 0
        %5804 = vmatprep.mubr.bf16.mxu0 %v5722
        %5805 = vmatmul.mubr.bf16.gmra.mrb[0].mxu0 %v5622
        %v5806 = vpop.f32.mrb[0].mxu0
        %v5807 = vadd.f32 0.0, %v5806
        %v5808 = vpop.f32.mrb[0].mxu0
        %v5809 = vpop.f32.mrb[0].mxu0
        %v5810 = vadd.f32 0.0, %v5809
        %v5811 = vpop.f32.mrb[0].mxu0
        %5812 = vmatprep.mubr.bf16.mxu0 %v5725
        %5813 = vmatmul.mubr.bf16.gmra.mrb[0].mxu0 %v5624
        %v5814 = vpop.f32.mrb[0].mxu0
        %v5815 = vadd.f32 0.0, %v5814
        %v5816 = vpop.f32.mrb[0].mxu0
        %v5817 = vpop.f32.mrb[0].mxu0
        %v5818 = vadd.f32 0.0, %v5817
        %v5819 = vpop.f32.mrb[0].mxu0
        %5820 = vmatprep.mubr.bf16.mxu0 %v5728
        %5821 = vmatmul.mubr.bf16.gmra.mrb[0].mxu0 %v5626
        %v5822 = vpop.f32.mrb[0].mxu0
        %v5823 = vadd.f32 0.0, %v5822
        %v5824 = vpop.f32.mrb[0].mxu0
        %v5825 = vpop.f32.mrb[0].mxu0
        %v5826 = vadd.f32 0.0, %v5825
        %v5827 = vpop.f32.mrb[0].mxu0
        %5828 = vmatprep.mubr.bf16.mxu0 %v5731
        %5829 = vmatmul.mubr.bf16.gmra.mrb[0].mxu0 %v5628
        %v5830 = vpop.f32.mrb[0].mxu0
        %v5831 = vadd.f32 0.0, %v5830
        %v5832 = vpop.f32.mrb[0].mxu0
        %v5833 = vpop.f32.mrb[0].mxu0
        %v5834 = vadd.f32 0.0, %v5833
        %v5835 = vpop.f32.mrb[0].mxu0
        %5836 = vmatprep.mubr.bf16.mxu0 %v5734
        %5837 = vmatmul.mubr.bf16.gmra.mrb[0].mxu0 %v5630
        %v5838 = vpop.f32.mrb[0].mxu0
        %v5839 = vadd.f32 0.0, %v5838
        %v5840 = vpop.f32.mrb[0].mxu0
        %v5841 = vpop.f32.mrb[0].mxu0
        %v5842 = vadd.f32 0.0, %v5841
        %v5843 = vpop.f32.mrb[0].mxu0
        %5844 = vmatprep.mubr.bf16.mxu0 %v5737
        %5845 = vmatmul.mubr.bf16.gmra.mrb[0].mxu0 %v5632
        %v5846 = vpop.f32.mrb[0].mxu0
        %v5847 = vadd.f32 0.0, %v5846
        %v5848 = vpop.f32.mrb[0].mxu0
        %v5849 = vpop.f32.mrb[0].mxu0
        %v5850 = vadd.f32 0.0, %v5849
        %v5851 = vpop.f32.mrb[0].mxu0
        %5852 = vmatprep.mubr.bf16.mxu0 %v5740
        %5853 = vmatmul.mubr.bf16.gmra.mrb[0].mxu0 %v5634
        %v5854 = vpop.f32.mrb[0].mxu0
        %v5855 = vadd.f32 0.0, %v5854
        %v5856 = vpop.f32.mrb[0].mxu0
        %v5857 = vpop.f32.mrb[0].mxu0
        %v5858 = vadd.f32 0.0, %v5857
        %v5859 = vpop.f32.mrb[0].mxu0
        %5860 = vmatprep.mubr.bf16.mxu0 %v5743
        %5861 = vmatmul.mubr.bf16.gmra.mrb[0].mxu0 %v5636
        %v5862 = vpop.f32.mrb[0].mxu0
        %v5863 = vadd.f32 0.0, %v5862
        %v5864 = vpop.f32.mrb[0].mxu0
        %v5865 = vpop.f32.mrb[0].mxu0
        %v5866 = vadd.f32 0.0, %v5865
        %v5867 = vpop.f32.mrb[0].mxu0
        %5868 = vmatprep.mubr.bf16.mxu0 %v5746
        %5869 = vmatmul.mubr.bf16.gmra.mrb[0].mxu0 %v5638
        %v5870 = vpop.f32.mrb[0].mxu0
        %v5871 = vadd.f32 0.0, %v5870
        %v5872 = vpop.f32.mrb[0].mxu0
        %v5873 = vpop.f32.mrb[0].mxu0
        %v5874 = vadd.f32 0.0, %v5873
        %v5875 = vpop.f32.mrb[0].mxu0
        %5876 = vmatprep.mubr.bf16.mxu0 %v5749
        %5877 = vmatmul.mubr.bf16.gmra.mrb[0].mxu0 %v5640
        %v5878 = vpop.f32.mrb[0].mxu0
        %v5879 = vadd.f32 0.0, %v5878
        %v5880 = vpop.f32.mrb[0].mxu0
        %v5881 = vpop.f32.mrb[0].mxu0
        %v5882 = vadd.f32 0.0, %v5881
        %v5883 = vpop.f32.mrb[0].mxu0
        %5884 = vmatprep.mubr.bf16.mxu0 %v5752
        %5885 = vmatmul.mubr.bf16.gmra.mrb[0].mxu0 %v5642
        %v5886 = vpop.f32.mrb[0].mxu0
        %v5887 = vadd.f32 0.0, %v5886
        %v5888 = vpop.f32.mrb[0].mxu0
        %v5889 = vpop.f32.mrb[0].mxu0
        %v5890 = vadd.f32 0.0, %v5889
        %v5891 = vpop.f32.mrb[0].mxu0
        %5892 = vmatprep.mubr.bf16.mxu0 %v5755
        %5893 = vmatmul.mubr.bf16.gmra.mrb[0].mxu0 %v5644
        %v5894 = vpop.f32.mrb[0].mxu0
        %v5895 = vadd.f32 0.0, %v5894
        %v5896 = vpop.f32.mrb[0].mxu0
        %v5897 = vpop.f32.mrb[0].mxu0
        %v5898 = vadd.f32 0.0, %v5897
        %v5899 = vpop.f32.mrb[0].mxu0
        %5900 = vmatprep.mubr.bf16.mxu0 %v5758
        %5901 = vmatmul.mubr.bf16.gmra.mrb[0].mxu0 %v5646
        %v5902 = vpop.f32.mrb[0].mxu0
        %v5903 = vadd.f32 0.0, %v5902
        %v5904 = vpop.f32.mrb[0].mxu0
        %v5905 = vpop.f32.mrb[0].mxu0
        %v5906 = vadd.f32 0.0, %v5905
        %v5907 = vpop.f32.mrb[0].mxu0
        %5908 = vmatprep.mubr.bf16.mxu0 %v5761
        %5909 = vmatmul.mubr.bf16.gmra.mrb[0].mxu0 %v5648
        %v5910 = vpop.f32.mrb[0].mxu0
        %v5911 = vadd.f32 0.0, %v5910
        %v5912 = vpop.f32.mrb[0].mxu0
        %v5913 = vpop.f32.mrb[0].mxu0
        %v5914 = vadd.f32 0.0, %v5913
        %v5915 = vpop.f32.mrb[0].mxu0
        %5916 = vmatprep.mubr.bf16.mxu0 %v5764
        %5917 = vmatmul.mubr.bf16.gmra.mrb[0].mxu0 %v5650
        %v5918 = vpop.f32.mrb[0].mxu0
        %v5919 = vadd.f32 0.0, %v5918
        %v5920 = vpop.f32.mrb[0].mxu0
        %v5921 = vpop.f32.mrb[0].mxu0
        %v5922 = vadd.f32 0.0, %v5921
        %v5923 = vpop.f32.mrb[0].mxu0
        %5924 = vmatprep.mubr.bf16.mxu0 %v5767
        %5925 = vmatmul.mubr.bf16.gmra.mrb[0].mxu0 %v5652
        %v5926 = vpop.f32.mrb[0].mxu0
        %v5927 = vadd.f32 0.0, %v5926
        %v5928 = vpop.f32.mrb[0].mxu0
        %v5929 = vpop.f32.mrb[0].mxu0
        %v5930 = vadd.f32 0.0, %v5929
        %v5931 = vpop.f32.mrb[0].mxu0
        %5932 = vdwg.mxu0
        %v5933 = vadd.f32 %v5332, %v5807
        %v5934 = vadd.f32 %v5333, %v5810
        %v5935 = vadd.f32 %v5334, %v5815
        %v5936 = vadd.f32 %v5335, %v5818
        %v5937 = vadd.f32 %v5336, %v5823
        %v5938 = vadd.f32 %v5337, %v5826
        %v5939 = vadd.f32 %v5338, %v5831
        %v5940 = vadd.f32 %v5339, %v5834
        %v5941 = vadd.f32 %v5340, %v5839
        %v5942 = vadd.f32 %v5341, %v5842
        %v5943 = vadd.f32 %v5342, %v5847
        %v5944 = vadd.f32 %v5343, %v5850
        %v5945 = vadd.f32 %v5344, %v5855
        %v5946 = vadd.f32 %v5345, %v5858
        %v5947 = vadd.f32 %v5346, %v5863
        %v5948 = vadd.f32 %v5347, %v5866
        %v5949 = vadd.f32 %v5348, %v5871
        %v5950 = vadd.f32 %v5349, %v5874
        %v5951 = vadd.f32 %v5350, %v5879
        %v5952 = vadd.f32 %v5351, %v5882
        %v5953 = vadd.f32 %v5352, %v5887
        %v5954 = vadd.f32 %v5353, %v5890
        %v5955 = vadd.f32 %v5354, %v5895
        %v5956 = vadd.f32 %v5355, %v5898
        %v5957 = vadd.f32 %v5356, %v5903
        %v5958 = vadd.f32 %v5357, %v5906
        %v5959 = vadd.f32 %v5358, %v5911
        %v5960 = vadd.f32 %v5359, %v5914
        %v5961 = vadd.f32 %v5360, %v5919
        %v5962 = vadd.f32 %v5361, %v5922
        %v5963 = vadd.f32 %v5362, %v5927
        %v5964 = vadd.f32 %v5363, %v5930
        %v5965 = vld [vmem:[%s2] sm:$0x1]
        %v5967 = vlaneseq
        %v5968 = vshrl.u32 %v5967, 7
        %v5969 = vsub.s32 0, %v5968
        %v5970 = vrot.slane %v5965, %v5969
        %v5972 = vadd.f32 %v5933, %v5970
        %v5973 = vadd.f32 %v5934, %v5970
        %v5974 = vadd.f32 %v5935, %v5970
        %v5975 = vadd.f32 %v5936, %v5970
        %v5976 = vadd.f32 %v5937, %v5970
        %v5977 = vadd.f32 %v5938, %v5970
        %v5978 = vadd.f32 %v5939, %v5970
        %v5979 = vadd.f32 %v5940, %v5970
        %v5980 = vadd.f32 %v5941, %v5970
        %v5981 = vadd.f32 %v5942, %v5970
        %v5982 = vadd.f32 %v5943, %v5970
        %v5983 = vadd.f32 %v5944, %v5970
        %v5984 = vadd.f32 %v5945, %v5970
        %v5985 = vadd.f32 %v5946, %v5970
        %v5986 = vadd.f32 %v5947, %v5970
        %v5987 = vadd.f32 %v5948, %v5970
        %v5988 = vadd.f32 %v5949, %v5970
        %v5989 = vadd.f32 %v5950, %v5970
        %v5990 = vadd.f32 %v5951, %v5970
        %v5991 = vadd.f32 %v5952, %v5970
        %v5992 = vadd.f32 %v5953, %v5970
        %v5993 = vadd.f32 %v5954, %v5970
        %v5994 = vadd.f32 %v5955, %v5970
        %v5995 = vadd.f32 %v5956, %v5970
        %v5996 = vadd.f32 %v5957, %v5970
        %v5997 = vadd.f32 %v5958, %v5970
        %v5998 = vadd.f32 %v5959, %v5970
        %v5999 = vadd.f32 %v5960, %v5970
        %v6000 = vadd.f32 %v5961, %v5970
        %v6001 = vadd.f32 %v5962, %v5970
        %v6002 = vadd.f32 %v5963, %v5970
        %v6003 = vadd.f32 %v5964, %v5970
        %vm6004 = vcmp.ge.f32.partialorder %v5972, 0.0
        %vm6005 = vcmp.ge.f32.partialorder %v5973, 0.0
        %vm6006 = vcmp.ge.f32.partialorder %v5974, 0.0
        %vm6007 = vcmp.ge.f32.partialorder %v5975, 0.0
        %vm6008 = vcmp.ge.f32.partialorder %v5976, 0.0
        %vm6009 = vcmp.ge.f32.partialorder %v5977, 0.0
        %vm6010 = vcmp.ge.f32.partialorder %v5978, 0.0
        %vm6011 = vcmp.ge.f32.partialorder %v5979, 0.0
        %vm6012 = vcmp.ge.f32.partialorder %v5980, 0.0
        %vm6013 = vcmp.ge.f32.partialorder %v5981, 0.0
        %vm6014 = vcmp.ge.f32.partialorder %v5982, 0.0
        %vm6015 = vcmp.ge.f32.partialorder %v5983, 0.0
        %vm6016 = vcmp.ge.f32.partialorder %v5984, 0.0
        %vm6017 = vcmp.ge.f32.partialorder %v5985, 0.0
        %vm6018 = vcmp.ge.f32.partialorder %v5986, 0.0
        %vm6019 = vcmp.ge.f32.partialorder %v5987, 0.0
        %vm6020 = vcmp.ge.f32.partialorder %v5988, 0.0
        %vm6021 = vcmp.ge.f32.partialorder %v5989, 0.0
        %vm6022 = vcmp.ge.f32.partialorder %v5990, 0.0
        %vm6023 = vcmp.ge.f32.partialorder %v5991, 0.0
        %vm6024 = vcmp.ge.f32.partialorder %v5992, 0.0
        %vm6025 = vcmp.ge.f32.partialorder %v5993, 0.0
        %vm6026 = vcmp.ge.f32.partialorder %v5994, 0.0
        %vm6027 = vcmp.ge.f32.partialorder %v5995, 0.0
        %vm6028 = vcmp.ge.f32.partialorder %v5996, 0.0
        %vm6029 = vcmp.ge.f32.partialorder %v5997, 0.0
        %vm6030 = vcmp.ge.f32.partialorder %v5998, 0.0
        %vm6031 = vcmp.ge.f32.partialorder %v5999, 0.0
        %vm6032 = vcmp.ge.f32.partialorder %v6000, 0.0
        %vm6033 = vcmp.ge.f32.partialorder %v6001, 0.0
        %vm6034 = vcmp.ge.f32.partialorder %v6002, 0.0
        %vm6035 = vcmp.ge.f32.partialorder %v6003, 0.0
        %v6036 = vmul.f32 %v5972, 0.2
        %v6037 = vmul.f32 %v5973, 0.2
        %v6038 = vmul.f32 %v5974, 0.2
        %v6039 = vmul.f32 %v5975, 0.2
        %v6040 = vmul.f32 %v5976, 0.2
        %v6041 = vmul.f32 %v5977, 0.2
        %v6042 = vmul.f32 %v5978, 0.2
        %v6043 = vmul.f32 %v5979, 0.2
        %v6044 = vmul.f32 %v5980, 0.2
        %v6045 = vmul.f32 %v5981, 0.2
        %v6046 = vmul.f32 %v5982, 0.2
        %v6047 = vmul.f32 %v5983, 0.2
        %v6048 = vmul.f32 %v5984, 0.2
        %v6049 = vmul.f32 %v5985, 0.2
        %v6050 = vmul.f32 %v5986, 0.2
        %v6051 = vmul.f32 %v5987, 0.2
        %v6052 = vmul.f32 %v5988, 0.2
        %v6053 = vmul.f32 %v5989, 0.2
        %v6054 = vmul.f32 %v5990, 0.2
        %v6055 = vmul.f32 %v5991, 0.2
        %v6056 = vmul.f32 %v5992, 0.2
        %v6057 = vmul.f32 %v5993, 0.2
        %v6058 = vmul.f32 %v5994, 0.2
        %v6059 = vmul.f32 %v5995, 0.2
        %v6060 = vmul.f32 %v5996, 0.2
        %v6061 = vmul.f32 %v5997, 0.2
        %v6062 = vmul.f32 %v5998, 0.2
        %v6063 = vmul.f32 %v5999, 0.2
        %v6064 = vmul.f32 %v6000, 0.2
        %v6065 = vmul.f32 %v6001, 0.2
        %v6066 = vmul.f32 %v6002, 0.2
        %v6067 = vmul.f32 %v6003, 0.2
        %v6068 = vsel %vm6004, %v5972, %v6036
        %v6069 = vsel %vm6005, %v5973, %v6037
        %v6070 = vsel %vm6006, %v5974, %v6038
        %v6071 = vsel %vm6007, %v5975, %v6039
        %v6072 = vsel %vm6008, %v5976, %v6040
        %v6073 = vsel %vm6009, %v5977, %v6041
        %v6074 = vsel %vm6010, %v5978, %v6042
        %v6075 = vsel %vm6011, %v5979, %v6043
        %v6076 = vsel %vm6012, %v5980, %v6044
        %v6077 = vsel %vm6013, %v5981, %v6045
        %v6078 = vsel %vm6014, %v5982, %v6046
        %v6079 = vsel %vm6015, %v5983, %v6047
        %v6080 = vsel %vm6016, %v5984, %v6048
        %v6081 = vsel %vm6017, %v5985, %v6049
        %v6082 = vsel %vm6018, %v5986, %v6050
        %v6083 = vsel %vm6019, %v5987, %v6051
        %v6084 = vsel %vm6020, %v5988, %v6052
        %v6085 = vsel %vm6021, %v5989, %v6053
        %v6086 = vsel %vm6022, %v5990, %v6054
        %v6087 = vsel %vm6023, %v5991, %v6055
        %v6088 = vsel %vm6024, %v5992, %v6056
        %v6089 = vsel %vm6025, %v5993, %v6057
        %v6090 = vsel %vm6026, %v5994, %v6058
        %v6091 = vsel %vm6027, %v5995, %v6059
        %v6092 = vsel %vm6028, %v5996, %v6060
        %v6093 = vsel %vm6029, %v5997, %v6061
        %v6094 = vsel %vm6030, %v5998, %v6062
        %v6095 = vsel %vm6031, %v5999, %v6063
        %v6096 = vsel %vm6032, %v6000, %v6064
        %v6097 = vsel %vm6033, %v6001, %v6065
        %v6098 = vsel %vm6034, %v6002, %v6066
        %v6099 = vsel %vm6035, %v6003, %v6067
        %v6100 = vpack.c.bf16 %v6069, %v6068
        %v6101 = vpack.c.bf16 %v6071, %v6070
        %v6102 = vpack.c.bf16 %v6073, %v6072
        %v6103 = vpack.c.bf16 %v6075, %v6074
        %v6104 = vpack.c.bf16 %v6077, %v6076
        %v6105 = vpack.c.bf16 %v6079, %v6078
        %v6106 = vpack.c.bf16 %v6081, %v6080
        %v6107 = vpack.c.bf16 %v6083, %v6082
        %v6108 = vpack.c.bf16 %v6085, %v6084
        %v6109 = vpack.c.bf16 %v6087, %v6086
        %v6110 = vpack.c.bf16 %v6089, %v6088
        %v6111 = vpack.c.bf16 %v6091, %v6090
        %v6112 = vpack.c.bf16 %v6093, %v6092
        %v6113 = vpack.c.bf16 %v6095, %v6094
        %v6114 = vpack.c.bf16 %v6097, %v6096
        %v6115 = vpack.c.bf16 %v6099, %v6098
        %v6116 = vld [vmem:[%s3] sm:$0xf]
        %v6117 = vld [vmem:[%s3 + $0x4] sm:$0xf]
        %v6118 = vld [vmem:[%s3 + $0x8] sm:$0xf]
        %v6119 = vld [vmem:[%s3 + $0xc] sm:$0xf]
        %v6120 = vld [vmem:[%s3 + $0x10] sm:$0xf]
        %v6121 = vld [vmem:[%s3 + $0x14] sm:$0xf]
        %v6122 = vld [vmem:[%s3 + $0x18] sm:$0xf]
        %v6123 = vld [vmem:[%s3 + $0x1c] sm:$0xf]
        %v6124 = vld [vmem:[%s4] sm:$0x1]
        %v6126 = vlaneseq
        %v6127 = vshrl.u32 %v6126, 7
        %v6128 = vsub.s32 0, %v6127
        %v6129 = vrot.slane %v6124, %v6128
        %v6139 = vunpack.c.l.b16 %v6116
        %v6140 = vunpack.c.l.b16 %v6117
        %v6141 = vunpack.c.l.b16 %v6118
        %v6142 = vunpack.c.l.b16 %v6119
        %v6143 = vunpack.c.l.b16 %v6120
        %v6144 = vunpack.c.l.b16 %v6121
        %v6145 = vunpack.c.l.b16 %v6122
        %v6146 = vunpack.c.l.b16 %v6123
        %v6147 = vpack.c.b16 %v6140, %v6139
        %v6148 = vpack.c.b16 %v6142, %v6141
        %v6149 = vpack.c.b16 %v6144, %v6143
        %v6150 = vpack.c.b16 %v6146, %v6145
        %vm6155 = vcmask 523264
        %v6157 = vsel %vm6155, %v6100, 0
        %v6160 = vsel %vm6155, %v6101, 0
        %v6163 = vsel %vm6155, %v6102, 0
        %v6166 = vsel %vm6155, %v6103, 0
        %v6169 = vsel %vm6155, %v6104, 0
        %v6172 = vsel %vm6155, %v6105, 0
        %v6175 = vsel %vm6155, %v6106, 0
        %v6178 = vsel %vm6155, %v6107, 0
        %v6181 = vsel %vm6155, %v6108, 0
        %v6184 = vsel %vm6155, %v6109, 0
        %v6187 = vsel %vm6155, %v6110, 0
        %v6190 = vsel %vm6155, %v6111, 0
        %v6193 = vsel %vm6155, %v6112, 0
        %v6196 = vsel %vm6155, %v6113, 0
        %v6199 = vsel %vm6155, %v6114, 0
        %v6202 = vsel %vm6155, %v6115, 0
        %6204 = vmatprep.subr.bf16.mxu0 0
        %6205 = vmatpush1.bf16.msra.mxu0 %v6147
        %6206 = vmatprep.subr.bf16.mxu0 0
        %6207 = vmatpush1.bf16.msra.mxu0 %v6148
        %6208 = vmatprep.subr.bf16.mxu0 0
        %6209 = vmatpush1.bf16.msra.mxu0 %v6149
        %6210 = vmatprep.subr.bf16.mxu0 0
        %6211 = vmatpush1.bf16.msra.mxu0 %v6150
        %6212 = vmatprep.subr.bf16.mxu0 0
        %6213 = vmatpush1.bf16.msra.mxu0 0
        %6214 = vmatprep.subr.bf16.mxu0 0
        %6215 = vmatpush1.bf16.msra.mxu0 0
        %6216 = vmatprep.subr.bf16.mxu0 0
        %6217 = vmatpush1.bf16.msra.mxu0 0
        %6218 = vmatprep.subr.bf16.mxu0 0
        %6219 = vmatpush1.bf16.msra.mxu0 0
        %6220 = vmatprep.subr.bf16.mxu0 0
        %6221 = vmatpush1.bf16.msra.mxu0 0
        %6222 = vmatprep.subr.bf16.mxu0 0
        %6223 = vmatpush1.bf16.msra.mxu0 0
        %6224 = vmatprep.subr.bf16.mxu0 0
        %6225 = vmatpush1.bf16.msra.mxu0 0
        %6226 = vmatprep.subr.bf16.mxu0 0
        %6227 = vmatpush1.bf16.msra.mxu0 0
        %6228 = vmatprep.subr.bf16.mxu0 0
        %6229 = vmatpush1.bf16.msra.mxu0 0
        %6230 = vmatprep.subr.bf16.mxu0 0
        %6231 = vmatpush1.bf16.msra.mxu0 0
        %6232 = vmatprep.subr.bf16.mxu0 0
        %6233 = vmatpush1.bf16.msra.mxu0 0
        %6234 = vmatprep.subr.bf16.mxu0 0
        %6235 = vmatpush1.bf16.msra.mxu0 0
        %6236 = vmatprep.mubr.bf16.mxu0 0
        %6237 = vmatmul.mubr.bf16.gmra.mrb[0].mxu0 %v6157
        %v6238 = vpop.f32.mrb[0].mxu0
        %v6239 = vadd.f32 %v6129, %v6238
        %v6240 = vpop.f32.mrb[0].mxu0
        %v6241 = vpop.f32.mrb[0].mxu0
        %v6242 = vadd.f32 %v6129, %v6241
        %v6243 = vpop.f32.mrb[0].mxu0
        %6244 = vmatprep.mubr.bf16.mxu0 0
        %6245 = vmatmul.mubr.bf16.gmra.mrb[0].mxu0 %v6160
        %v6246 = vpop.f32.mrb[0].mxu0
        %v6247 = vadd.f32 %v6129, %v6246
        %v6248 = vpop.f32.mrb[0].mxu0
        %v6249 = vpop.f32.mrb[0].mxu0
        %v6250 = vadd.f32 %v6129, %v6249
        %v6251 = vpop.f32.mrb[0].mxu0
        %6252 = vmatprep.mubr.bf16.mxu0 0
        %6253 = vmatmul.mubr.bf16.gmra.mrb[0].mxu0 %v6163
        %v6254 = vpop.f32.mrb[0].mxu0
        %v6255 = vadd.f32 %v6129, %v6254
        %v6256 = vpop.f32.mrb[0].mxu0
        %v6257 = vpop.f32.mrb[0].mxu0
        %v6258 = vadd.f32 %v6129, %v6257
        %v6259 = vpop.f32.mrb[0].mxu0
        %6260 = vmatprep.mubr.bf16.mxu0 0
        %6261 = vmatmul.mubr.bf16.gmra.mrb[0].mxu0 %v6166
        %v6262 = vpop.f32.mrb[0].mxu0
        %v6263 = vadd.f32 %v6129, %v6262
        %v6264 = vpop.f32.mrb[0].mxu0
        %v6265 = vpop.f32.mrb[0].mxu0
        %v6266 = vadd.f32 %v6129, %v6265
        %v6267 = vpop.f32.mrb[0].mxu0
        %6268 = vmatprep.mubr.bf16.mxu0 0
        %6269 = vmatmul.mubr.bf16.gmra.mrb[0].mxu0 %v6169
        %v6270 = vpop.f32.mrb[0].mxu0
        %v6271 = vadd.f32 %v6129, %v6270
        %v6272 = vpop.f32.mrb[0].mxu0
        %v6273 = vpop.f32.mrb[0].mxu0
        %v6274 = vadd.f32 %v6129, %v6273
        %v6275 = vpop.f32.mrb[0].mxu0
        %6276 = vmatprep.mubr.bf16.mxu0 0
        %6277 = vmatmul.mubr.bf16.gmra.mrb[0].mxu0 %v6172
        %v6278 = vpop.f32.mrb[0].mxu0
        %v6279 = vadd.f32 %v6129, %v6278
        %v6280 = vpop.f32.mrb[0].mxu0
        %v6281 = vpop.f32.mrb[0].mxu0
        %v6282 = vadd.f32 %v6129, %v6281
        %v6283 = vpop.f32.mrb[0].mxu0
        %6284 = vmatprep.mubr.bf16.mxu0 0
        %6285 = vmatmul.mubr.bf16.gmra.mrb[0].mxu0 %v6175
        %v6286 = vpop.f32.mrb[0].mxu0
        %v6287 = vadd.f32 %v6129, %v6286
        %v6288 = vpop.f32.mrb[0].mxu0
        %v6289 = vpop.f32.mrb[0].mxu0
        %v6290 = vadd.f32 %v6129, %v6289
        %v6291 = vpop.f32.mrb[0].mxu0
        %6292 = vmatprep.mubr.bf16.mxu0 0
        %6293 = vmatmul.mubr.bf16.gmra.mrb[0].mxu0 %v6178
        %v6294 = vpop.f32.mrb[0].mxu0
        %v6295 = vadd.f32 %v6129, %v6294
        %v6296 = vpop.f32.mrb[0].mxu0
        %v6297 = vpop.f32.mrb[0].mxu0
        %v6298 = vadd.f32 %v6129, %v6297
        %v6299 = vpop.f32.mrb[0].mxu0
        %6300 = vmatprep.mubr.bf16.mxu0 0
        %6301 = vmatmul.mubr.bf16.gmra.mrb[0].mxu0 %v6181
        %v6302 = vpop.f32.mrb[0].mxu0
        %v6303 = vadd.f32 %v6129, %v6302
        %v6304 = vpop.f32.mrb[0].mxu0
        %v6305 = vpop.f32.mrb[0].mxu0
        %v6306 = vadd.f32 %v6129, %v6305
        %v6307 = vpop.f32.mrb[0].mxu0
        %6308 = vmatprep.mubr.bf16.mxu0 0
        %6309 = vmatmul.mubr.bf16.gmra.mrb[0].mxu0 %v6184
        %v6310 = vpop.f32.mrb[0].mxu0
        %v6311 = vadd.f32 %v6129, %v6310
        %v6312 = vpop.f32.mrb[0].mxu0
        %v6313 = vpop.f32.mrb[0].mxu0
        %v6314 = vadd.f32 %v6129, %v6313
        %v6315 = vpop.f32.mrb[0].mxu0
        %6316 = vmatprep.mubr.bf16.mxu0 0
        %6317 = vmatmul.mubr.bf16.gmra.mrb[0].mxu0 %v6187
        %v6318 = vpop.f32.mrb[0].mxu0
        %v6319 = vadd.f32 %v6129, %v6318
        %v6320 = vpop.f32.mrb[0].mxu0
        %v6321 = vpop.f32.mrb[0].mxu0
        %v6322 = vadd.f32 %v6129, %v6321
        %v6323 = vpop.f32.mrb[0].mxu0
        %6324 = vmatprep.mubr.bf16.mxu0 0
        %6325 = vmatmul.mubr.bf16.gmra.mrb[0].mxu0 %v6190
        %v6326 = vpop.f32.mrb[0].mxu0
        %v6327 = vadd.f32 %v6129, %v6326
        %v6328 = vpop.f32.mrb[0].mxu0
        %v6329 = vpop.f32.mrb[0].mxu0
        %v6330 = vadd.f32 %v6129, %v6329
        %v6331 = vpop.f32.mrb[0].mxu0
        %6332 = vmatprep.mubr.bf16.mxu0 0
        %6333 = vmatmul.mubr.bf16.gmra.mrb[0].mxu0 %v6193
        %v6334 = vpop.f32.mrb[0].mxu0
        %v6335 = vadd.f32 %v6129, %v6334
        %v6336 = vpop.f32.mrb[0].mxu0
        %v6337 = vpop.f32.mrb[0].mxu0
        %v6338 = vadd.f32 %v6129, %v6337
        %v6339 = vpop.f32.mrb[0].mxu0
        %6340 = vmatprep.mubr.bf16.mxu0 0
        %6341 = vmatmul.mubr.bf16.gmra.mrb[0].mxu0 %v6196
        %v6342 = vpop.f32.mrb[0].mxu0
        %v6343 = vadd.f32 %v6129, %v6342
        %v6344 = vpop.f32.mrb[0].mxu0
        %v6345 = vpop.f32.mrb[0].mxu0
        %v6346 = vadd.f32 %v6129, %v6345
        %v6347 = vpop.f32.mrb[0].mxu0
        %6348 = vmatprep.mubr.bf16.mxu0 0
        %6349 = vmatmul.mubr.bf16.gmra.mrb[0].mxu0 %v6199
        %v6350 = vpop.f32.mrb[0].mxu0
        %v6351 = vadd.f32 %v6129, %v6350
        %v6352 = vpop.f32.mrb[0].mxu0
        %v6353 = vpop.f32.mrb[0].mxu0
        %v6354 = vadd.f32 %v6129, %v6353
        %v6355 = vpop.f32.mrb[0].mxu0
        %6356 = vmatprep.mubr.bf16.mxu0 0
        %6357 = vmatmul.mubr.bf16.gmra.mrb[0].mxu0 %v6202
        %v6358 = vpop.f32.mrb[0].mxu0
        %v6359 = vadd.f32 %v6129, %v6358
        %v6360 = vpop.f32.mrb[0].mxu0
        %v6361 = vpop.f32.mrb[0].mxu0
        %v6362 = vadd.f32 %v6129, %v6361
        %v6363 = vpop.f32.mrb[0].mxu0
        %6364 = vdwg.mxu0
        %6365 = vst.msk [vmem:[%s217] sm:$0xff] %vm6155, %v6239
        %6366 = vst.msk [vmem:[%s217 + $0x8] sm:$0xff] %vm6155, %v6242
        %6367 = vst.msk [vmem:[%s217 + $0x10] sm:$0xff] %vm6155, %v6247
        %6368 = vst.msk [vmem:[%s217 + $0x18] sm:$0xff] %vm6155, %v6250
        %6369 = vst.msk [vmem:[%s217 + $0x20] sm:$0xff] %vm6155, %v6255
        %6370 = vst.msk [vmem:[%s217 + $0x28] sm:$0xff] %vm6155, %v6258
        %6371 = vst.msk [vmem:[%s217 + $0x30] sm:$0xff] %vm6155, %v6263
        %6372 = vst.msk [vmem:[%s217 + $0x38] sm:$0xff] %vm6155, %v6266
        %6373 = vst.msk [vmem:[%s217 + $0x40] sm:$0xff] %vm6155, %v6271
        %6374 = vst.msk [vmem:[%s217 + $0x48] sm:$0xff] %vm6155, %v6274
        %6375 = vst.msk [vmem:[%s217 + $0x50] sm:$0xff] %vm6155, %v6279
        %6376 = vst.msk [vmem:[%s217 + $0x58] sm:$0xff] %vm6155, %v6282
        %6377 = vst.msk [vmem:[%s217 + $0x60] sm:$0xff] %vm6155, %v6287
        %6378 = vst.msk [vmem:[%s217 + $0x68] sm:$0xff] %vm6155, %v6290
        %6379 = vst.msk [vmem:[%s217 + $0x70] sm:$0xff] %vm6155, %v6295
        %6380 = vst.msk [vmem:[%s217 + $0x78] sm:$0xff] %vm6155, %v6298
        %6381 = vst.msk [vmem:[%s217 + $0x80] sm:$0xff] %vm6155, %v6303
        %6382 = vst.msk [vmem:[%s217 + $0x88] sm:$0xff] %vm6155, %v6306
        %6383 = vst.msk [vmem:[%s217 + $0x90] sm:$0xff] %vm6155, %v6311
        %6384 = vst.msk [vmem:[%s217 + $0x98] sm:$0xff] %vm6155, %v6314
        %6385 = vst.msk [vmem:[%s217 + $0xa0] sm:$0xff] %vm6155, %v6319
        %6386 = vst.msk [vmem:[%s217 + $0xa8] sm:$0xff] %vm6155, %v6322
        %6387 = vst.msk [vmem:[%s217 + $0xb0] sm:$0xff] %vm6155, %v6327
        %6388 = vst.msk [vmem:[%s217 + $0xb8] sm:$0xff] %vm6155, %v6330
        %6389 = vst.msk [vmem:[%s217 + $0xc0] sm:$0xff] %vm6155, %v6335
        %6390 = vst.msk [vmem:[%s217 + $0xc8] sm:$0xff] %vm6155, %v6338
        %6391 = vst.msk [vmem:[%s217 + $0xd0] sm:$0xff] %vm6155, %v6343
        %6392 = vst.msk [vmem:[%s217 + $0xd8] sm:$0xff] %vm6155, %v6346
        %6393 = vst.msk [vmem:[%s217 + $0xe0] sm:$0xff] %vm6155, %v6351
        %6394 = vst.msk [vmem:[%s217 + $0xe8] sm:$0xff] %vm6155, %v6354
        %6395 = vst.msk [vmem:[%s217 + $0xf0] sm:$0xff] %vm6155, %v6359
        %6396 = vst.msk [vmem:[%s217 + $0xf8] sm:$0xff] %vm6155, %v6362
        %s6397 = sand.u32 %s137, 1
        %s6398 = scalar_lea.sflag [#allocation3], %s6397
        %s6399 = sand.u32 %s137, 1
        %s6400 = smul.addr %s6399, 256
        %s6401 = scalar_lea.vmem [#allocation2], %s6400
        // Predicated region
        $region41: #{gate_forward.1} parent=39 // pred_check
          %p6402 = pneg %p147
        $region42: #{gate_forward.1} parent=39 // pred_check_branch
          %6404 = sbr.rel (%p6402) target = $region44
        $region43: #{gate_forward.1} parent=39 // pred_region
          %s6406 = ssub.s32 4096, 4096
          %6407 = vsyncadd %s6398, %s6406
          %s6408 = smul.addr %s19, 32
          %s6409 = smul.addr %s6408, 128
          %s6410 = scalar_lea.hbm %s5, %s6409
          %s6411 = sshll.u32 %s6401, 4
          %s6412 = int_to_ptr.vmem [resolvable:$true] %s6411
          %6417 = dma.vmem_to_hbm [thread:$0]  %s6412, 4096, %s6410, %s6398, 128, 128, 8
        $region44: #{gate_forward.1} parent=39 // pred_fallthru
          _
      $region40: #{gate_forward.1} parent=5 // pred_fallthru
        _
      %p6418 = scmp.le.s32.totalorder 2, %s14
      // Predicated region
      $region45: #{gate_forward.1} parent=5 // pred_check
        %p6419 = pneg %p6418
      $region46: #{gate_forward.1} parent=5 // pred_check_branch
        %6421 = sbr.rel (%p6419) target = $region48
      $region47: #{gate_forward.1} parent=5 // pred_region
        %s6422 = ssub.s32 %s14, 2
        // Predicated region
        $region49: #{gate_forward.1} parent=47 // pred_check
          %p6423 = pneg %p153
        $region50: #{gate_forward.1} parent=47 // pred_check_branch
          %6425 = sbr.rel (%p6423) target = $region52
        $region51: #{gate_forward.1} parent=47 // pred_region
          %s6426 = sand.u32 %s138, 1
          %s6427 = scalar_lea.sflag [#allocation3], %s6426
          %s6428 = sand.u32 %s138, 1
          %s6429 = smul.addr %s6428, 256
          %s6430 = scalar_lea.vmem [#allocation2], %s6429
          %6431 = dma.done %s6427, 4096
        $region52: #{gate_forward.1} parent=47 // pred_fallthru
          _
      $region48: #{gate_forward.1} parent=5 // pred_fallthru
        _
    $region6: #{gate_forward.1} parent=1 // loop_footer
      %s18 = sadd.s32 1, %s14
    $region7: #{gate_forward.1} parent=1 // loop_footer_branch
      %13 = sbr.rel target = $region3
    $region8: #{gate_forward.1} parent=1 // loop_exit
      _
    %6432 = vsyncpa [#allocation3], 1
    %s6433 = scalar_lea.sflag [#allocation3], 1
    %6434 = vsyncpa %s6433, 1

</llo_original>
